<compile_context>
chip_gen: v6e
topology: v6e:2x2x1
jax: 0.10.0
libtpu: 0.0.40
codegen_flags: <defaults>
</compile_context>

<pallas_src>
import functools

import jax
import jax.numpy as jnp
from jax.experimental import pallas as pl
from jax.experimental.pallas import tpu as pltpu

# ---- static config (consistent with the module's hard-coded dims) ----
B       = 2                      # batch
IMG_C   = 3
IMG_HW  = 16
PATCH   = 2                      # 16/2 = 8 -> 8x8 = 64 spatial positions
P       = 64                     # spatial positions (Attention hard-codes 64)
PD      = IMG_C * PATCH * PATCH  # 12 = per-patch feature dim
FEAT    = 2048                   # feature_dim (hard-coded 2048 in the module)
E       = 32                     # embedding_size
H       = 64                     # hidden_size
A       = 32                     # attention_size
V       = 128                    # vocab size
MAX_LEN = 4
T_CAP   = 5
PAD_IDX = 0

GATES = 4 * H                    # 256
WCAT_N = GATES + V + A           # 416 : [recurrent gates | logits | attn hidden proj]


# ----------------------------------------------------------------------------
# Fused encoder + decoder-loop kernel (single invocation, in-kernel unrolled loop)
# ----------------------------------------------------------------------------
def fused_kernel(patches_ref, conv_w_ref, conv_b_ref,
                 enc_lin_w_ref, enc_lin_b_ref,
                 wfp_ref, bfp_ref,
                 score_w_ref, score_b_ref,
                 init_w_ref, init_b_ref,
                 wih_ctx_ref, ctx_b_ref,
                 w_ih_emb_ref,
                 wcat_ref, lstm_b_ref, out_b_ref, attn_hidden_b_ref,
                 embed_gates_ref,
                 logits_ref, *, max_len):
    f32 = jnp.float32

    patches = patches_ref[...]                     # [B*P, PD]
    patches3 = patches.reshape(B, P, PD)           # [B, P, PD]

    # ---- Encoder (synthetic backbone = patch-embedding conv; pooled path) ----
    # pooled feature = mean_p(fm_p) = (mean_p patches_p) @ conv_w + conv_b
    mean_patch = jnp.mean(patches3, axis=1)                                        # [B, PD]
    pooled = jnp.dot(mean_patch, conv_w_ref[...],
                     preferred_element_type=f32) + conv_b_ref[...]                 # [B, FEAT]
    feat = jnp.maximum(pooled, 0.0)                                                # Encoder.relu
    emb0 = jnp.dot(feat, enc_lin_w_ref[...],
                   preferred_element_type=f32) + enc_lin_b_ref[...]                # [B, E]

    # ---- Loop-invariant precompute (conv folded into attn_feat) ----
    fproj = (jnp.dot(patches, wfp_ref[...], preferred_element_type=f32)
             + bfp_ref[...]).reshape(B, P, A)                                      # [B, P, A]

    # ---- Decoder state init (same hiddenStates_init linear for h0 and c0) ----
    h = jnp.dot(emb0, init_w_ref[...], preferred_element_type=f32) + init_b_ref[...]
    c = h
    # word_embedding = embedding.squeeze(0) -> only its LSTM gate contribution is needed
    wg = jnp.dot(emb0, w_ih_emb_ref[...], preferred_element_type=f32)              # [B, 4H]

    score_w = score_w_ref[...]         # [1, A]
    score_b = score_b_ref[...]         # [1, 1]
    wcat    = wcat_ref[...]            # [H, 4H+V+A]
    lstm_b  = lstm_b_ref[...]          # [1, 4H]
    out_b   = out_b_ref[...]           # [1, V]
    attn_hb = attn_hidden_b_ref[...]   # [1, A]
    wih_ctx = wih_ctx_ref[...]         # [PD, 4H]  (= conv_w @ W_ih_ctx)
    ctx_b   = ctx_b_ref[...]           # [1, 4H]   (= conv_b @ W_ih_ctx)
    embed_gates = embed_gates_ref[...] # [V, 4H]   (= embed_tab @ W_ih_emb)

    def attn_ctx_gates(hproj):
        # Attention.forward -> context, folded through conv_w and W_ih_ctx:
        #   ctx_gates = context @ W_ih_ctx = (sum_p attn_p * patches_p) @ wih_ctx + ctx_b
        e = jnp.tanh(fproj + hproj[:, None, :])                                    # [B, P, A]
        score = jnp.sum(e * score_w, axis=-1) + score_b                            # [B, P]
        m = jnp.max(score, axis=-1, keepdims=True)
        p = jnp.exp(score - m)
        attn = p / jnp.sum(p, axis=-1, keepdims=True)                              # exact softmax
        wpatch = jnp.sum(attn[:, :, None] * patches3, axis=1)                      # [B, PD]
        return jnp.dot(wpatch, wih_ctx, preferred_element_type=f32) + ctx_b        # [B, 4H]

    # Initial attention uses h0; merged matmul gives its hidden projection and
    # h0's recurrent-gate contribution for the first LSTM step.
    merged = jnp.dot(h, wcat, preferred_element_type=f32)                          # [B, 4H+V+A]
    hh = merged[:, 0:GATES]
    ctx_g = attn_ctx_gates(merged[:, GATES + V:] + attn_hb)

    # ---- greedy decode loop (statically unrolled, max_len is tiny) ----
    for i in range(max_len):
        gates = ctx_g + wg + hh + lstm_b                                           # [B, 4H]; i,f,g,o
        i_g = jax.nn.sigmoid(gates[:, 0:H])
        f_g = jax.nn.sigmoid(gates[:, H:2 * H])
        g_g = jnp.tanh(gates[:, 2 * H:3 * H])
        o_g = jax.nn.sigmoid(gates[:, 3 * H:4 * H])
        c = f_g * c + i_g * g_g
        h = o_g * jnp.tanh(c)

        # ONE merged matmul: [ h@w_hh | h@out_w | h@attn_hidden_w ]
        merged = jnp.dot(h, wcat, preferred_element_type=f32)                      # [B, 4H+V+A]
        logits = merged[:, GATES:GATES + V] + out_b                                # [B, V]
        logits_ref[i] = logits

        if i + 1 < max_len:   # next-step state (skipped on last step: never consumed)
            hh = merged[:, 0:GATES]
            ctx_g = attn_ctx_gates(merged[:, GATES + V:] + attn_hb)
            # greedy feedback: embed(argmax(logits)) folded through W_ih_emb
            iota = jax.lax.broadcasted_iota(jnp.int32, (B, V), 1)
            lmax = jnp.max(logits, axis=1, keepdims=True)
            idx = jnp.min(jnp.where(logits == lmax, iota, V), axis=1, keepdims=True)  # torch tie-break
            onehot = (iota == idx).astype(f32)
            wg = jnp.dot(onehot, embed_gates, preferred_element_type=f32)


def run_fused(inputs, max_len):
    vmem = pl.BlockSpec(memory_space=pltpu.MemorySpace.VMEM)
    return pl.pallas_call(
        functools.partial(fused_kernel, max_len=int(max_len)),
        out_shape=jax.ShapeDtypeStruct((max_len, B, V), jnp.float32),
        in_specs=[vmem] * len(inputs),
        out_specs=vmem,
    )(*inputs)


# ----------------------------------------------------------------------------
# Parameter init (deterministic, synthetic) + full forward wrapper (jitted)
# ----------------------------------------------------------------------------
def make_params(key):
    ks = jax.random.split(key, 16)
    n = lambda k, shape, fan_in: jax.random.normal(k, shape, jnp.float32) / jnp.sqrt(float(fan_in))
    params = {
        "conv_w": n(ks[0], (PD, FEAT), PD),
        "conv_b": 0.01 * jax.random.normal(ks[1], (1, FEAT), jnp.float32),
        "enc_lin_w": n(ks[2], (FEAT, E), FEAT),
        "enc_lin_b": 0.01 * jax.random.normal(ks[3], (1, E), jnp.float32),
        "attn_feat_w": n(ks[4], (FEAT, A), FEAT),
        "attn_feat_b": jnp.zeros((1, A), jnp.float32),
        "attn_hidden_w": n(ks[5], (H, A), H),
        "attn_hidden_b": jnp.zeros((1, A), jnp.float32),
        "attn_score_w": n(ks[6], (1, A), A),
        "attn_score_b": jnp.zeros((1, 1), jnp.float32),
        "init_w": n(ks[7], (E, H), E),
        "init_b": jnp.zeros((1, H), jnp.float32),
        "w_ih_ctx": n(ks[8], (FEAT, 4 * H), FEAT + E),
        "w_ih_emb": n(ks[9], (E, 4 * H), FEAT + E),
        "w_hh": n(ks[10], (H, 4 * H), H),
        "lstm_b": 0.01 * jax.random.normal(ks[11], (1, 4 * H), jnp.float32),
        "out_w": n(ks[12], (H, V), H),
        "out_b": 0.01 * jax.random.normal(ks[13], (1, V), jnp.float32),
    }
    embed_tab = jax.random.normal(ks[14], (V, E), jnp.float32)
    embed_tab = embed_tab.at[PAD_IDX].set(0.0)                 # padding_idx row = 0
    params["embed_tab"] = embed_tab
    return params


@functools.partial(jax.jit, static_argnums=(2,))
def encoder_decoder_forward(img, numeric_captions, max_len, params):
    # numeric_captions only feeds training-mode teacher forcing; the eval-mode
    # greedy path never reads it, so the dead `self.embed(numeric_captions)` gather is dropped.
    del numeric_captions

    # --- glue: NCHW image -> non-overlapping 2x2 patches (stride-2 conv im2col) ---
    patches = img.reshape(B, IMG_C, IMG_HW // PATCH, PATCH, IMG_HW // PATCH, PATCH)
    patches = patches.transpose(0, 2, 4, 1, 3, 5).reshape(B * P, PD)

    hp = jax.lax.Precision.HIGHEST
    # --- exact host-side weight folds (f32, HIGHEST precision) ---
    wfp = jnp.dot(params["conv_w"], params["attn_feat_w"], precision=hp)                 # [PD, A]
    bfp = jnp.dot(params["conv_b"], params["attn_feat_w"], precision=hp) \
        + params["attn_feat_b"]                                                          # [1, A]
    wih_ctx_fold = jnp.dot(params["conv_w"], params["w_ih_ctx"], precision=hp)           # [PD, 4H]
    ctx_b_fold = jnp.dot(params["conv_b"], params["w_ih_ctx"], precision=hp)             # [1, 4H]
    embed_gates = jnp.dot(params["embed_tab"], params["w_ih_emb"], precision=hp)         # [V, 4H]
    wcat = jnp.concatenate(
        [params["w_hh"], params["out_w"], params["attn_hidden_w"]], axis=1)              # [H, 4H+V+A]

    inputs = (
        patches,
        params["conv_w"], params["conv_b"],
        params["enc_lin_w"], params["enc_lin_b"],
        wfp, bfp,
        params["attn_score_w"], params["attn_score_b"],
        params["init_w"], params["init_b"],
        wih_ctx_fold, ctx_b_fold,
        params["w_ih_emb"],
        wcat, params["lstm_b"], params["out_b"], params["attn_hidden_b"],
        embed_gates,
    )
    logits_seq = run_fused(inputs, max_len)                   # [T, B, V]
    return jnp.transpose(logits_seq, (1, 0, 2))               # [B, T, V] (torch.stack(dim=1))


if __name__ == "__main__":
    key = jax.random.PRNGKey(0)
    k_param, k_img, k_cap = jax.random.split(key, 3)
    params = make_params(k_param)

    img = jax.random.normal(k_img, (B, IMG_C, IMG_HW, IMG_HW), jnp.float32)
    numeric_captions = jax.random.randint(k_cap, (B, T_CAP), 1, V)

    out = encoder_decoder_forward(img, numeric_captions, MAX_LEN, params)
    out = jax.block_until_ready(out)

    assert out.shape == (B, MAX_LEN, V), out.shape
    assert bool(jnp.all(jnp.isfinite(out)))
    print("KERNEL_OK")
</pallas_src>

<mosaic_0001>
module attributes {stable_mosaic.version = 11 : i64} {
  func.func @fused_kernel(%arg0: memref<128x12xf32, #tpu.memory_space<vmem>>, %arg1: memref<12x2048xf32, #tpu.memory_space<vmem>>, %arg2: memref<1x2048xf32, #tpu.memory_space<vmem>>, %arg3: memref<2048x32xf32, #tpu.memory_space<vmem>>, %arg4: memref<1x32xf32, #tpu.memory_space<vmem>>, %arg5: memref<12x32xf32, #tpu.memory_space<vmem>>, %arg6: memref<1x32xf32, #tpu.memory_space<vmem>>, %arg7: memref<1x32xf32, #tpu.memory_space<vmem>>, %arg8: memref<1x1xf32, #tpu.memory_space<vmem>>, %arg9: memref<32x64xf32, #tpu.memory_space<vmem>>, %arg10: memref<1x64xf32, #tpu.memory_space<vmem>>, %arg11: memref<12x256xf32, #tpu.memory_space<vmem>>, %arg12: memref<1x256xf32, #tpu.memory_space<vmem>>, %arg13: memref<32x256xf32, #tpu.memory_space<vmem>>, %arg14: memref<64x416xf32, #tpu.memory_space<vmem>>, %arg15: memref<1x256xf32, #tpu.memory_space<vmem>>, %arg16: memref<1x128xf32, #tpu.memory_space<vmem>>, %arg17: memref<1x32xf32, #tpu.memory_space<vmem>>, %arg18: memref<128x256xf32, #tpu.memory_space<vmem>>, %arg19: memref<4x2x128xf32, #tpu.memory_space<vmem>>) attributes {dimension_semantics = [], scalar_prefetch = 0 : i64, scratch_operands = 0 : i64, tpu.core_type = #tpu.core_type<tc>} {
    %c0 = arith.constant 0 : index
    %c0_0 = arith.constant 0 : index
    %0 = vector.load %arg0[%c0, %c0_0] : memref<128x12xf32, #tpu.memory_space<vmem>>, vector<128x12xf32>
    %1 = vector.shape_cast %0 : vector<128x12xf32> to vector<2x64x12xf32>
    %cst = arith.constant dense<0.000000e+00> : vector<2x12xf32>
    %2 = vector.multi_reduction <add>, %1, %cst [1] : vector<2x64x12xf32> to vector<2x12xf32>
    %cst_1 = arith.constant 6.400000e+01 : f32
    %3 = vector.broadcast %cst_1 : f32 to vector<2x12xf32>
    %4 = arith.divf %2, %3 : vector<2x12xf32>
    %c0_2 = arith.constant 0 : index
    %c0_3 = arith.constant 0 : index
    %5 = vector.load %arg1[%c0_2, %c0_3] : memref<12x2048xf32, #tpu.memory_space<vmem>>, vector<12x2048xf32>
    %cst_4 = arith.constant dense<0.000000e+00> : vector<2x2048xf32>
    %6 = tpu.matmul %4, %5, %cst_4 {dimension_numbers = #tpu.dot_dimension_numbers<[1], [0], [0], [1], [0, 0, 1, 1], [], []>} : vector<2x12xf32>, vector<12x2048xf32>, vector<2x2048xf32> -> vector<2x2048xf32>
    %c0_5 = arith.constant 0 : index
    %c0_6 = arith.constant 0 : index
    %7 = vector.load %arg2[%c0_5, %c0_6] : memref<1x2048xf32, #tpu.memory_space<vmem>>, vector<1x2048xf32>
    %8 = vector.broadcast %7 : vector<1x2048xf32> to vector<2x2048xf32>
    %9 = arith.addf %6, %8 : vector<2x2048xf32>
    %cst_7 = arith.constant 0.000000e+00 : f32
    %10 = vector.broadcast %cst_7 : f32 to vector<2x2048xf32>
    %11 = arith.maximumf %9, %10 : vector<2x2048xf32>
    %c0_8 = arith.constant 0 : index
    %c0_9 = arith.constant 0 : index
    %12 = vector.load %arg3[%c0_8, %c0_9] : memref<2048x32xf32, #tpu.memory_space<vmem>>, vector<2048x32xf32>
    %cst_10 = arith.constant dense<0.000000e+00> : vector<2x32xf32>
    %13 = tpu.matmul %11, %12, %cst_10 {dimension_numbers = #tpu.dot_dimension_numbers<[1], [0], [0], [1], [0, 0, 1, 1], [], []>} : vector<2x2048xf32>, vector<2048x32xf32>, vector<2x32xf32> -> vector<2x32xf32>
    %c0_11 = arith.constant 0 : index
    %c0_12 = arith.constant 0 : index
    %14 = vector.load %arg4[%c0_11, %c0_12] : memref<1x32xf32, #tpu.memory_space<vmem>>, vector<1x32xf32>
    %15 = vector.broadcast %14 : vector<1x32xf32> to vector<2x32xf32>
    %16 = arith.addf %13, %15 : vector<2x32xf32>
    %c0_13 = arith.constant 0 : index
    %c0_14 = arith.constant 0 : index
    %17 = vector.load %arg5[%c0_13, %c0_14] : memref<12x32xf32, #tpu.memory_space<vmem>>, vector<12x32xf32>
    %cst_15 = arith.constant dense<0.000000e+00> : vector<128x32xf32>
    %18 = tpu.matmul %0, %17, %cst_15 {dimension_numbers = #tpu.dot_dimension_numbers<[1], [0], [0], [1], [0, 0, 1, 1], [], []>} : vector<128x12xf32>, vector<12x32xf32>, vector<128x32xf32> -> vector<128x32xf32>
    %c0_16 = arith.constant 0 : index
    %c0_17 = arith.constant 0 : index
    %19 = vector.load %arg6[%c0_16, %c0_17] : memref<1x32xf32, #tpu.memory_space<vmem>>, vector<1x32xf32>
    %20 = vector.broadcast %19 : vector<1x32xf32> to vector<128x32xf32>
    %21 = arith.addf %18, %20 : vector<128x32xf32>
    %22 = vector.shape_cast %21 : vector<128x32xf32> to vector<2x64x32xf32>
    %c0_18 = arith.constant 0 : index
    %c0_19 = arith.constant 0 : index
    %23 = vector.load %arg9[%c0_18, %c0_19] : memref<32x64xf32, #tpu.memory_space<vmem>>, vector<32x64xf32>
    %cst_20 = arith.constant dense<0.000000e+00> : vector<2x64xf32>
    %24 = tpu.matmul %16, %23, %cst_20 {dimension_numbers = #tpu.dot_dimension_numbers<[1], [0], [0], [1], [0, 0, 1, 1], [], []>} : vector<2x32xf32>, vector<32x64xf32>, vector<2x64xf32> -> vector<2x64xf32>
    %c0_21 = arith.constant 0 : index
    %c0_22 = arith.constant 0 : index
    %25 = vector.load %arg10[%c0_21, %c0_22] : memref<1x64xf32, #tpu.memory_space<vmem>>, vector<1x64xf32>
    %26 = vector.broadcast %25 : vector<1x64xf32> to vector<2x64xf32>
    %27 = arith.addf %24, %26 : vector<2x64xf32>
    %c0_23 = arith.constant 0 : index
    %c0_24 = arith.constant 0 : index
    %28 = vector.load %arg13[%c0_23, %c0_24] : memref<32x256xf32, #tpu.memory_space<vmem>>, vector<32x256xf32>
    %cst_25 = arith.constant dense<0.000000e+00> : vector<2x256xf32>
    %29 = tpu.matmul %16, %28, %cst_25 {dimension_numbers = #tpu.dot_dimension_numbers<[1], [0], [0], [1], [0, 0, 1, 1], [], []>} : vector<2x32xf32>, vector<32x256xf32>, vector<2x256xf32> -> vector<2x256xf32>
    %c0_26 = arith.constant 0 : index
    %c0_27 = arith.constant 0 : index
    %30 = vector.load %arg7[%c0_26, %c0_27] : memref<1x32xf32, #tpu.memory_space<vmem>>, vector<1x32xf32>
    %c0_28 = arith.constant 0 : index
    %c0_29 = arith.constant 0 : index
    %31 = vector.load %arg8[%c0_28, %c0_29] : memref<1x1xf32, #tpu.memory_space<vmem>>, vector<1x1xf32>
    %c0_30 = arith.constant 0 : index
    %c0_31 = arith.constant 0 : index
    %32 = vector.load %arg14[%c0_30, %c0_31] : memref<64x416xf32, #tpu.memory_space<vmem>>, vector<64x416xf32>
    %c0_32 = arith.constant 0 : index
    %c0_33 = arith.constant 0 : index
    %33 = vector.load %arg15[%c0_32, %c0_33] : memref<1x256xf32, #tpu.memory_space<vmem>>, vector<1x256xf32>
    %c0_34 = arith.constant 0 : index
    %c0_35 = arith.constant 0 : index
    %34 = vector.load %arg16[%c0_34, %c0_35] : memref<1x128xf32, #tpu.memory_space<vmem>>, vector<1x128xf32>
    %c0_36 = arith.constant 0 : index
    %c0_37 = arith.constant 0 : index
    %35 = vector.load %arg17[%c0_36, %c0_37] : memref<1x32xf32, #tpu.memory_space<vmem>>, vector<1x32xf32>
    %c0_38 = arith.constant 0 : index
    %c0_39 = arith.constant 0 : index
    %36 = vector.load %arg11[%c0_38, %c0_39] : memref<12x256xf32, #tpu.memory_space<vmem>>, vector<12x256xf32>
    %c0_40 = arith.constant 0 : index
    %c0_41 = arith.constant 0 : index
    %37 = vector.load %arg12[%c0_40, %c0_41] : memref<1x256xf32, #tpu.memory_space<vmem>>, vector<1x256xf32>
    %c0_42 = arith.constant 0 : index
    %c0_43 = arith.constant 0 : index
    %38 = vector.load %arg18[%c0_42, %c0_43] : memref<128x256xf32, #tpu.memory_space<vmem>>, vector<128x256xf32>
    %cst_44 = arith.constant dense<0.000000e+00> : vector<2x416xf32>
    %39 = tpu.matmul %27, %32, %cst_44 {dimension_numbers = #tpu.dot_dimension_numbers<[1], [0], [0], [1], [0, 0, 1, 1], [], []>} : vector<2x64xf32>, vector<64x416xf32>, vector<2x416xf32> -> vector<2x416xf32>
    %40 = vector.extract_strided_slice %39 {offsets = [0, 0], sizes = [2, 256], strides = [1, 1]} : vector<2x416xf32> to vector<2x256xf32>
    %41 = vector.extract_strided_slice %39 {offsets = [0, 384], sizes = [2, 32], strides = [1, 1]} : vector<2x416xf32> to vector<2x32xf32>
    %42 = vector.broadcast %35 : vector<1x32xf32> to vector<2x32xf32>
    %43 = arith.addf %41, %42 : vector<2x32xf32>
    %44 = vector.shape_cast %43 : vector<2x32xf32> to vector<2x1x32xf32>
    %45 = vector.broadcast %44 : vector<2x1x32xf32> to vector<2x64x32xf32>
    %46 = arith.addf %22, %45 : vector<2x64x32xf32>
    %47 = math.tanh %46 : vector<2x64x32xf32>
    %48 = vector.shape_cast %30 : vector<1x32xf32> to vector<1x1x32xf32>
    %49 = vector.broadcast %48 : vector<1x1x32xf32> to vector<2x64x32xf32>
    %50 = arith.mulf %47, %49 : vector<2x64x32xf32>
    %cst_45 = arith.constant dense<0.000000e+00> : vector<2x64xf32>
    %51 = vector.multi_reduction <add>, %50, %cst_45 [2] : vector<2x64x32xf32> to vector<2x64xf32>
    %52 = vector.broadcast %31 : vector<1x1xf32> to vector<2x64xf32>
    %53 = arith.addf %51, %52 : vector<2x64xf32>
    %cst_46 = arith.constant dense<0xFF800000> : vector<2xf32>
    %54 = vector.multi_reduction <maximumf>, %53, %cst_46 [1] : vector<2x64xf32> to vector<2xf32>
    %55 = vector.shape_cast %54 : vector<2xf32> to vector<2x1xf32>
    %56 = vector.broadcast %55 : vector<2x1xf32> to vector<2x64xf32>
    %57 = arith.subf %53, %56 : vector<2x64xf32>
    %58 = math.exp %57 : vector<2x64xf32>
    %cst_47 = arith.constant dense<0.000000e+00> : vector<2xf32>
    %59 = vector.multi_reduction <add>, %58, %cst_47 [1] : vector<2x64xf32> to vector<2xf32>
    %60 = vector.shape_cast %59 : vector<2xf32> to vector<2x1xf32>
    %61 = vector.broadcast %60 : vector<2x1xf32> to vector<2x64xf32>
    %62 = arith.divf %58, %61 : vector<2x64xf32>
    %63 = vector.shape_cast %62 : vector<2x64xf32> to vector<2x64x1xf32>
    %64 = vector.broadcast %63 : vector<2x64x1xf32> to vector<2x64x12xf32>
    %65 = arith.mulf %64, %1 : vector<2x64x12xf32>
    %cst_48 = arith.constant dense<0.000000e+00> : vector<2x12xf32>
    %66 = vector.multi_reduction <add>, %65, %cst_48 [1] : vector<2x64x12xf32> to vector<2x12xf32>
    %cst_49 = arith.constant dense<0.000000e+00> : vector<2x256xf32>
    %67 = tpu.matmul %66, %36, %cst_49 {dimension_numbers = #tpu.dot_dimension_numbers<[1], [0], [0], [1], [0, 0, 1, 1], [], []>} : vector<2x12xf32>, vector<12x256xf32>, vector<2x256xf32> -> vector<2x256xf32>
    %68 = vector.broadcast %37 : vector<1x256xf32> to vector<2x256xf32>
    %69 = arith.addf %67, %68 : vector<2x256xf32>
    %70 = arith.addf %69, %29 : vector<2x256xf32>
    %71 = arith.addf %70, %40 : vector<2x256xf32>
    %72 = vector.broadcast %33 : vector<1x256xf32> to vector<2x256xf32>
    %73 = arith.addf %71, %72 : vector<2x256xf32>
    %74 = vector.extract_strided_slice %73 {offsets = [0, 0], sizes = [2, 64], strides = [1, 1]} : vector<2x256xf32> to vector<2x64xf32>
    %75 = arith.negf %74 : vector<2x64xf32>
    %76 = math.exp %75 : vector<2x64xf32>
    %cst_50 = arith.constant 1.000000e+00 : f32
    %77 = vector.broadcast %cst_50 : f32 to vector<2x64xf32>
    %78 = arith.addf %77, %76 : vector<2x64xf32>
    %79 = arith.divf %77, %78 : vector<2x64xf32>
    %80 = vector.extract_strided_slice %73 {offsets = [0, 64], sizes = [2, 64], strides = [1, 1]} : vector<2x256xf32> to vector<2x64xf32>
    %81 = arith.negf %80 : vector<2x64xf32>
    %82 = math.exp %81 : vector<2x64xf32>
    %cst_51 = arith.constant 1.000000e+00 : f32
    %83 = vector.broadcast %cst_51 : f32 to vector<2x64xf32>
    %84 = arith.addf %83, %82 : vector<2x64xf32>
    %85 = arith.divf %83, %84 : vector<2x64xf32>
    %86 = vector.extract_strided_slice %73 {offsets = [0, 128], sizes = [2, 64], strides = [1, 1]} : vector<2x256xf32> to vector<2x64xf32>
    %87 = math.tanh %86 : vector<2x64xf32>
    %88 = vector.extract_strided_slice %73 {offsets = [0, 192], sizes = [2, 64], strides = [1, 1]} : vector<2x256xf32> to vector<2x64xf32>
    %89 = arith.negf %88 : vector<2x64xf32>
    %90 = math.exp %89 : vector<2x64xf32>
    %cst_52 = arith.constant 1.000000e+00 : f32
    %91 = vector.broadcast %cst_52 : f32 to vector<2x64xf32>
    %92 = arith.addf %91, %90 : vector<2x64xf32>
    %93 = arith.divf %91, %92 : vector<2x64xf32>
    %94 = arith.mulf %85, %27 : vector<2x64xf32>
    %95 = arith.mulf %79, %87 : vector<2x64xf32>
    %96 = arith.addf %94, %95 : vector<2x64xf32>
    %97 = math.tanh %96 : vector<2x64xf32>
    %98 = arith.mulf %93, %97 : vector<2x64xf32>
    %cst_53 = arith.constant dense<0.000000e+00> : vector<2x416xf32>
    %99 = tpu.matmul %98, %32, %cst_53 {dimension_numbers = #tpu.dot_dimension_numbers<[1], [0], [0], [1], [0, 0, 1, 1], [], []>} : vector<2x64xf32>, vector<64x416xf32>, vector<2x416xf32> -> vector<2x416xf32>
    %100 = vector.extract_strided_slice %99 {offsets = [0, 256], sizes = [2, 128], strides = [1, 1]} : vector<2x416xf32> to vector<2x128xf32>
    %101 = vector.broadcast %34 : vector<1x128xf32> to vector<2x128xf32>
    %102 = arith.addf %100, %101 : vector<2x128xf32>
    %c0_54 = arith.constant 0 : index
    %c0_55 = arith.constant 0 : index
    %c0_56 = arith.constant 0 : index
    %103 = vector.load %arg19[%c0_54, %c0_55, %c0_56] : memref<4x2x128xf32, #tpu.memory_space<vmem>>, vector<1x2x128xf32>
    %104 = vector.shape_cast %103 : vector<1x2x128xf32> to vector<2x128xf32>
    %105 = vector.shape_cast %102 : vector<2x128xf32> to vector<1x2x128xf32>
    tpu.vector_store %arg19[%c0_54, %c0_55, %c0_56], %105 {strides = array<i32>} : memref<4x2x128xf32, #tpu.memory_space<vmem>>, vector<1x2x128xf32>,
    %106 = vector.extract_strided_slice %99 {offsets = [0, 0], sizes = [2, 256], strides = [1, 1]} : vector<2x416xf32> to vector<2x256xf32>
    %107 = vector.extract_strided_slice %99 {offsets = [0, 384], sizes = [2, 32], strides = [1, 1]} : vector<2x416xf32> to vector<2x32xf32>
    %108 = vector.broadcast %35 : vector<1x32xf32> to vector<2x32xf32>
    %109 = arith.addf %107, %108 : vector<2x32xf32>
    %110 = vector.shape_cast %109 : vector<2x32xf32> to vector<2x1x32xf32>
    %111 = vector.broadcast %110 : vector<2x1x32xf32> to vector<2x64x32xf32>
    %112 = arith.addf %22, %111 : vector<2x64x32xf32>
    %113 = math.tanh %112 : vector<2x64x32xf32>
    %114 = vector.shape_cast %30 : vector<1x32xf32> to vector<1x1x32xf32>
    %115 = vector.broadcast %114 : vector<1x1x32xf32> to vector<2x64x32xf32>
    %116 = arith.mulf %113, %115 : vector<2x64x32xf32>
    %cst_57 = arith.constant dense<0.000000e+00> : vector<2x64xf32>
    %117 = vector.multi_reduction <add>, %116, %cst_57 [2] : vector<2x64x32xf32> to vector<2x64xf32>
    %118 = vector.broadcast %31 : vector<1x1xf32> to vector<2x64xf32>
    %119 = arith.addf %117, %118 : vector<2x64xf32>
    %cst_58 = arith.constant dense<0xFF800000> : vector<2xf32>
    %120 = vector.multi_reduction <maximumf>, %119, %cst_58 [1] : vector<2x64xf32> to vector<2xf32>
    %121 = vector.shape_cast %120 : vector<2xf32> to vector<2x1xf32>
    %122 = vector.broadcast %121 : vector<2x1xf32> to vector<2x64xf32>
    %123 = arith.subf %119, %122 : vector<2x64xf32>
    %124 = math.exp %123 : vector<2x64xf32>
    %cst_59 = arith.constant dense<0.000000e+00> : vector<2xf32>
    %125 = vector.multi_reduction <add>, %124, %cst_59 [1] : vector<2x64xf32> to vector<2xf32>
    %126 = vector.shape_cast %125 : vector<2xf32> to vector<2x1xf32>
    %127 = vector.broadcast %126 : vector<2x1xf32> to vector<2x64xf32>
    %128 = arith.divf %124, %127 : vector<2x64xf32>
    %129 = vector.shape_cast %128 : vector<2x64xf32> to vector<2x64x1xf32>
    %130 = vector.broadcast %129 : vector<2x64x1xf32> to vector<2x64x12xf32>
    %131 = arith.mulf %130, %1 : vector<2x64x12xf32>
    %cst_60 = arith.constant dense<0.000000e+00> : vector<2x12xf32>
    %132 = vector.multi_reduction <add>, %131, %cst_60 [1] : vector<2x64x12xf32> to vector<2x12xf32>
    %cst_61 = arith.constant dense<0.000000e+00> : vector<2x256xf32>
    %133 = tpu.matmul %132, %36, %cst_61 {dimension_numbers = #tpu.dot_dimension_numbers<[1], [0], [0], [1], [0, 0, 1, 1], [], []>} : vector<2x12xf32>, vector<12x256xf32>, vector<2x256xf32> -> vector<2x256xf32>
    %134 = vector.broadcast %37 : vector<1x256xf32> to vector<2x256xf32>
    %135 = arith.addf %133, %134 : vector<2x256xf32>
    %136 = tpu.iota {dimensions = array<i32: 1>} : vector<2x128xi32>
    %cst_62 = arith.constant dense<0xFF800000> : vector<2xf32>
    %137 = vector.multi_reduction <maximumf>, %102, %cst_62 [1] : vector<2x128xf32> to vector<2xf32>
    %138 = vector.shape_cast %137 : vector<2xf32> to vector<2x1xf32>
    %139 = vector.broadcast %138 : vector<2x1xf32> to vector<2x128xf32>
    %140 = arith.cmpf oeq, %102, %139 : vector<2x128xf32>
    %c128_i32 = arith.constant 128 : i32
    %141 = vector.broadcast %c128_i32 : i32 to vector<2x128xi32>
    %142 = arith.select %140, %136, %141 : vector<2x128xi1>, vector<2x128xi32>
    %cst_63 = arith.constant dense<2147483647> : vector<2xi32>
    %143 = vector.multi_reduction <minsi>, %142, %cst_63 [1] : vector<2x128xi32> to vector<2xi32>
    %144 = vector.shape_cast %143 : vector<2xi32> to vector<2x1xi32>
    %145 = vector.broadcast %144 : vector<2x1xi32> to vector<2x128xi32>
    %146 = arith.cmpi eq, %136, %145 : vector<2x128xi32>
    %147 = arith.extui %146 : vector<2x128xi1> to vector<2x128xi32>
    %148 = arith.sitofp %147 : vector<2x128xi32> to vector<2x128xf32>
    %cst_64 = arith.constant dense<0.000000e+00> : vector<2x256xf32>
    %149 = tpu.matmul %148, %38, %cst_64 {dimension_numbers = #tpu.dot_dimension_numbers<[1], [0], [0], [1], [0, 0, 1, 1], [], []>} : vector<2x128xf32>, vector<128x256xf32>, vector<2x256xf32> -> vector<2x256xf32>
    %150 = arith.addf %135, %149 : vector<2x256xf32>
    %151 = arith.addf %150, %106 : vector<2x256xf32>
    %152 = vector.broadcast %33 : vector<1x256xf32> to vector<2x256xf32>
    %153 = arith.addf %151, %152 : vector<2x256xf32>
    %154 = vector.extract_strided_slice %153 {offsets = [0, 0], sizes = [2, 64], strides = [1, 1]} : vector<2x256xf32> to vector<2x64xf32>
    %155 = arith.negf %154 : vector<2x64xf32>
    %156 = math.exp %155 : vector<2x64xf32>
    %cst_65 = arith.constant 1.000000e+00 : f32
    %157 = vector.broadcast %cst_65 : f32 to vector<2x64xf32>
    %158 = arith.addf %157, %156 : vector<2x64xf32>
    %159 = arith.divf %157, %158 : vector<2x64xf32>
    %160 = vector.extract_strided_slice %153 {offsets = [0, 64], sizes = [2, 64], strides = [1, 1]} : vector<2x256xf32> to vector<2x64xf32>
    %161 = arith.negf %160 : vector<2x64xf32>
    %162 = math.exp %161 : vector<2x64xf32>
    %cst_66 = arith.constant 1.000000e+00 : f32
    %163 = vector.broadcast %cst_66 : f32 to vector<2x64xf32>
    %164 = arith.addf %163, %162 : vector<2x64xf32>
    %165 = arith.divf %163, %164 : vector<2x64xf32>
    %166 = vector.extract_strided_slice %153 {offsets = [0, 128], sizes = [2, 64], strides = [1, 1]} : vector<2x256xf32> to vector<2x64xf32>
    %167 = math.tanh %166 : vector<2x64xf32>
    %168 = vector.extract_strided_slice %153 {offsets = [0, 192], sizes = [2, 64], strides = [1, 1]} : vector<2x256xf32> to vector<2x64xf32>
    %169 = arith.negf %168 : vector<2x64xf32>
    %170 = math.exp %169 : vector<2x64xf32>
    %cst_67 = arith.constant 1.000000e+00 : f32
    %171 = vector.broadcast %cst_67 : f32 to vector<2x64xf32>
    %172 = arith.addf %171, %170 : vector<2x64xf32>
    %173 = arith.divf %171, %172 : vector<2x64xf32>
    %174 = arith.mulf %165, %96 : vector<2x64xf32>
    %175 = arith.mulf %159, %167 : vector<2x64xf32>
    %176 = arith.addf %174, %175 : vector<2x64xf32>
    %177 = math.tanh %176 : vector<2x64xf32>
    %178 = arith.mulf %173, %177 : vector<2x64xf32>
    %cst_68 = arith.constant dense<0.000000e+00> : vector<2x416xf32>
    %179 = tpu.matmul %178, %32, %cst_68 {dimension_numbers = #tpu.dot_dimension_numbers<[1], [0], [0], [1], [0, 0, 1, 1], [], []>} : vector<2x64xf32>, vector<64x416xf32>, vector<2x416xf32> -> vector<2x416xf32>
    %180 = vector.extract_strided_slice %179 {offsets = [0, 256], sizes = [2, 128], strides = [1, 1]} : vector<2x416xf32> to vector<2x128xf32>
    %181 = vector.broadcast %34 : vector<1x128xf32> to vector<2x128xf32>
    %182 = arith.addf %180, %181 : vector<2x128xf32>
    %c1 = arith.constant 1 : index
    %c0_69 = arith.constant 0 : index
    %c0_70 = arith.constant 0 : index
    %183 = vector.load %arg19[%c1, %c0_69, %c0_70] : memref<4x2x128xf32, #tpu.memory_space<vmem>>, vector<1x2x128xf32>
    %184 = vector.shape_cast %183 : vector<1x2x128xf32> to vector<2x128xf32>
    %185 = vector.shape_cast %182 : vector<2x128xf32> to vector<1x2x128xf32>
    tpu.vector_store %arg19[%c1, %c0_69, %c0_70], %185 {strides = array<i32>} : memref<4x2x128xf32, #tpu.memory_space<vmem>>, vector<1x2x128xf32>,
    %186 = vector.extract_strided_slice %179 {offsets = [0, 0], sizes = [2, 256], strides = [1, 1]} : vector<2x416xf32> to vector<2x256xf32>
    %187 = vector.extract_strided_slice %179 {offsets = [0, 384], sizes = [2, 32], strides = [1, 1]} : vector<2x416xf32> to vector<2x32xf32>
    %188 = vector.broadcast %35 : vector<1x32xf32> to vector<2x32xf32>
    %189 = arith.addf %187, %188 : vector<2x32xf32>
    %190 = vector.shape_cast %189 : vector<2x32xf32> to vector<2x1x32xf32>
    %191 = vector.broadcast %190 : vector<2x1x32xf32> to vector<2x64x32xf32>
    %192 = arith.addf %22, %191 : vector<2x64x32xf32>
    %193 = math.tanh %192 : vector<2x64x32xf32>
    %194 = vector.shape_cast %30 : vector<1x32xf32> to vector<1x1x32xf32>
    %195 = vector.broadcast %194 : vector<1x1x32xf32> to vector<2x64x32xf32>
    %196 = arith.mulf %193, %195 : vector<2x64x32xf32>
    %cst_71 = arith.constant dense<0.000000e+00> : vector<2x64xf32>
    %197 = vector.multi_reduction <add>, %196, %cst_71 [2] : vector<2x64x32xf32> to vector<2x64xf32>
    %198 = vector.broadcast %31 : vector<1x1xf32> to vector<2x64xf32>
    %199 = arith.addf %197, %198 : vector<2x64xf32>
    %cst_72 = arith.constant dense<0xFF800000> : vector<2xf32>
    %200 = vector.multi_reduction <maximumf>, %199, %cst_72 [1] : vector<2x64xf32> to vector<2xf32>
    %201 = vector.shape_cast %200 : vector<2xf32> to vector<2x1xf32>
    %202 = vector.broadcast %201 : vector<2x1xf32> to vector<2x64xf32>
    %203 = arith.subf %199, %202 : vector<2x64xf32>
    %204 = math.exp %203 : vector<2x64xf32>
    %cst_73 = arith.constant dense<0.000000e+00> : vector<2xf32>
    %205 = vector.multi_reduction <add>, %204, %cst_73 [1] : vector<2x64xf32> to vector<2xf32>
    %206 = vector.shape_cast %205 : vector<2xf32> to vector<2x1xf32>
    %207 = vector.broadcast %206 : vector<2x1xf32> to vector<2x64xf32>
    %208 = arith.divf %204, %207 : vector<2x64xf32>
    %209 = vector.shape_cast %208 : vector<2x64xf32> to vector<2x64x1xf32>
    %210 = vector.broadcast %209 : vector<2x64x1xf32> to vector<2x64x12xf32>
    %211 = arith.mulf %210, %1 : vector<2x64x12xf32>
    %cst_74 = arith.constant dense<0.000000e+00> : vector<2x12xf32>
    %212 = vector.multi_reduction <add>, %211, %cst_74 [1] : vector<2x64x12xf32> to vector<2x12xf32>
    %cst_75 = arith.constant dense<0.000000e+00> : vector<2x256xf32>
    %213 = tpu.matmul %212, %36, %cst_75 {dimension_numbers = #tpu.dot_dimension_numbers<[1], [0], [0], [1], [0, 0, 1, 1], [], []>} : vector<2x12xf32>, vector<12x256xf32>, vector<2x256xf32> -> vector<2x256xf32>
    %214 = vector.broadcast %37 : vector<1x256xf32> to vector<2x256xf32>
    %215 = arith.addf %213, %214 : vector<2x256xf32>
    %216 = tpu.iota {dimensions = array<i32: 1>} : vector<2x128xi32>
    %cst_76 = arith.constant dense<0xFF800000> : vector<2xf32>
    %217 = vector.multi_reduction <maximumf>, %182, %cst_76 [1] : vector<2x128xf32> to vector<2xf32>
    %218 = vector.shape_cast %217 : vector<2xf32> to vector<2x1xf32>
    %219 = vector.broadcast %218 : vector<2x1xf32> to vector<2x128xf32>
    %220 = arith.cmpf oeq, %182, %219 : vector<2x128xf32>
    %c128_i32_77 = arith.constant 128 : i32
    %221 = vector.broadcast %c128_i32_77 : i32 to vector<2x128xi32>
    %222 = arith.select %220, %216, %221 : vector<2x128xi1>, vector<2x128xi32>
    %cst_78 = arith.constant dense<2147483647> : vector<2xi32>
    %223 = vector.multi_reduction <minsi>, %222, %cst_78 [1] : vector<2x128xi32> to vector<2xi32>
    %224 = vector.shape_cast %223 : vector<2xi32> to vector<2x1xi32>
    %225 = vector.broadcast %224 : vector<2x1xi32> to vector<2x128xi32>
    %226 = arith.cmpi eq, %216, %225 : vector<2x128xi32>
    %227 = arith.extui %226 : vector<2x128xi1> to vector<2x128xi32>
    %228 = arith.sitofp %227 : vector<2x128xi32> to vector<2x128xf32>
    %cst_79 = arith.constant dense<0.000000e+00> : vector<2x256xf32>
    %229 = tpu.matmul %228, %38, %cst_79 {dimension_numbers = #tpu.dot_dimension_numbers<[1], [0], [0], [1], [0, 0, 1, 1], [], []>} : vector<2x128xf32>, vector<128x256xf32>, vector<2x256xf32> -> vector<2x256xf32>
    %230 = arith.addf %215, %229 : vector<2x256xf32>
    %231 = arith.addf %230, %186 : vector<2x256xf32>
    %232 = vector.broadcast %33 : vector<1x256xf32> to vector<2x256xf32>
    %233 = arith.addf %231, %232 : vector<2x256xf32>
    %234 = vector.extract_strided_slice %233 {offsets = [0, 0], sizes = [2, 64], strides = [1, 1]} : vector<2x256xf32> to vector<2x64xf32>
    %235 = arith.negf %234 : vector<2x64xf32>
    %236 = math.exp %235 : vector<2x64xf32>
    %cst_80 = arith.constant 1.000000e+00 : f32
    %237 = vector.broadcast %cst_80 : f32 to vector<2x64xf32>
    %238 = arith.addf %237, %236 : vector<2x64xf32>
    %239 = arith.divf %237, %238 : vector<2x64xf32>
    %240 = vector.extract_strided_slice %233 {offsets = [0, 64], sizes = [2, 64], strides = [1, 1]} : vector<2x256xf32> to vector<2x64xf32>
    %241 = arith.negf %240 : vector<2x64xf32>
    %242 = math.exp %241 : vector<2x64xf32>
    %cst_81 = arith.constant 1.000000e+00 : f32
    %243 = vector.broadcast %cst_81 : f32 to vector<2x64xf32>
    %244 = arith.addf %243, %242 : vector<2x64xf32>
    %245 = arith.divf %243, %244 : vector<2x64xf32>
    %246 = vector.extract_strided_slice %233 {offsets = [0, 128], sizes = [2, 64], strides = [1, 1]} : vector<2x256xf32> to vector<2x64xf32>
    %247 = math.tanh %246 : vector<2x64xf32>
    %248 = vector.extract_strided_slice %233 {offsets = [0, 192], sizes = [2, 64], strides = [1, 1]} : vector<2x256xf32> to vector<2x64xf32>
    %249 = arith.negf %248 : vector<2x64xf32>
    %250 = math.exp %249 : vector<2x64xf32>
    %cst_82 = arith.constant 1.000000e+00 : f32
    %251 = vector.broadcast %cst_82 : f32 to vector<2x64xf32>
    %252 = arith.addf %251, %250 : vector<2x64xf32>
    %253 = arith.divf %251, %252 : vector<2x64xf32>
    %254 = arith.mulf %245, %176 : vector<2x64xf32>
    %255 = arith.mulf %239, %247 : vector<2x64xf32>
    %256 = arith.addf %254, %255 : vector<2x64xf32>
    %257 = math.tanh %256 : vector<2x64xf32>
    %258 = arith.mulf %253, %257 : vector<2x64xf32>
    %cst_83 = arith.constant dense<0.000000e+00> : vector<2x416xf32>
    %259 = tpu.matmul %258, %32, %cst_83 {dimension_numbers = #tpu.dot_dimension_numbers<[1], [0], [0], [1], [0, 0, 1, 1], [], []>} : vector<2x64xf32>, vector<64x416xf32>, vector<2x416xf32> -> vector<2x416xf32>
    %260 = vector.extract_strided_slice %259 {offsets = [0, 256], sizes = [2, 128], strides = [1, 1]} : vector<2x416xf32> to vector<2x128xf32>
    %261 = vector.broadcast %34 : vector<1x128xf32> to vector<2x128xf32>
    %262 = arith.addf %260, %261 : vector<2x128xf32>
    %c2 = arith.constant 2 : index
    %c0_84 = arith.constant 0 : index
    %c0_85 = arith.constant 0 : index
    %263 = vector.load %arg19[%c2, %c0_84, %c0_85] : memref<4x2x128xf32, #tpu.memory_space<vmem>>, vector<1x2x128xf32>
    %264 = vector.shape_cast %263 : vector<1x2x128xf32> to vector<2x128xf32>
    %265 = vector.shape_cast %262 : vector<2x128xf32> to vector<1x2x128xf32>
    tpu.vector_store %arg19[%c2, %c0_84, %c0_85], %265 {strides = array<i32>} : memref<4x2x128xf32, #tpu.memory_space<vmem>>, vector<1x2x128xf32>,
    %266 = vector.extract_strided_slice %259 {offsets = [0, 0], sizes = [2, 256], strides = [1, 1]} : vector<2x416xf32> to vector<2x256xf32>
    %267 = vector.extract_strided_slice %259 {offsets = [0, 384], sizes = [2, 32], strides = [1, 1]} : vector<2x416xf32> to vector<2x32xf32>
    %268 = vector.broadcast %35 : vector<1x32xf32> to vector<2x32xf32>
    %269 = arith.addf %267, %268 : vector<2x32xf32>
    %270 = vector.shape_cast %269 : vector<2x32xf32> to vector<2x1x32xf32>
    %271 = vector.broadcast %270 : vector<2x1x32xf32> to vector<2x64x32xf32>
    %272 = arith.addf %22, %271 : vector<2x64x32xf32>
    %273 = math.tanh %272 : vector<2x64x32xf32>
    %274 = vector.shape_cast %30 : vector<1x32xf32> to vector<1x1x32xf32>
    %275 = vector.broadcast %274 : vector<1x1x32xf32> to vector<2x64x32xf32>
    %276 = arith.mulf %273, %275 : vector<2x64x32xf32>
    %cst_86 = arith.constant dense<0.000000e+00> : vector<2x64xf32>
    %277 = vector.multi_reduction <add>, %276, %cst_86 [2] : vector<2x64x32xf32> to vector<2x64xf32>
    %278 = vector.broadcast %31 : vector<1x1xf32> to vector<2x64xf32>
    %279 = arith.addf %277, %278 : vector<2x64xf32>
    %cst_87 = arith.constant dense<0xFF800000> : vector<2xf32>
    %280 = vector.multi_reduction <maximumf>, %279, %cst_87 [1] : vector<2x64xf32> to vector<2xf32>
    %281 = vector.shape_cast %280 : vector<2xf32> to vector<2x1xf32>
    %282 = vector.broadcast %281 : vector<2x1xf32> to vector<2x64xf32>
    %283 = arith.subf %279, %282 : vector<2x64xf32>
    %284 = math.exp %283 : vector<2x64xf32>
    %cst_88 = arith.constant dense<0.000000e+00> : vector<2xf32>
    %285 = vector.multi_reduction <add>, %284, %cst_88 [1] : vector<2x64xf32> to vector<2xf32>
    %286 = vector.shape_cast %285 : vector<2xf32> to vector<2x1xf32>
    %287 = vector.broadcast %286 : vector<2x1xf32> to vector<2x64xf32>
    %288 = arith.divf %284, %287 : vector<2x64xf32>
    %289 = vector.shape_cast %288 : vector<2x64xf32> to vector<2x64x1xf32>
    %290 = vector.broadcast %289 : vector<2x64x1xf32> to vector<2x64x12xf32>
    %291 = arith.mulf %290, %1 : vector<2x64x12xf32>
    %cst_89 = arith.constant dense<0.000000e+00> : vector<2x12xf32>
    %292 = vector.multi_reduction <add>, %291, %cst_89 [1] : vector<2x64x12xf32> to vector<2x12xf32>
    %cst_90 = arith.constant dense<0.000000e+00> : vector<2x256xf32>
    %293 = tpu.matmul %292, %36, %cst_90 {dimension_numbers = #tpu.dot_dimension_numbers<[1], [0], [0], [1], [0, 0, 1, 1], [], []>} : vector<2x12xf32>, vector<12x256xf32>, vector<2x256xf32> -> vector<2x256xf32>
    %294 = vector.broadcast %37 : vector<1x256xf32> to vector<2x256xf32>
    %295 = arith.addf %293, %294 : vector<2x256xf32>
    %296 = tpu.iota {dimensions = array<i32: 1>} : vector<2x128xi32>
    %cst_91 = arith.constant dense<0xFF800000> : vector<2xf32>
    %297 = vector.multi_reduction <maximumf>, %262, %cst_91 [1] : vector<2x128xf32> to vector<2xf32>
    %298 = vector.shape_cast %297 : vector<2xf32> to vector<2x1xf32>
    %299 = vector.broadcast %298 : vector<2x1xf32> to vector<2x128xf32>
    %300 = arith.cmpf oeq, %262, %299 : vector<2x128xf32>
    %c128_i32_92 = arith.constant 128 : i32
    %301 = vector.broadcast %c128_i32_92 : i32 to vector<2x128xi32>
    %302 = arith.select %300, %296, %301 : vector<2x128xi1>, vector<2x128xi32>
    %cst_93 = arith.constant dense<2147483647> : vector<2xi32>
    %303 = vector.multi_reduction <minsi>, %302, %cst_93 [1] : vector<2x128xi32> to vector<2xi32>
    %304 = vector.shape_cast %303 : vector<2xi32> to vector<2x1xi32>
    %305 = vector.broadcast %304 : vector<2x1xi32> to vector<2x128xi32>
    %306 = arith.cmpi eq, %296, %305 : vector<2x128xi32>
    %307 = arith.extui %306 : vector<2x128xi1> to vector<2x128xi32>
    %308 = arith.sitofp %307 : vector<2x128xi32> to vector<2x128xf32>
    %cst_94 = arith.constant dense<0.000000e+00> : vector<2x256xf32>
    %309 = tpu.matmul %308, %38, %cst_94 {dimension_numbers = #tpu.dot_dimension_numbers<[1], [0], [0], [1], [0, 0, 1, 1], [], []>} : vector<2x128xf32>, vector<128x256xf32>, vector<2x256xf32> -> vector<2x256xf32>
    %310 = arith.addf %295, %309 : vector<2x256xf32>
    %311 = arith.addf %310, %266 : vector<2x256xf32>
    %312 = vector.broadcast %33 : vector<1x256xf32> to vector<2x256xf32>
    %313 = arith.addf %311, %312 : vector<2x256xf32>
    %314 = vector.extract_strided_slice %313 {offsets = [0, 0], sizes = [2, 64], strides = [1, 1]} : vector<2x256xf32> to vector<2x64xf32>
    %315 = arith.negf %314 : vector<2x64xf32>
    %316 = math.exp %315 : vector<2x64xf32>
    %cst_95 = arith.constant 1.000000e+00 : f32
    %317 = vector.broadcast %cst_95 : f32 to vector<2x64xf32>
    %318 = arith.addf %317, %316 : vector<2x64xf32>
    %319 = arith.divf %317, %318 : vector<2x64xf32>
    %320 = vector.extract_strided_slice %313 {offsets = [0, 64], sizes = [2, 64], strides = [1, 1]} : vector<2x256xf32> to vector<2x64xf32>
    %321 = arith.negf %320 : vector<2x64xf32>
    %322 = math.exp %321 : vector<2x64xf32>
    %cst_96 = arith.constant 1.000000e+00 : f32
    %323 = vector.broadcast %cst_96 : f32 to vector<2x64xf32>
    %324 = arith.addf %323, %322 : vector<2x64xf32>
    %325 = arith.divf %323, %324 : vector<2x64xf32>
    %326 = vector.extract_strided_slice %313 {offsets = [0, 128], sizes = [2, 64], strides = [1, 1]} : vector<2x256xf32> to vector<2x64xf32>
    %327 = math.tanh %326 : vector<2x64xf32>
    %328 = vector.extract_strided_slice %313 {offsets = [0, 192], sizes = [2, 64], strides = [1, 1]} : vector<2x256xf32> to vector<2x64xf32>
    %329 = arith.negf %328 : vector<2x64xf32>
    %330 = math.exp %329 : vector<2x64xf32>
    %cst_97 = arith.constant 1.000000e+00 : f32
    %331 = vector.broadcast %cst_97 : f32 to vector<2x64xf32>
    %332 = arith.addf %331, %330 : vector<2x64xf32>
    %333 = arith.divf %331, %332 : vector<2x64xf32>
    %334 = arith.mulf %325, %256 : vector<2x64xf32>
    %335 = arith.mulf %319, %327 : vector<2x64xf32>
    %336 = arith.addf %334, %335 : vector<2x64xf32>
    %337 = math.tanh %336 : vector<2x64xf32>
    %338 = arith.mulf %333, %337 : vector<2x64xf32>
    %cst_98 = arith.constant dense<0.000000e+00> : vector<2x416xf32>
    %339 = tpu.matmul %338, %32, %cst_98 {dimension_numbers = #tpu.dot_dimension_numbers<[1], [0], [0], [1], [0, 0, 1, 1], [], []>} : vector<2x64xf32>, vector<64x416xf32>, vector<2x416xf32> -> vector<2x416xf32>
    %340 = vector.extract_strided_slice %339 {offsets = [0, 256], sizes = [2, 128], strides = [1, 1]} : vector<2x416xf32> to vector<2x128xf32>
    %341 = vector.broadcast %34 : vector<1x128xf32> to vector<2x128xf32>
    %342 = arith.addf %340, %341 : vector<2x128xf32>
    %c3 = arith.constant 3 : index
    %c0_99 = arith.constant 0 : index
    %c0_100 = arith.constant 0 : index
    %343 = vector.load %arg19[%c3, %c0_99, %c0_100] : memref<4x2x128xf32, #tpu.memory_space<vmem>>, vector<1x2x128xf32>
    %344 = vector.shape_cast %343 : vector<1x2x128xf32> to vector<2x128xf32>
    %345 = vector.shape_cast %342 : vector<2x128xf32> to vector<1x2x128xf32>
    tpu.vector_store %arg19[%c3, %c0_99, %c0_100], %345 {strides = array<i32>} : memref<4x2x128xf32, #tpu.memory_space<vmem>>, vector<1x2x128xf32>,
    return
  }
}

</mosaic_0001>

<llo_original>
// kernel: encoder_decoder_forward.1
$region0: #{encoder_decoder_forward.1}
  #allocation0 [shape = 'u32[]', space=smem, size = 0x4, offset = 0x4, fixed_abs, tag = 'smem constant byte address 0x4 - core index']
  #allocation1 [shape = 'u32[144,128]{1,0:T(1,128)}', space=vmem, size = 0x12000, scoped, tag = 'internal scratch']
  #allocation2 [shape = 'f32[1,1]{1,0:T(1,128)S(1)}', space=vmem, size = 0x200, scoped, tag = 'scoped memory for encoder_decoder_forward.1']
  %s0 = inlined_call_operand.vmem [shape: f32[128,12], index: 0, kind: input, shape index: {}]
  %s1 = inlined_call_operand.vmem [shape: f32[12,2048], index: 1, kind: input, shape index: {}]
  %s2 = inlined_call_operand.vmem [shape: f32[1,2048], index: 2, kind: input, shape index: {}]
  %s3 = inlined_call_operand.vmem [shape: f32[2048,32], index: 3, kind: input, shape index: {}]
  %s4 = inlined_call_operand.vmem [shape: f32[1,32], index: 4, kind: input, shape index: {}]
  %s5 = inlined_call_operand.vmem [shape: f32[12,32], index: 5, kind: input, shape index: {}]
  %s6 = inlined_call_operand.vmem [shape: f32[1,32], index: 6, kind: input, shape index: {}]
  %s7 = inlined_call_operand.vmem [shape: f32[1,32], index: 7, kind: input, shape index: {}]
  %s8 = inlined_call_operand.<no memory space> [shape: f32[1,1], index: 8, kind: input, shape index: {}]
  %s9 = inlined_call_operand.vmem [shape: f32[32,64], index: 9, kind: input, shape index: {}]
  %s10 = inlined_call_operand.vmem [shape: f32[1,64], index: 10, kind: input, shape index: {}]
  %s11 = inlined_call_operand.vmem [shape: f32[12,256], index: 11, kind: input, shape index: {}]
  %s12 = inlined_call_operand.vmem [shape: f32[1,256], index: 12, kind: input, shape index: {}]
  %s13 = inlined_call_operand.vmem [shape: f32[32,256], index: 13, kind: input, shape index: {}]
  %s14 = inlined_call_operand.vmem [shape: f32[64,416], index: 14, kind: input, shape index: {}]
  %s15 = inlined_call_operand.vmem [shape: f32[1,256], index: 15, kind: input, shape index: {}]
  %s16 = inlined_call_operand.vmem [shape: f32[1,128], index: 16, kind: input, shape index: {}]
  %s17 = inlined_call_operand.vmem [shape: f32[1,32], index: 17, kind: input, shape index: {}]
  %s18 = inlined_call_operand.vmem [shape: f32[128,256], index: 18, kind: input, shape index: {}]
  %s19 = inlined_call_operand.vmem [shape: f32[4,2,128], index: 19, kind: output, shape index: {}]
  %s20 = sld [smem:[#allocation0]]
  $region86: #{encoder_decoder_forward.1} parent=0
    _
  %s22 = ssub.s32 1, %s20
  %s23 = scalar_select 0, %s22, %s20
  %v24 = vstv %s8
  %25 = vst [vmem:[#allocation2] sm:$0x1] %v24
  // Predicated region
  $region2: #{encoder_decoder_forward.1} parent=0 // pred_check
    _
  $region3: #{encoder_decoder_forward.1} parent=0 // pred_check_branch
    %27 = sbr.rel (0) target = $region5
  $region4: #{encoder_decoder_forward.1} parent=0 // pred_region
    _
  $region5: #{encoder_decoder_forward.1} parent=0 // pred_fallthru
    _
  // Predicated region
  $region6: #{encoder_decoder_forward.1} parent=0 // pred_check
    _
  $region7: #{encoder_decoder_forward.1} parent=0 // pred_check_branch
    %29 = sbr.rel (0) target = $region9
  $region8: #{encoder_decoder_forward.1} parent=0 // pred_region
    _
  $region9: #{encoder_decoder_forward.1} parent=0 // pred_fallthru
    _
  // Predicated region
  $region10: #{encoder_decoder_forward.1} parent=0 // pred_check
    _
  $region11: #{encoder_decoder_forward.1} parent=0 // pred_check_branch
    %31 = sbr.rel (0) target = $region13
  $region12: #{encoder_decoder_forward.1} parent=0 // pred_region
    _
  $region13: #{encoder_decoder_forward.1} parent=0 // pred_fallthru
    _
  // Predicated region
  $region14: #{encoder_decoder_forward.1} parent=0 // pred_check
    _
  $region15: #{encoder_decoder_forward.1} parent=0 // pred_check_branch
    %33 = sbr.rel (0) target = $region17
  $region16: #{encoder_decoder_forward.1} parent=0 // pred_region
    _
  $region17: #{encoder_decoder_forward.1} parent=0 // pred_fallthru
    _
  // Predicated region
  $region18: #{encoder_decoder_forward.1} parent=0 // pred_check
    _
  $region19: #{encoder_decoder_forward.1} parent=0 // pred_check_branch
    %35 = sbr.rel (0) target = $region21
  $region20: #{encoder_decoder_forward.1} parent=0 // pred_region
    _
  $region21: #{encoder_decoder_forward.1} parent=0 // pred_fallthru
    _
  // Predicated region
  $region22: #{encoder_decoder_forward.1} parent=0 // pred_check
    _
  $region23: #{encoder_decoder_forward.1} parent=0 // pred_check_branch
    %37 = sbr.rel (0) target = $region25
  $region24: #{encoder_decoder_forward.1} parent=0 // pred_region
    _
  $region25: #{encoder_decoder_forward.1} parent=0 // pred_fallthru
    _
  // Predicated region
  $region26: #{encoder_decoder_forward.1} parent=0 // pred_check
    _
  $region27: #{encoder_decoder_forward.1} parent=0 // pred_check_branch
    %39 = sbr.rel (0) target = $region29
  $region28: #{encoder_decoder_forward.1} parent=0 // pred_region
    _
  $region29: #{encoder_decoder_forward.1} parent=0 // pred_fallthru
    _
  // Predicated region
  $region30: #{encoder_decoder_forward.1} parent=0 // pred_check
    _
  $region31: #{encoder_decoder_forward.1} parent=0 // pred_check_branch
    %41 = sbr.rel (0) target = $region33
  $region32: #{encoder_decoder_forward.1} parent=0 // pred_region
    _
  $region33: #{encoder_decoder_forward.1} parent=0 // pred_fallthru
    _
  // Predicated region
  $region34: #{encoder_decoder_forward.1} parent=0 // pred_check
    _
  $region35: #{encoder_decoder_forward.1} parent=0 // pred_check_branch
    %43 = sbr.rel (0) target = $region37
  $region36: #{encoder_decoder_forward.1} parent=0 // pred_region
    _
  $region37: #{encoder_decoder_forward.1} parent=0 // pred_fallthru
    _
  // Predicated region
  $region38: #{encoder_decoder_forward.1} parent=0 // pred_check
    _
  $region39: #{encoder_decoder_forward.1} parent=0 // pred_check_branch
    %45 = sbr.rel (0) target = $region41
  $region40: #{encoder_decoder_forward.1} parent=0 // pred_region
    _
  $region41: #{encoder_decoder_forward.1} parent=0 // pred_fallthru
    _
  // Predicated region
  $region42: #{encoder_decoder_forward.1} parent=0 // pred_check
    _
  $region43: #{encoder_decoder_forward.1} parent=0 // pred_check_branch
    %47 = sbr.rel (0) target = $region45
  $region44: #{encoder_decoder_forward.1} parent=0 // pred_region
    _
  $region45: #{encoder_decoder_forward.1} parent=0 // pred_fallthru
    _
  // Predicated region
  $region46: #{encoder_decoder_forward.1} parent=0 // pred_check
    _
  $region47: #{encoder_decoder_forward.1} parent=0 // pred_check_branch
    %49 = sbr.rel (0) target = $region49
  $region48: #{encoder_decoder_forward.1} parent=0 // pred_region
    _
  $region49: #{encoder_decoder_forward.1} parent=0 // pred_fallthru
    _
  // Predicated region
  $region50: #{encoder_decoder_forward.1} parent=0 // pred_check
    _
  $region51: #{encoder_decoder_forward.1} parent=0 // pred_check_branch
    %51 = sbr.rel (0) target = $region53
  $region52: #{encoder_decoder_forward.1} parent=0 // pred_region
    _
  $region53: #{encoder_decoder_forward.1} parent=0 // pred_fallthru
    _
  // Predicated region
  $region54: #{encoder_decoder_forward.1} parent=0 // pred_check
    _
  $region55: #{encoder_decoder_forward.1} parent=0 // pred_check_branch
    %53 = sbr.rel (0) target = $region57
  $region56: #{encoder_decoder_forward.1} parent=0 // pred_region
    _
  $region57: #{encoder_decoder_forward.1} parent=0 // pred_fallthru
    _
  // Predicated region
  $region58: #{encoder_decoder_forward.1} parent=0 // pred_check
    _
  $region59: #{encoder_decoder_forward.1} parent=0 // pred_check_branch
    %55 = sbr.rel (0) target = $region61
  $region60: #{encoder_decoder_forward.1} parent=0 // pred_region
    _
  $region61: #{encoder_decoder_forward.1} parent=0 // pred_fallthru
    _
  // Predicated region
  $region62: #{encoder_decoder_forward.1} parent=0 // pred_check
    _
  $region63: #{encoder_decoder_forward.1} parent=0 // pred_check_branch
    %57 = sbr.rel (0) target = $region65
  $region64: #{encoder_decoder_forward.1} parent=0 // pred_region
    _
  $region65: #{encoder_decoder_forward.1} parent=0 // pred_fallthru
    _
  // Predicated region
  $region66: #{encoder_decoder_forward.1} parent=0 // pred_check
    _
  $region67: #{encoder_decoder_forward.1} parent=0 // pred_check_branch
    %59 = sbr.rel (0) target = $region69
  $region68: #{encoder_decoder_forward.1} parent=0 // pred_region
    _
  $region69: #{encoder_decoder_forward.1} parent=0 // pred_fallthru
    _
  // Predicated region
  $region70: #{encoder_decoder_forward.1} parent=0 // pred_check
    _
  $region71: #{encoder_decoder_forward.1} parent=0 // pred_check_branch
    %61 = sbr.rel (0) target = $region73
  $region72: #{encoder_decoder_forward.1} parent=0 // pred_region
    _
  $region73: #{encoder_decoder_forward.1} parent=0 // pred_fallthru
    _
  // Predicated region
  $region74: #{encoder_decoder_forward.1} parent=0 // pred_check
    _
  $region75: #{encoder_decoder_forward.1} parent=0 // pred_check_branch
    %63 = sbr.rel (0) target = $region77
  $region76: #{encoder_decoder_forward.1} parent=0 // pred_region
    _
  $region77: #{encoder_decoder_forward.1} parent=0 // pred_fallthru
    _
  %v64 = vld [vmem:[%s0] sm:$0xff]
  %v65 = vld [vmem:[%s0 + $0x8] sm:$0xff]
  %v66 = vld [vmem:[%s0 + $0x10] sm:$0xff]
  %v67 = vld [vmem:[%s0 + $0x18] sm:$0xff]
  %v68 = vld [vmem:[%s0 + $0x20] sm:$0xff]
  %v69 = vld [vmem:[%s0 + $0x28] sm:$0xff]
  %v70 = vld [vmem:[%s0 + $0x30] sm:$0xff]
  %v71 = vld [vmem:[%s0 + $0x38] sm:$0xff]
  %v72 = vld [vmem:[%s0 + $0x40] sm:$0xff]
  %v73 = vld [vmem:[%s0 + $0x48] sm:$0xff]
  %v74 = vld [vmem:[%s0 + $0x50] sm:$0xff]
  %v75 = vld [vmem:[%s0 + $0x58] sm:$0xff]
  %v76 = vld [vmem:[%s0 + $0x60] sm:$0xff]
  %v77 = vld [vmem:[%s0 + $0x68] sm:$0xff]
  %v78 = vld [vmem:[%s0 + $0x70] sm:$0xff]
  %v79 = vld [vmem:[%s0 + $0x78] sm:$0xff]
  %vm80 = vcmask 97280
  %v81 = vsel %vm80, %v64, 0.0
  %v82 = vsel %vm80, %v65, 0.0
  %v83 = vadd.f32 %v81, %v82
  %v84 = vsel %vm80, %v66, 0.0
  %v85 = vadd.f32 %v83, %v84
  %v86 = vsel %vm80, %v67, 0.0
  %v87 = vadd.f32 %v85, %v86
  %v88 = vsel %vm80, %v68, 0.0
  %v89 = vadd.f32 %v87, %v88
  %v90 = vsel %vm80, %v69, 0.0
  %v91 = vadd.f32 %v89, %v90
  %v92 = vsel %vm80, %v70, 0.0
  %v93 = vadd.f32 %v91, %v92
  %v94 = vsel %vm80, %v71, 0.0
  %v95 = vadd.f32 %v93, %v94
  %v96 = vrot.slane %v95, 4
  %v97 = vadd.f32 %v95, %v96
  %v98 = vrot.slane %v97, 2
  %v99 = vadd.f32 %v97, %v98
  %v100 = vrot.slane %v99, 1
  %v101 = vadd.f32 %v99, %v100
  %v102 = vsel %vm80, %v72, 0.0
  %v103 = vsel %vm80, %v73, 0.0
  %v104 = vadd.f32 %v102, %v103
  %v105 = vsel %vm80, %v74, 0.0
  %v106 = vadd.f32 %v104, %v105
  %v107 = vsel %vm80, %v75, 0.0
  %v108 = vadd.f32 %v106, %v107
  %v109 = vsel %vm80, %v76, 0.0
  %v110 = vadd.f32 %v108, %v109
  %v111 = vsel %vm80, %v77, 0.0
  %v112 = vadd.f32 %v110, %v111
  %v113 = vsel %vm80, %v78, 0.0
  %v114 = vadd.f32 %v112, %v113
  %v115 = vsel %vm80, %v79, 0.0
  %v116 = vadd.f32 %v114, %v115
  %v117 = vrot.slane %v116, 4
  %v118 = vadd.f32 %v116, %v117
  %v119 = vrot.slane %v118, 2
  %v120 = vadd.f32 %v118, %v119
  %v121 = vrot.slane %v120, 1
  %v122 = vadd.f32 %v120, %v121
  %v123 = vrcp.pop 64.0
  %v124 = vmul.f32 %v101, %v123
  %v125 = vmul.f32 %v122, %v123
  %v126 = vld [vmem:[%s1] sm:$0xff]
  %v127 = vld [vmem:[%s1 + $0x8] sm:$0xff]
  %v128 = vld [vmem:[%s1 + $0x10] sm:$0xff]
  %v129 = vld [vmem:[%s1 + $0x18] sm:$0xff]
  %v130 = vld [vmem:[%s1 + $0x20] sm:$0xff]
  %v131 = vld [vmem:[%s1 + $0x28] sm:$0xff]
  %v132 = vld [vmem:[%s1 + $0x30] sm:$0xff]
  %v133 = vld [vmem:[%s1 + $0x38] sm:$0xff]
  %v134 = vld [vmem:[%s1 + $0x40] sm:$0xff]
  %v135 = vld [vmem:[%s1 + $0x48] sm:$0xff]
  %v136 = vld [vmem:[%s1 + $0x50] sm:$0xff]
  %v137 = vld [vmem:[%s1 + $0x58] sm:$0xff]
  %v138 = vld [vmem:[%s1 + $0x60] sm:$0xff]
  %v139 = vld [vmem:[%s1 + $0x68] sm:$0xff]
  %v140 = vld [vmem:[%s1 + $0x70] sm:$0xff]
  %v141 = vld [vmem:[%s1 + $0x78] sm:$0xff]
  %v142 = vld [vmem:[%s1 + $0x80] sm:$0xf]
  %v143 = vld [vmem:[%s1 + $0x88] sm:$0xf]
  %v144 = vld [vmem:[%s1 + $0x90] sm:$0xf]
  %v145 = vld [vmem:[%s1 + $0x98] sm:$0xf]
  %v146 = vld [vmem:[%s1 + $0xa0] sm:$0xf]
  %v147 = vld [vmem:[%s1 + $0xa8] sm:$0xf]
  %v148 = vld [vmem:[%s1 + $0xb0] sm:$0xf]
  %v149 = vld [vmem:[%s1 + $0xb8] sm:$0xf]
  %v150 = vld [vmem:[%s1 + $0xc0] sm:$0xf]
  %v151 = vld [vmem:[%s1 + $0xc8] sm:$0xf]
  %v152 = vld [vmem:[%s1 + $0xd0] sm:$0xf]
  %v153 = vld [vmem:[%s1 + $0xd8] sm:$0xf]
  %v154 = vld [vmem:[%s1 + $0xe0] sm:$0xf]
  %v155 = vld [vmem:[%s1 + $0xe8] sm:$0xf]
  %v156 = vld [vmem:[%s1 + $0xf0] sm:$0xf]
  %v157 = vld [vmem:[%s1 + $0xf8] sm:$0xf]
  %v158 = vld [vmem:[%s2] sm:$0xff]
  %v159 = vld [vmem:[%s2 + $0x8] sm:$0xff]
  %v162 = vlaneseq
  %v163 = vshrl.u32 %v162, 7
  %v164 = vsub.s32 0, %v163
  %v165 = vrot.slane %v158, %v164
  %v166 = vlaneseq
  %v167 = vshrl.u32 %v166, 7
  %v168 = vsub.s32 1, %v167
  %v169 = vrot.slane %v158, %v168
  %v170 = vlaneseq
  %v171 = vshrl.u32 %v170, 7
  %v172 = vsub.s32 2, %v171
  %v173 = vrot.slane %v158, %v172
  %v174 = vlaneseq
  %v175 = vshrl.u32 %v174, 7
  %v176 = vsub.s32 3, %v175
  %v177 = vrot.slane %v158, %v176
  %v178 = vlaneseq
  %v179 = vshrl.u32 %v178, 7
  %v180 = vsub.s32 4, %v179
  %v181 = vrot.slane %v158, %v180
  %v182 = vlaneseq
  %v183 = vshrl.u32 %v182, 7
  %v184 = vsub.s32 5, %v183
  %v185 = vrot.slane %v158, %v184
  %v186 = vlaneseq
  %v187 = vshrl.u32 %v186, 7
  %v188 = vsub.s32 6, %v187
  %v189 = vrot.slane %v158, %v188
  %v190 = vlaneseq
  %v191 = vshrl.u32 %v190, 7
  %v192 = vsub.s32 7, %v191
  %v193 = vrot.slane %v158, %v192
  %v194 = vlaneseq
  %v195 = vshrl.u32 %v194, 7
  %v196 = vsub.s32 0, %v195
  %v197 = vrot.slane %v159, %v196
  %v198 = vlaneseq
  %v199 = vshrl.u32 %v198, 7
  %v200 = vsub.s32 1, %v199
  %v201 = vrot.slane %v159, %v200
  %v202 = vlaneseq
  %v203 = vshrl.u32 %v202, 7
  %v204 = vsub.s32 2, %v203
  %v205 = vrot.slane %v159, %v204
  %v206 = vlaneseq
  %v207 = vshrl.u32 %v206, 7
  %v208 = vsub.s32 3, %v207
  %v209 = vrot.slane %v159, %v208
  %v210 = vlaneseq
  %v211 = vshrl.u32 %v210, 7
  %v212 = vsub.s32 4, %v211
  %v213 = vrot.slane %v159, %v212
  %v214 = vlaneseq
  %v215 = vshrl.u32 %v214, 7
  %v216 = vsub.s32 5, %v215
  %v217 = vrot.slane %v159, %v216
  %v218 = vlaneseq
  %v219 = vshrl.u32 %v218, 7
  %v220 = vsub.s32 6, %v219
  %v221 = vrot.slane %v159, %v220
  %v222 = vlaneseq
  %v223 = vshrl.u32 %v222, 7
  %v224 = vsub.s32 7, %v223
  %v225 = vrot.slane %v159, %v224
  %vm244 = vcmask 1041409
  %v245 = vsel %vm244, %v125, %v124
  %v246 = vsel %vm80, %v245, 0
  %vm248 = vcmask 1043456
  %v250 = vsel %vm248, %v142, 0
  %v253 = vsel %vm248, %v143, 0
  %v256 = vsel %vm248, %v144, 0
  %v259 = vsel %vm248, %v145, 0
  %v262 = vsel %vm248, %v146, 0
  %v265 = vsel %vm248, %v147, 0
  %v268 = vsel %vm248, %v148, 0
  %v271 = vsel %vm248, %v149, 0
  %v274 = vsel %vm248, %v150, 0
  %v277 = vsel %vm248, %v151, 0
  %v280 = vsel %vm248, %v152, 0
  %v283 = vsel %vm248, %v153, 0
  %v286 = vsel %vm248, %v154, 0
  %v289 = vsel %vm248, %v155, 0
  %v292 = vsel %vm248, %v156, 0
  %v295 = vsel %vm248, %v157, 0
  %297 = vmatprep.subr.mxu0 0.0
  %298 = vmatpush1.msra.mxu0 0.0
  %299 = vmatprep.subr.mxu0 0.0
  %300 = vmatpush1.msra.mxu0 0.0
  %301 = vmatprep.subr.mxu0 0.0
  %302 = vmatpush1.msra.mxu0 0.0
  %303 = vmatprep.subr.mxu0 0.0
  %304 = vmatpush1.msra.mxu0 0.0
  %305 = vmatprep.subr.mxu0 0.0
  %306 = vmatpush1.msra.mxu0 0.0
  %307 = vmatprep.subr.mxu0 0.0
  %308 = vmatpush1.msra.mxu0 0.0
  %309 = vmatprep.subr.mxu0 0.0
  %310 = vmatpush1.msra.mxu0 0.0
  %311 = vmatprep.subr.mxu0 0.0
  %312 = vmatpush1.msra.mxu0 0.0
  %313 = vmatprep.subr.mxu0 0.0
  %314 = vmatpush1.msra.mxu0 0.0
  %315 = vmatprep.subr.mxu0 0.0
  %316 = vmatpush1.msra.mxu0 0.0
  %317 = vmatprep.subr.mxu0 0.0
  %318 = vmatpush1.msra.mxu0 0.0
  %319 = vmatprep.subr.mxu0 0.0
  %320 = vmatpush1.msra.mxu0 0.0
  %321 = vmatprep.subr.mxu0 0.0
  %322 = vmatpush1.msra.mxu0 0.0
  %323 = vmatprep.subr.mxu0 0.0
  %324 = vmatpush1.msra.mxu0 0.0
  %325 = vmatprep.subr.mxu0 %v253
  %326 = vmatpush1.msra.mxu0 %v250
  %327 = vmatprep.subr.mxu0 %v127
  %328 = vmatpush1.msra.mxu0 %v126
  %329 = vmatprep.subr.mxu0 0.0
  %330 = vmatpush2.msra.mxu0 0.0
  %331 = vmatprep.subr.mxu0 0.0
  %332 = vmatpush2.msra.mxu0 0.0
  %333 = vmatprep.subr.mxu0 0.0
  %334 = vmatpush2.msra.mxu0 0.0
  %335 = vmatprep.subr.mxu0 0.0
  %336 = vmatpush2.msra.mxu0 0.0
  %337 = vmatprep.subr.mxu0 0.0
  %338 = vmatpush2.msra.mxu0 0.0
  %339 = vmatprep.subr.mxu0 0.0
  %340 = vmatpush2.msra.mxu0 0.0
  %341 = vmatprep.subr.mxu0 0.0
  %342 = vmatpush2.msra.mxu0 0.0
  %343 = vmatprep.subr.mxu0 0.0
  %344 = vmatpush2.msra.mxu0 0.0
  %345 = vmatprep.subr.mxu0 0.0
  %346 = vmatpush2.msra.mxu0 0.0
  %347 = vmatprep.subr.mxu0 0.0
  %348 = vmatpush2.msra.mxu0 0.0
  %349 = vmatprep.subr.mxu0 0.0
  %350 = vmatpush2.msra.mxu0 0.0
  %351 = vmatprep.subr.mxu0 0.0
  %352 = vmatpush2.msra.mxu0 0.0
  %353 = vmatprep.subr.mxu0 0.0
  %354 = vmatpush2.msra.mxu0 0.0
  %355 = vmatprep.subr.mxu0 0.0
  %356 = vmatpush2.msra.mxu0 0.0
  %357 = vmatprep.subr.mxu0 0.0
  %358 = vmatpush2.msra.mxu0 0.0
  %359 = vmatprep.subr.mxu0 0.0
  %360 = vmatpush2.msra.mxu0 0.0
  %361 = vmatprep.mubr.f32.mxu0 0.0
  %362 = vmatmul.mubr.f32.gmra.mxu0 %v246
  %v363 = vpop.f32.mrf.mxu0
  %v364 = vadd.f32 %v165, %v363
  %v365 = vpop.f32.mrf.mxu0
  %v366 = vadd.f32 %v169, %v365
  %367 = vdwg.mxu0
  %368 = vmatprep.subr.mxu0 0.0
  %369 = vmatpush1.msra.mxu0 0.0
  %370 = vmatprep.subr.mxu0 0.0
  %371 = vmatpush1.msra.mxu0 0.0
  %372 = vmatprep.subr.mxu0 0.0
  %373 = vmatpush1.msra.mxu0 0.0
  %374 = vmatprep.subr.mxu0 0.0
  %375 = vmatpush1.msra.mxu0 0.0
  %376 = vmatprep.subr.mxu0 0.0
  %377 = vmatpush1.msra.mxu0 0.0
  %378 = vmatprep.subr.mxu0 0.0
  %379 = vmatpush1.msra.mxu0 0.0
  %380 = vmatprep.subr.mxu0 0.0
  %381 = vmatpush1.msra.mxu0 0.0
  %382 = vmatprep.subr.mxu0 0.0
  %383 = vmatpush1.msra.mxu0 0.0
  %384 = vmatprep.subr.mxu0 0.0
  %385 = vmatpush1.msra.mxu0 0.0
  %386 = vmatprep.subr.mxu0 0.0
  %387 = vmatpush1.msra.mxu0 0.0
  %388 = vmatprep.subr.mxu0 0.0
  %389 = vmatpush1.msra.mxu0 0.0
  %390 = vmatprep.subr.mxu0 0.0
  %391 = vmatpush1.msra.mxu0 0.0
  %392 = vmatprep.subr.mxu0 0.0
  %393 = vmatpush1.msra.mxu0 0.0
  %394 = vmatprep.subr.mxu0 0.0
  %395 = vmatpush1.msra.mxu0 0.0
  %396 = vmatprep.subr.mxu0 %v259
  %397 = vmatpush1.msra.mxu0 %v256
  %398 = vmatprep.subr.mxu0 %v129
  %399 = vmatpush1.msra.mxu0 %v128
  %400 = vmatprep.subr.mxu0 0.0
  %401 = vmatpush2.msra.mxu0 0.0
  %402 = vmatprep.subr.mxu0 0.0
  %403 = vmatpush2.msra.mxu0 0.0
  %404 = vmatprep.subr.mxu0 0.0
  %405 = vmatpush2.msra.mxu0 0.0
  %406 = vmatprep.subr.mxu0 0.0
  %407 = vmatpush2.msra.mxu0 0.0
  %408 = vmatprep.subr.mxu0 0.0
  %409 = vmatpush2.msra.mxu0 0.0
  %410 = vmatprep.subr.mxu0 0.0
  %411 = vmatpush2.msra.mxu0 0.0
  %412 = vmatprep.subr.mxu0 0.0
  %413 = vmatpush2.msra.mxu0 0.0
  %414 = vmatprep.subr.mxu0 0.0
  %415 = vmatpush2.msra.mxu0 0.0
  %416 = vmatprep.subr.mxu0 0.0
  %417 = vmatpush2.msra.mxu0 0.0
  %418 = vmatprep.subr.mxu0 0.0
  %419 = vmatpush2.msra.mxu0 0.0
  %420 = vmatprep.subr.mxu0 0.0
  %421 = vmatpush2.msra.mxu0 0.0
  %422 = vmatprep.subr.mxu0 0.0
  %423 = vmatpush2.msra.mxu0 0.0
  %424 = vmatprep.subr.mxu0 0.0
  %425 = vmatpush2.msra.mxu0 0.0
  %426 = vmatprep.subr.mxu0 0.0
  %427 = vmatpush2.msra.mxu0 0.0
  %428 = vmatprep.subr.mxu0 0.0
  %429 = vmatpush2.msra.mxu0 0.0
  %430 = vmatprep.subr.mxu0 0.0
  %431 = vmatpush2.msra.mxu0 0.0
  %432 = vmatprep.mubr.f32.mxu0 0.0
  %433 = vmatmul.mubr.f32.gmra.mxu0 %v246
  %v434 = vpop.f32.mrf.mxu0
  %v435 = vadd.f32 %v173, %v434
  %v436 = vpop.f32.mrf.mxu0
  %v437 = vadd.f32 %v177, %v436
  %438 = vdwg.mxu0
  %439 = vmatprep.subr.mxu0 0.0
  %440 = vmatpush1.msra.mxu0 0.0
  %441 = vmatprep.subr.mxu0 0.0
  %442 = vmatpush1.msra.mxu0 0.0
  %443 = vmatprep.subr.mxu0 0.0
  %444 = vmatpush1.msra.mxu0 0.0
  %445 = vmatprep.subr.mxu0 0.0
  %446 = vmatpush1.msra.mxu0 0.0
  %447 = vmatprep.subr.mxu0 0.0
  %448 = vmatpush1.msra.mxu0 0.0
  %449 = vmatprep.subr.mxu0 0.0
  %450 = vmatpush1.msra.mxu0 0.0
  %451 = vmatprep.subr.mxu0 0.0
  %452 = vmatpush1.msra.mxu0 0.0
  %453 = vmatprep.subr.mxu0 0.0
  %454 = vmatpush1.msra.mxu0 0.0
  %455 = vmatprep.subr.mxu0 0.0
  %456 = vmatpush1.msra.mxu0 0.0
  %457 = vmatprep.subr.mxu0 0.0
  %458 = vmatpush1.msra.mxu0 0.0
  %459 = vmatprep.subr.mxu0 0.0
  %460 = vmatpush1.msra.mxu0 0.0
  %461 = vmatprep.subr.mxu0 0.0
  %462 = vmatpush1.msra.mxu0 0.0
  %463 = vmatprep.subr.mxu0 0.0
  %464 = vmatpush1.msra.mxu0 0.0
  %465 = vmatprep.subr.mxu0 0.0
  %466 = vmatpush1.msra.mxu0 0.0
  %467 = vmatprep.subr.mxu0 %v265
  %468 = vmatpush1.msra.mxu0 %v262
  %469 = vmatprep.subr.mxu0 %v131
  %470 = vmatpush1.msra.mxu0 %v130
  %471 = vmatprep.subr.mxu0 0.0
  %472 = vmatpush2.msra.mxu0 0.0
  %473 = vmatprep.subr.mxu0 0.0
  %474 = vmatpush2.msra.mxu0 0.0
  %475 = vmatprep.subr.mxu0 0.0
  %476 = vmatpush2.msra.mxu0 0.0
  %477 = vmatprep.subr.mxu0 0.0
  %478 = vmatpush2.msra.mxu0 0.0
  %479 = vmatprep.subr.mxu0 0.0
  %480 = vmatpush2.msra.mxu0 0.0
  %481 = vmatprep.subr.mxu0 0.0
  %482 = vmatpush2.msra.mxu0 0.0
  %483 = vmatprep.subr.mxu0 0.0
  %484 = vmatpush2.msra.mxu0 0.0
  %485 = vmatprep.subr.mxu0 0.0
  %486 = vmatpush2.msra.mxu0 0.0
  %487 = vmatprep.subr.mxu0 0.0
  %488 = vmatpush2.msra.mxu0 0.0
  %489 = vmatprep.subr.mxu0 0.0
  %490 = vmatpush2.msra.mxu0 0.0
  %491 = vmatprep.subr.mxu0 0.0
  %492 = vmatpush2.msra.mxu0 0.0
  %493 = vmatprep.subr.mxu0 0.0
  %494 = vmatpush2.msra.mxu0 0.0
  %495 = vmatprep.subr.mxu0 0.0
  %496 = vmatpush2.msra.mxu0 0.0
  %497 = vmatprep.subr.mxu0 0.0
  %498 = vmatpush2.msra.mxu0 0.0
  %499 = vmatprep.subr.mxu0 0.0
  %500 = vmatpush2.msra.mxu0 0.0
  %501 = vmatprep.subr.mxu0 0.0
  %502 = vmatpush2.msra.mxu0 0.0
  %503 = vmatprep.mubr.f32.mxu0 0.0
  %504 = vmatmul.mubr.f32.gmra.mxu0 %v246
  %v505 = vpop.f32.mrf.mxu0
  %v506 = vadd.f32 %v181, %v505
  %v507 = vpop.f32.mrf.mxu0
  %v508 = vadd.f32 %v185, %v507
  %509 = vdwg.mxu0
  %510 = vmatprep.subr.mxu0 0.0
  %511 = vmatpush1.msra.mxu0 0.0
  %512 = vmatprep.subr.mxu0 0.0
  %513 = vmatpush1.msra.mxu0 0.0
  %514 = vmatprep.subr.mxu0 0.0
  %515 = vmatpush1.msra.mxu0 0.0
  %516 = vmatprep.subr.mxu0 0.0
  %517 = vmatpush1.msra.mxu0 0.0
  %518 = vmatprep.subr.mxu0 0.0
  %519 = vmatpush1.msra.mxu0 0.0
  %520 = vmatprep.subr.mxu0 0.0
  %521 = vmatpush1.msra.mxu0 0.0
  %522 = vmatprep.subr.mxu0 0.0
  %523 = vmatpush1.msra.mxu0 0.0
  %524 = vmatprep.subr.mxu0 0.0
  %525 = vmatpush1.msra.mxu0 0.0
  %526 = vmatprep.subr.mxu0 0.0
  %527 = vmatpush1.msra.mxu0 0.0
  %528 = vmatprep.subr.mxu0 0.0
  %529 = vmatpush1.msra.mxu0 0.0
  %530 = vmatprep.subr.mxu0 0.0
  %531 = vmatpush1.msra.mxu0 0.0
  %532 = vmatprep.subr.mxu0 0.0
  %533 = vmatpush1.msra.mxu0 0.0
  %534 = vmatprep.subr.mxu0 0.0
  %535 = vmatpush1.msra.mxu0 0.0
  %536 = vmatprep.subr.mxu0 0.0
  %537 = vmatpush1.msra.mxu0 0.0
  %538 = vmatprep.subr.mxu0 %v271
  %539 = vmatpush1.msra.mxu0 %v268
  %540 = vmatprep.subr.mxu0 %v133
  %541 = vmatpush1.msra.mxu0 %v132
  %542 = vmatprep.subr.mxu0 0.0
  %543 = vmatpush2.msra.mxu0 0.0
  %544 = vmatprep.subr.mxu0 0.0
  %545 = vmatpush2.msra.mxu0 0.0
  %546 = vmatprep.subr.mxu0 0.0
  %547 = vmatpush2.msra.mxu0 0.0
  %548 = vmatprep.subr.mxu0 0.0
  %549 = vmatpush2.msra.mxu0 0.0
  %550 = vmatprep.subr.mxu0 0.0
  %551 = vmatpush2.msra.mxu0 0.0
  %552 = vmatprep.subr.mxu0 0.0
  %553 = vmatpush2.msra.mxu0 0.0
  %554 = vmatprep.subr.mxu0 0.0
  %555 = vmatpush2.msra.mxu0 0.0
  %556 = vmatprep.subr.mxu0 0.0
  %557 = vmatpush2.msra.mxu0 0.0
  %558 = vmatprep.subr.mxu0 0.0
  %559 = vmatpush2.msra.mxu0 0.0
  %560 = vmatprep.subr.mxu0 0.0
  %561 = vmatpush2.msra.mxu0 0.0
  %562 = vmatprep.subr.mxu0 0.0
  %563 = vmatpush2.msra.mxu0 0.0
  %564 = vmatprep.subr.mxu0 0.0
  %565 = vmatpush2.msra.mxu0 0.0
  %566 = vmatprep.subr.mxu0 0.0
  %567 = vmatpush2.msra.mxu0 0.0
  %568 = vmatprep.subr.mxu0 0.0
  %569 = vmatpush2.msra.mxu0 0.0
  %570 = vmatprep.subr.mxu0 0.0
  %571 = vmatpush2.msra.mxu0 0.0
  %572 = vmatprep.subr.mxu0 0.0
  %573 = vmatpush2.msra.mxu0 0.0
  %574 = vmatprep.mubr.f32.mxu0 0.0
  %575 = vmatmul.mubr.f32.gmra.mxu0 %v246
  %v576 = vpop.f32.mrf.mxu0
  %v577 = vadd.f32 %v189, %v576
  %v578 = vpop.f32.mrf.mxu0
  %v579 = vadd.f32 %v193, %v578
  %580 = vdwg.mxu0
  %581 = vmatprep.subr.mxu0 0.0
  %582 = vmatpush1.msra.mxu0 0.0
  %583 = vmatprep.subr.mxu0 0.0
  %584 = vmatpush1.msra.mxu0 0.0
  %585 = vmatprep.subr.mxu0 0.0
  %586 = vmatpush1.msra.mxu0 0.0
  %587 = vmatprep.subr.mxu0 0.0
  %588 = vmatpush1.msra.mxu0 0.0
  %589 = vmatprep.subr.mxu0 0.0
  %590 = vmatpush1.msra.mxu0 0.0
  %591 = vmatprep.subr.mxu0 0.0
  %592 = vmatpush1.msra.mxu0 0.0
  %593 = vmatprep.subr.mxu0 0.0
  %594 = vmatpush1.msra.mxu0 0.0
  %595 = vmatprep.subr.mxu0 0.0
  %596 = vmatpush1.msra.mxu0 0.0
  %597 = vmatprep.subr.mxu0 0.0
  %598 = vmatpush1.msra.mxu0 0.0
  %599 = vmatprep.subr.mxu0 0.0
  %600 = vmatpush1.msra.mxu0 0.0
  %601 = vmatprep.subr.mxu0 0.0
  %602 = vmatpush1.msra.mxu0 0.0
  %603 = vmatprep.subr.mxu0 0.0
  %604 = vmatpush1.msra.mxu0 0.0
  %605 = vmatprep.subr.mxu0 0.0
  %606 = vmatpush1.msra.mxu0 0.0
  %607 = vmatprep.subr.mxu0 0.0
  %608 = vmatpush1.msra.mxu0 0.0
  %609 = vmatprep.subr.mxu0 %v277
  %610 = vmatpush1.msra.mxu0 %v274
  %611 = vmatprep.subr.mxu0 %v135
  %612 = vmatpush1.msra.mxu0 %v134
  %613 = vmatprep.subr.mxu0 0.0
  %614 = vmatpush2.msra.mxu0 0.0
  %615 = vmatprep.subr.mxu0 0.0
  %616 = vmatpush2.msra.mxu0 0.0
  %617 = vmatprep.subr.mxu0 0.0
  %618 = vmatpush2.msra.mxu0 0.0
  %619 = vmatprep.subr.mxu0 0.0
  %620 = vmatpush2.msra.mxu0 0.0
  %621 = vmatprep.subr.mxu0 0.0
  %622 = vmatpush2.msra.mxu0 0.0
  %623 = vmatprep.subr.mxu0 0.0
  %624 = vmatpush2.msra.mxu0 0.0
  %625 = vmatprep.subr.mxu0 0.0
  %626 = vmatpush2.msra.mxu0 0.0
  %627 = vmatprep.subr.mxu0 0.0
  %628 = vmatpush2.msra.mxu0 0.0
  %629 = vmatprep.subr.mxu0 0.0
  %630 = vmatpush2.msra.mxu0 0.0
  %631 = vmatprep.subr.mxu0 0.0
  %632 = vmatpush2.msra.mxu0 0.0
  %633 = vmatprep.subr.mxu0 0.0
  %634 = vmatpush2.msra.mxu0 0.0
  %635 = vmatprep.subr.mxu0 0.0
  %636 = vmatpush2.msra.mxu0 0.0
  %637 = vmatprep.subr.mxu0 0.0
  %638 = vmatpush2.msra.mxu0 0.0
  %639 = vmatprep.subr.mxu0 0.0
  %640 = vmatpush2.msra.mxu0 0.0
  %641 = vmatprep.subr.mxu0 0.0
  %642 = vmatpush2.msra.mxu0 0.0
  %643 = vmatprep.subr.mxu0 0.0
  %644 = vmatpush2.msra.mxu0 0.0
  %645 = vmatprep.mubr.f32.mxu0 0.0
  %646 = vmatmul.mubr.f32.gmra.mxu0 %v246
  %v647 = vpop.f32.mrf.mxu0
  %v648 = vadd.f32 %v197, %v647
  %v649 = vpop.f32.mrf.mxu0
  %v650 = vadd.f32 %v201, %v649
  %651 = vdwg.mxu0
  %652 = vmatprep.subr.mxu0 0.0
  %653 = vmatpush1.msra.mxu0 0.0
  %654 = vmatprep.subr.mxu0 0.0
  %655 = vmatpush1.msra.mxu0 0.0
  %656 = vmatprep.subr.mxu0 0.0
  %657 = vmatpush1.msra.mxu0 0.0
  %658 = vmatprep.subr.mxu0 0.0
  %659 = vmatpush1.msra.mxu0 0.0
  %660 = vmatprep.subr.mxu0 0.0
  %661 = vmatpush1.msra.mxu0 0.0
  %662 = vmatprep.subr.mxu0 0.0
  %663 = vmatpush1.msra.mxu0 0.0
  %664 = vmatprep.subr.mxu0 0.0
  %665 = vmatpush1.msra.mxu0 0.0
  %666 = vmatprep.subr.mxu0 0.0
  %667 = vmatpush1.msra.mxu0 0.0
  %668 = vmatprep.subr.mxu0 0.0
  %669 = vmatpush1.msra.mxu0 0.0
  %670 = vmatprep.subr.mxu0 0.0
  %671 = vmatpush1.msra.mxu0 0.0
  %672 = vmatprep.subr.mxu0 0.0
  %673 = vmatpush1.msra.mxu0 0.0
  %674 = vmatprep.subr.mxu0 0.0
  %675 = vmatpush1.msra.mxu0 0.0
  %676 = vmatprep.subr.mxu0 0.0
  %677 = vmatpush1.msra.mxu0 0.0
  %678 = vmatprep.subr.mxu0 0.0
  %679 = vmatpush1.msra.mxu0 0.0
  %680 = vmatprep.subr.mxu0 %v283
  %681 = vmatpush1.msra.mxu0 %v280
  %682 = vmatprep.subr.mxu0 %v137
  %683 = vmatpush1.msra.mxu0 %v136
  %684 = vmatprep.subr.mxu0 0.0
  %685 = vmatpush2.msra.mxu0 0.0
  %686 = vmatprep.subr.mxu0 0.0
  %687 = vmatpush2.msra.mxu0 0.0
  %688 = vmatprep.subr.mxu0 0.0
  %689 = vmatpush2.msra.mxu0 0.0
  %690 = vmatprep.subr.mxu0 0.0
  %691 = vmatpush2.msra.mxu0 0.0
  %692 = vmatprep.subr.mxu0 0.0
  %693 = vmatpush2.msra.mxu0 0.0
  %694 = vmatprep.subr.mxu0 0.0
  %695 = vmatpush2.msra.mxu0 0.0
  %696 = vmatprep.subr.mxu0 0.0
  %697 = vmatpush2.msra.mxu0 0.0
  %698 = vmatprep.subr.mxu0 0.0
  %699 = vmatpush2.msra.mxu0 0.0
  %700 = vmatprep.subr.mxu0 0.0
  %701 = vmatpush2.msra.mxu0 0.0
  %702 = vmatprep.subr.mxu0 0.0
  %703 = vmatpush2.msra.mxu0 0.0
  %704 = vmatprep.subr.mxu0 0.0
  %705 = vmatpush2.msra.mxu0 0.0
  %706 = vmatprep.subr.mxu0 0.0
  %707 = vmatpush2.msra.mxu0 0.0
  %708 = vmatprep.subr.mxu0 0.0
  %709 = vmatpush2.msra.mxu0 0.0
  %710 = vmatprep.subr.mxu0 0.0
  %711 = vmatpush2.msra.mxu0 0.0
  %712 = vmatprep.subr.mxu0 0.0
  %713 = vmatpush2.msra.mxu0 0.0
  %714 = vmatprep.subr.mxu0 0.0
  %715 = vmatpush2.msra.mxu0 0.0
  %716 = vmatprep.mubr.f32.mxu0 0.0
  %717 = vmatmul.mubr.f32.gmra.mxu0 %v246
  %v718 = vpop.f32.mrf.mxu0
  %v719 = vadd.f32 %v205, %v718
  %v720 = vpop.f32.mrf.mxu0
  %v721 = vadd.f32 %v209, %v720
  %722 = vdwg.mxu0
  %723 = vmatprep.subr.mxu0 0.0
  %724 = vmatpush1.msra.mxu0 0.0
  %725 = vmatprep.subr.mxu0 0.0
  %726 = vmatpush1.msra.mxu0 0.0
  %727 = vmatprep.subr.mxu0 0.0
  %728 = vmatpush1.msra.mxu0 0.0
  %729 = vmatprep.subr.mxu0 0.0
  %730 = vmatpush1.msra.mxu0 0.0
  %731 = vmatprep.subr.mxu0 0.0
  %732 = vmatpush1.msra.mxu0 0.0
  %733 = vmatprep.subr.mxu0 0.0
  %734 = vmatpush1.msra.mxu0 0.0
  %735 = vmatprep.subr.mxu0 0.0
  %736 = vmatpush1.msra.mxu0 0.0
  %737 = vmatprep.subr.mxu0 0.0
  %738 = vmatpush1.msra.mxu0 0.0
  %739 = vmatprep.subr.mxu0 0.0
  %740 = vmatpush1.msra.mxu0 0.0
  %741 = vmatprep.subr.mxu0 0.0
  %742 = vmatpush1.msra.mxu0 0.0
  %743 = vmatprep.subr.mxu0 0.0
  %744 = vmatpush1.msra.mxu0 0.0
  %745 = vmatprep.subr.mxu0 0.0
  %746 = vmatpush1.msra.mxu0 0.0
  %747 = vmatprep.subr.mxu0 0.0
  %748 = vmatpush1.msra.mxu0 0.0
  %749 = vmatprep.subr.mxu0 0.0
  %750 = vmatpush1.msra.mxu0 0.0
  %751 = vmatprep.subr.mxu0 %v289
  %752 = vmatpush1.msra.mxu0 %v286
  %753 = vmatprep.subr.mxu0 %v139
  %754 = vmatpush1.msra.mxu0 %v138
  %755 = vmatprep.subr.mxu0 0.0
  %756 = vmatpush2.msra.mxu0 0.0
  %757 = vmatprep.subr.mxu0 0.0
  %758 = vmatpush2.msra.mxu0 0.0
  %759 = vmatprep.subr.mxu0 0.0
  %760 = vmatpush2.msra.mxu0 0.0
  %761 = vmatprep.subr.mxu0 0.0
  %762 = vmatpush2.msra.mxu0 0.0
  %763 = vmatprep.subr.mxu0 0.0
  %764 = vmatpush2.msra.mxu0 0.0
  %765 = vmatprep.subr.mxu0 0.0
  %766 = vmatpush2.msra.mxu0 0.0
  %767 = vmatprep.subr.mxu0 0.0
  %768 = vmatpush2.msra.mxu0 0.0
  %769 = vmatprep.subr.mxu0 0.0
  %770 = vmatpush2.msra.mxu0 0.0
  %771 = vmatprep.subr.mxu0 0.0
  %772 = vmatpush2.msra.mxu0 0.0
  %773 = vmatprep.subr.mxu0 0.0
  %774 = vmatpush2.msra.mxu0 0.0
  %775 = vmatprep.subr.mxu0 0.0
  %776 = vmatpush2.msra.mxu0 0.0
  %777 = vmatprep.subr.mxu0 0.0
  %778 = vmatpush2.msra.mxu0 0.0
  %779 = vmatprep.subr.mxu0 0.0
  %780 = vmatpush2.msra.mxu0 0.0
  %781 = vmatprep.subr.mxu0 0.0
  %782 = vmatpush2.msra.mxu0 0.0
  %783 = vmatprep.subr.mxu0 0.0
  %784 = vmatpush2.msra.mxu0 0.0
  %785 = vmatprep.subr.mxu0 0.0
  %786 = vmatpush2.msra.mxu0 0.0
  %787 = vmatprep.mubr.f32.mxu0 0.0
  %788 = vmatmul.mubr.f32.gmra.mxu0 %v246
  %v789 = vpop.f32.mrf.mxu0
  %v790 = vadd.f32 %v213, %v789
  %v791 = vpop.f32.mrf.mxu0
  %v792 = vadd.f32 %v217, %v791
  %793 = vdwg.mxu0
  %794 = vmatprep.subr.mxu0 0.0
  %795 = vmatpush1.msra.mxu0 0.0
  %796 = vmatprep.subr.mxu0 0.0
  %797 = vmatpush1.msra.mxu0 0.0
  %798 = vmatprep.subr.mxu0 0.0
  %799 = vmatpush1.msra.mxu0 0.0
  %800 = vmatprep.subr.mxu0 0.0
  %801 = vmatpush1.msra.mxu0 0.0
  %802 = vmatprep.subr.mxu0 0.0
  %803 = vmatpush1.msra.mxu0 0.0
  %804 = vmatprep.subr.mxu0 0.0
  %805 = vmatpush1.msra.mxu0 0.0
  %806 = vmatprep.subr.mxu0 0.0
  %807 = vmatpush1.msra.mxu0 0.0
  %808 = vmatprep.subr.mxu0 0.0
  %809 = vmatpush1.msra.mxu0 0.0
  %810 = vmatprep.subr.mxu0 0.0
  %811 = vmatpush1.msra.mxu0 0.0
  %812 = vmatprep.subr.mxu0 0.0
  %813 = vmatpush1.msra.mxu0 0.0
  %814 = vmatprep.subr.mxu0 0.0
  %815 = vmatpush1.msra.mxu0 0.0
  %816 = vmatprep.subr.mxu0 0.0
  %817 = vmatpush1.msra.mxu0 0.0
  %818 = vmatprep.subr.mxu0 0.0
  %819 = vmatpush1.msra.mxu0 0.0
  %820 = vmatprep.subr.mxu0 0.0
  %821 = vmatpush1.msra.mxu0 0.0
  %822 = vmatprep.subr.mxu0 %v295
  %823 = vmatpush1.msra.mxu0 %v292
  %824 = vmatprep.subr.mxu0 %v141
  %825 = vmatpush1.msra.mxu0 %v140
  %826 = vmatprep.subr.mxu0 0.0
  %827 = vmatpush2.msra.mxu0 0.0
  %828 = vmatprep.subr.mxu0 0.0
  %829 = vmatpush2.msra.mxu0 0.0
  %830 = vmatprep.subr.mxu0 0.0
  %831 = vmatpush2.msra.mxu0 0.0
  %832 = vmatprep.subr.mxu0 0.0
  %833 = vmatpush2.msra.mxu0 0.0
  %834 = vmatprep.subr.mxu0 0.0
  %835 = vmatpush2.msra.mxu0 0.0
  %836 = vmatprep.subr.mxu0 0.0
  %837 = vmatpush2.msra.mxu0 0.0
  %838 = vmatprep.subr.mxu0 0.0
  %839 = vmatpush2.msra.mxu0 0.0
  %840 = vmatprep.subr.mxu0 0.0
  %841 = vmatpush2.msra.mxu0 0.0
  %842 = vmatprep.subr.mxu0 0.0
  %843 = vmatpush2.msra.mxu0 0.0
  %844 = vmatprep.subr.mxu0 0.0
  %845 = vmatpush2.msra.mxu0 0.0
  %846 = vmatprep.subr.mxu0 0.0
  %847 = vmatpush2.msra.mxu0 0.0
  %848 = vmatprep.subr.mxu0 0.0
  %849 = vmatpush2.msra.mxu0 0.0
  %850 = vmatprep.subr.mxu0 0.0
  %851 = vmatpush2.msra.mxu0 0.0
  %852 = vmatprep.subr.mxu0 0.0
  %853 = vmatpush2.msra.mxu0 0.0
  %854 = vmatprep.subr.mxu0 0.0
  %855 = vmatpush2.msra.mxu0 0.0
  %856 = vmatprep.subr.mxu0 0.0
  %857 = vmatpush2.msra.mxu0 0.0
  %858 = vmatprep.mubr.f32.mxu0 0.0
  %859 = vmatmul.mubr.f32.gmra.mxu0 %v246
  %v860 = vpop.f32.mrf.mxu0
  %v861 = vadd.f32 %v221, %v860
  %v862 = vpop.f32.mrf.mxu0
  %v863 = vadd.f32 %v225, %v862
  %864 = vdwg.mxu0
  %v865 = vmax.f32 %v364, 0.0
  %v866 = vmax.f32 %v366, 0.0
  %v867 = vmax.f32 %v435, 0.0
  %v868 = vmax.f32 %v437, 0.0
  %v869 = vmax.f32 %v506, 0.0
  %v870 = vmax.f32 %v508, 0.0
  %v871 = vmax.f32 %v577, 0.0
  %v872 = vmax.f32 %v579, 0.0
  %v873 = vmax.f32 %v648, 0.0
  %v874 = vmax.f32 %v650, 0.0
  %v875 = vmax.f32 %v719, 0.0
  %v876 = vmax.f32 %v721, 0.0
  %v877 = vmax.f32 %v790, 0.0
  %v878 = vmax.f32 %v792, 0.0
  %v879 = vmax.f32 %v861, 0.0
  %v880 = vmax.f32 %v863, 0.0
  %v881 = vld [vmem:[%s3] sm:$0xff]
  %v882 = vld [vmem:[%s3 + $0x8] sm:$0xff]
  %v883 = vld [vmem:[%s3 + $0x10] sm:$0xff]
  %v884 = vld [vmem:[%s3 + $0x18] sm:$0xff]
  %v885 = vld [vmem:[%s3 + $0x20] sm:$0xff]
  %v886 = vld [vmem:[%s3 + $0x28] sm:$0xff]
  %v887 = vld [vmem:[%s3 + $0x30] sm:$0xff]
  %v888 = vld [vmem:[%s3 + $0x38] sm:$0xff]
  %v889 = vld [vmem:[%s3 + $0x40] sm:$0xff]
  %v890 = vld [vmem:[%s3 + $0x48] sm:$0xff]
  %v891 = vld [vmem:[%s3 + $0x50] sm:$0xff]
  %v892 = vld [vmem:[%s3 + $0x58] sm:$0xff]
  %v893 = vld [vmem:[%s3 + $0x60] sm:$0xff]
  %v894 = vld [vmem:[%s3 + $0x68] sm:$0xff]
  %v895 = vld [vmem:[%s3 + $0x70] sm:$0xff]
  %v896 = vld [vmem:[%s3 + $0x78] sm:$0xff]
  %v897 = vld [vmem:[%s3 + $0x80] sm:$0xff]
  %v898 = vld [vmem:[%s3 + $0x88] sm:$0xff]
  %v899 = vld [vmem:[%s3 + $0x90] sm:$0xff]
  %v900 = vld [vmem:[%s3 + $0x98] sm:$0xff]
  %v901 = vld [vmem:[%s3 + $0xa0] sm:$0xff]
  %v902 = vld [vmem:[%s3 + $0xa8] sm:$0xff]
  %v903 = vld [vmem:[%s3 + $0xb0] sm:$0xff]
  %v904 = vld [vmem:[%s3 + $0xb8] sm:$0xff]
  %v905 = vld [vmem:[%s3 + $0xc0] sm:$0xff]
  %v906 = vld [vmem:[%s3 + $0xc8] sm:$0xff]
  %v907 = vld [vmem:[%s3 + $0xd0] sm:$0xff]
  %v908 = vld [vmem:[%s3 + $0xd8] sm:$0xff]
  %v909 = vld [vmem:[%s3 + $0xe0] sm:$0xff]
  %v910 = vld [vmem:[%s3 + $0xe8] sm:$0xff]
  %v911 = vld [vmem:[%s3 + $0xf0] sm:$0xff]
  %v912 = vld [vmem:[%s3 + $0xf8] sm:$0xff]
  %v913 = vld [vmem:[%s3 + $0x100] sm:$0xff]
  %v914 = vld [vmem:[%s3 + $0x108] sm:$0xff]
  %v915 = vld [vmem:[%s3 + $0x110] sm:$0xff]
  %v916 = vld [vmem:[%s3 + $0x118] sm:$0xff]
  %v917 = vld [vmem:[%s3 + $0x120] sm:$0xff]
  %v918 = vld [vmem:[%s3 + $0x128] sm:$0xff]
  %v919 = vld [vmem:[%s3 + $0x130] sm:$0xff]
  %v920 = vld [vmem:[%s3 + $0x138] sm:$0xff]
  %v921 = vld [vmem:[%s3 + $0x140] sm:$0xff]
  %v922 = vld [vmem:[%s3 + $0x148] sm:$0xff]
  %v923 = vld [vmem:[%s3 + $0x150] sm:$0xff]
  %v924 = vld [vmem:[%s3 + $0x158] sm:$0xff]
  %v925 = vld [vmem:[%s3 + $0x160] sm:$0xff]
  %v926 = vld [vmem:[%s3 + $0x168] sm:$0xff]
  %v927 = vld [vmem:[%s3 + $0x170] sm:$0xff]
  %v928 = vld [vmem:[%s3 + $0x178] sm:$0xff]
  %v929 = vld [vmem:[%s3 + $0x180] sm:$0xff]
  %v930 = vld [vmem:[%s3 + $0x188] sm:$0xff]
  %v931 = vld [vmem:[%s3 + $0x190] sm:$0xff]
  %v932 = vld [vmem:[%s3 + $0x198] sm:$0xff]
  %v933 = vld [vmem:[%s3 + $0x1a0] sm:$0xff]
  %v934 = vld [vmem:[%s3 + $0x1a8] sm:$0xff]
  %v935 = vld [vmem:[%s3 + $0x1b0] sm:$0xff]
  %v936 = vld [vmem:[%s3 + $0x1b8] sm:$0xff]
  %v937 = vld [vmem:[%s3 + $0x1c0] sm:$0xff]
  %v938 = vld [vmem:[%s3 + $0x1c8] sm:$0xff]
  %v939 = vld [vmem:[%s3 + $0x1d0] sm:$0xff]
  %v940 = vld [vmem:[%s3 + $0x1d8] sm:$0xff]
  %v941 = vld [vmem:[%s3 + $0x1e0] sm:$0xff]
  %v942 = vld [vmem:[%s3 + $0x1e8] sm:$0xff]
  %v943 = vld [vmem:[%s3 + $0x1f0] sm:$0xff]
  %v944 = vld [vmem:[%s3 + $0x1f8] sm:$0xff]
  %v945 = vld [vmem:[%s3 + $0x200] sm:$0xff]
  %v946 = vld [vmem:[%s3 + $0x208] sm:$0xff]
  %v947 = vld [vmem:[%s3 + $0x210] sm:$0xff]
  %v948 = vld [vmem:[%s3 + $0x218] sm:$0xff]
  %v949 = vld [vmem:[%s3 + $0x220] sm:$0xff]
  %v950 = vld [vmem:[%s3 + $0x228] sm:$0xff]
  %v951 = vld [vmem:[%s3 + $0x230] sm:$0xff]
  %v952 = vld [vmem:[%s3 + $0x238] sm:$0xff]
  %v953 = vld [vmem:[%s3 + $0x240] sm:$0xff]
  %v954 = vld [vmem:[%s3 + $0x248] sm:$0xff]
  %v955 = vld [vmem:[%s3 + $0x250] sm:$0xff]
  %v956 = vld [vmem:[%s3 + $0x258] sm:$0xff]
  %v957 = vld [vmem:[%s3 + $0x260] sm:$0xff]
  %v958 = vld [vmem:[%s3 + $0x268] sm:$0xff]
  %v959 = vld [vmem:[%s3 + $0x270] sm:$0xff]
  %v960 = vld [vmem:[%s3 + $0x278] sm:$0xff]
  %v961 = vld [vmem:[%s3 + $0x280] sm:$0xff]
  %v962 = vld [vmem:[%s3 + $0x288] sm:$0xff]
  %v963 = vld [vmem:[%s3 + $0x290] sm:$0xff]
  %v964 = vld [vmem:[%s3 + $0x298] sm:$0xff]
  %v965 = vld [vmem:[%s3 + $0x2a0] sm:$0xff]
  %v966 = vld [vmem:[%s3 + $0x2a8] sm:$0xff]
  %v967 = vld [vmem:[%s3 + $0x2b0] sm:$0xff]
  %v968 = vld [vmem:[%s3 + $0x2b8] sm:$0xff]
  %v969 = vld [vmem:[%s3 + $0x2c0] sm:$0xff]
  %v970 = vld [vmem:[%s3 + $0x2c8] sm:$0xff]
  %v971 = vld [vmem:[%s3 + $0x2d0] sm:$0xff]
  %v972 = vld [vmem:[%s3 + $0x2d8] sm:$0xff]
  %v973 = vld [vmem:[%s3 + $0x2e0] sm:$0xff]
  %v974 = vld [vmem:[%s3 + $0x2e8] sm:$0xff]
  %v975 = vld [vmem:[%s3 + $0x2f0] sm:$0xff]
  %v976 = vld [vmem:[%s3 + $0x2f8] sm:$0xff]
  %v977 = vld [vmem:[%s3 + $0x300] sm:$0xff]
  %v978 = vld [vmem:[%s3 + $0x308] sm:$0xff]
  %v979 = vld [vmem:[%s3 + $0x310] sm:$0xff]
  %v980 = vld [vmem:[%s3 + $0x318] sm:$0xff]
  %v981 = vld [vmem:[%s3 + $0x320] sm:$0xff]
  %v982 = vld [vmem:[%s3 + $0x328] sm:$0xff]
  %v983 = vld [vmem:[%s3 + $0x330] sm:$0xff]
  %v984 = vld [vmem:[%s3 + $0x338] sm:$0xff]
  %v985 = vld [vmem:[%s3 + $0x340] sm:$0xff]
  %v986 = vld [vmem:[%s3 + $0x348] sm:$0xff]
  %v987 = vld [vmem:[%s3 + $0x350] sm:$0xff]
  %v988 = vld [vmem:[%s3 + $0x358] sm:$0xff]
  %v989 = vld [vmem:[%s3 + $0x360] sm:$0xff]
  %v990 = vld [vmem:[%s3 + $0x368] sm:$0xff]
  %v991 = vld [vmem:[%s3 + $0x370] sm:$0xff]
  %v992 = vld [vmem:[%s3 + $0x378] sm:$0xff]
  %v993 = vld [vmem:[%s3 + $0x380] sm:$0xff]
  %v994 = vld [vmem:[%s3 + $0x388] sm:$0xff]
  %v995 = vld [vmem:[%s3 + $0x390] sm:$0xff]
  %v996 = vld [vmem:[%s3 + $0x398] sm:$0xff]
  %v997 = vld [vmem:[%s3 + $0x3a0] sm:$0xff]
  %v998 = vld [vmem:[%s3 + $0x3a8] sm:$0xff]
  %v999 = vld [vmem:[%s3 + $0x3b0] sm:$0xff]
  %v1000 = vld [vmem:[%s3 + $0x3b8] sm:$0xff]
  %v1001 = vld [vmem:[%s3 + $0x3c0] sm:$0xff]
  %v1002 = vld [vmem:[%s3 + $0x3c8] sm:$0xff]
  %v1003 = vld [vmem:[%s3 + $0x3d0] sm:$0xff]
  %v1004 = vld [vmem:[%s3 + $0x3d8] sm:$0xff]
  %v1005 = vld [vmem:[%s3 + $0x3e0] sm:$0xff]
  %v1006 = vld [vmem:[%s3 + $0x3e8] sm:$0xff]
  %v1007 = vld [vmem:[%s3 + $0x3f0] sm:$0xff]
  %v1008 = vld [vmem:[%s3 + $0x3f8] sm:$0xff]
  %v1009 = vld [vmem:[%s3 + $0x400] sm:$0xff]
  %v1010 = vld [vmem:[%s3 + $0x408] sm:$0xff]
  %v1011 = vld [vmem:[%s3 + $0x410] sm:$0xff]
  %v1012 = vld [vmem:[%s3 + $0x418] sm:$0xff]
  %v1013 = vld [vmem:[%s3 + $0x420] sm:$0xff]
  %v1014 = vld [vmem:[%s3 + $0x428] sm:$0xff]
  %v1015 = vld [vmem:[%s3 + $0x430] sm:$0xff]
  %v1016 = vld [vmem:[%s3 + $0x438] sm:$0xff]
  %v1017 = vld [vmem:[%s3 + $0x440] sm:$0xff]
  %v1018 = vld [vmem:[%s3 + $0x448] sm:$0xff]
  %v1019 = vld [vmem:[%s3 + $0x450] sm:$0xff]
  %v1020 = vld [vmem:[%s3 + $0x458] sm:$0xff]
  %v1021 = vld [vmem:[%s3 + $0x460] sm:$0xff]
  %v1022 = vld [vmem:[%s3 + $0x468] sm:$0xff]
  %v1023 = vld [vmem:[%s3 + $0x470] sm:$0xff]
  %v1024 = vld [vmem:[%s3 + $0x478] sm:$0xff]
  %v1025 = vld [vmem:[%s3 + $0x480] sm:$0xff]
  %v1026 = vld [vmem:[%s3 + $0x488] sm:$0xff]
  %v1027 = vld [vmem:[%s3 + $0x490] sm:$0xff]
  %v1028 = vld [vmem:[%s3 + $0x498] sm:$0xff]
  %v1029 = vld [vmem:[%s3 + $0x4a0] sm:$0xff]
  %v1030 = vld [vmem:[%s3 + $0x4a8] sm:$0xff]
  %v1031 = vld [vmem:[%s3 + $0x4b0] sm:$0xff]
  %v1032 = vld [vmem:[%s3 + $0x4b8] sm:$0xff]
  %v1033 = vld [vmem:[%s3 + $0x4c0] sm:$0xff]
  %v1034 = vld [vmem:[%s3 + $0x4c8] sm:$0xff]
  %v1035 = vld [vmem:[%s3 + $0x4d0] sm:$0xff]
  %v1036 = vld [vmem:[%s3 + $0x4d8] sm:$0xff]
  %v1037 = vld [vmem:[%s3 + $0x4e0] sm:$0xff]
  %v1038 = vld [vmem:[%s3 + $0x4e8] sm:$0xff]
  %v1039 = vld [vmem:[%s3 + $0x4f0] sm:$0xff]
  %v1040 = vld [vmem:[%s3 + $0x4f8] sm:$0xff]
  %v1041 = vld [vmem:[%s3 + $0x500] sm:$0xff]
  %v1042 = vld [vmem:[%s3 + $0x508] sm:$0xff]
  %v1043 = vld [vmem:[%s3 + $0x510] sm:$0xff]
  %v1044 = vld [vmem:[%s3 + $0x518] sm:$0xff]
  %v1045 = vld [vmem:[%s3 + $0x520] sm:$0xff]
  %v1046 = vld [vmem:[%s3 + $0x528] sm:$0xff]
  %v1047 = vld [vmem:[%s3 + $0x530] sm:$0xff]
  %v1048 = vld [vmem:[%s3 + $0x538] sm:$0xff]
  %v1049 = vld [vmem:[%s3 + $0x540] sm:$0xff]
  %v1050 = vld [vmem:[%s3 + $0x548] sm:$0xff]
  %v1051 = vld [vmem:[%s3 + $0x550] sm:$0xff]
  %v1052 = vld [vmem:[%s3 + $0x558] sm:$0xff]
  %v1053 = vld [vmem:[%s3 + $0x560] sm:$0xff]
  %v1054 = vld [vmem:[%s3 + $0x568] sm:$0xff]
  %v1055 = vld [vmem:[%s3 + $0x570] sm:$0xff]
  %v1056 = vld [vmem:[%s3 + $0x578] sm:$0xff]
  %v1057 = vld [vmem:[%s3 + $0x580] sm:$0xff]
  %v1058 = vld [vmem:[%s3 + $0x588] sm:$0xff]
  %v1059 = vld [vmem:[%s3 + $0x590] sm:$0xff]
  %v1060 = vld [vmem:[%s3 + $0x598] sm:$0xff]
  %v1061 = vld [vmem:[%s3 + $0x5a0] sm:$0xff]
  %v1062 = vld [vmem:[%s3 + $0x5a8] sm:$0xff]
  %v1063 = vld [vmem:[%s3 + $0x5b0] sm:$0xff]
  %v1064 = vld [vmem:[%s3 + $0x5b8] sm:$0xff]
  %v1065 = vld [vmem:[%s3 + $0x5c0] sm:$0xff]
  %v1066 = vld [vmem:[%s3 + $0x5c8] sm:$0xff]
  %v1067 = vld [vmem:[%s3 + $0x5d0] sm:$0xff]
  %v1068 = vld [vmem:[%s3 + $0x5d8] sm:$0xff]
  %v1069 = vld [vmem:[%s3 + $0x5e0] sm:$0xff]
  %v1070 = vld [vmem:[%s3 + $0x5e8] sm:$0xff]
  %v1071 = vld [vmem:[%s3 + $0x5f0] sm:$0xff]
  %v1072 = vld [vmem:[%s3 + $0x5f8] sm:$0xff]
  %v1073 = vld [vmem:[%s3 + $0x600] sm:$0xff]
  %v1074 = vld [vmem:[%s3 + $0x608] sm:$0xff]
  %v1075 = vld [vmem:[%s3 + $0x610] sm:$0xff]
  %v1076 = vld [vmem:[%s3 + $0x618] sm:$0xff]
  %v1077 = vld [vmem:[%s3 + $0x620] sm:$0xff]
  %v1078 = vld [vmem:[%s3 + $0x628] sm:$0xff]
  %v1079 = vld [vmem:[%s3 + $0x630] sm:$0xff]
  %v1080 = vld [vmem:[%s3 + $0x638] sm:$0xff]
  %v1081 = vld [vmem:[%s3 + $0x640] sm:$0xff]
  %v1082 = vld [vmem:[%s3 + $0x648] sm:$0xff]
  %v1083 = vld [vmem:[%s3 + $0x650] sm:$0xff]
  %v1084 = vld [vmem:[%s3 + $0x658] sm:$0xff]
  %v1085 = vld [vmem:[%s3 + $0x660] sm:$0xff]
  %v1086 = vld [vmem:[%s3 + $0x668] sm:$0xff]
  %v1087 = vld [vmem:[%s3 + $0x670] sm:$0xff]
  %v1088 = vld [vmem:[%s3 + $0x678] sm:$0xff]
  %v1089 = vld [vmem:[%s3 + $0x680] sm:$0xff]
  %v1090 = vld [vmem:[%s3 + $0x688] sm:$0xff]
  %v1091 = vld [vmem:[%s3 + $0x690] sm:$0xff]
  %v1092 = vld [vmem:[%s3 + $0x698] sm:$0xff]
  %v1093 = vld [vmem:[%s3 + $0x6a0] sm:$0xff]
  %v1094 = vld [vmem:[%s3 + $0x6a8] sm:$0xff]
  %v1095 = vld [vmem:[%s3 + $0x6b0] sm:$0xff]
  %v1096 = vld [vmem:[%s3 + $0x6b8] sm:$0xff]
  %v1097 = vld [vmem:[%s3 + $0x6c0] sm:$0xff]
  %v1098 = vld [vmem:[%s3 + $0x6c8] sm:$0xff]
  %v1099 = vld [vmem:[%s3 + $0x6d0] sm:$0xff]
  %v1100 = vld [vmem:[%s3 + $0x6d8] sm:$0xff]
  %v1101 = vld [vmem:[%s3 + $0x6e0] sm:$0xff]
  %v1102 = vld [vmem:[%s3 + $0x6e8] sm:$0xff]
  %v1103 = vld [vmem:[%s3 + $0x6f0] sm:$0xff]
  %v1104 = vld [vmem:[%s3 + $0x6f8] sm:$0xff]
  %v1105 = vld [vmem:[%s3 + $0x700] sm:$0xff]
  %v1106 = vld [vmem:[%s3 + $0x708] sm:$0xff]
  %v1107 = vld [vmem:[%s3 + $0x710] sm:$0xff]
  %v1108 = vld [vmem:[%s3 + $0x718] sm:$0xff]
  %v1109 = vld [vmem:[%s3 + $0x720] sm:$0xff]
  %v1110 = vld [vmem:[%s3 + $0x728] sm:$0xff]
  %v1111 = vld [vmem:[%s3 + $0x730] sm:$0xff]
  %v1112 = vld [vmem:[%s3 + $0x738] sm:$0xff]
  %v1113 = vld [vmem:[%s3 + $0x740] sm:$0xff]
  %v1114 = vld [vmem:[%s3 + $0x748] sm:$0xff]
  %v1115 = vld [vmem:[%s3 + $0x750] sm:$0xff]
  %v1116 = vld [vmem:[%s3 + $0x758] sm:$0xff]
  %v1117 = vld [vmem:[%s3 + $0x760] sm:$0xff]
  %v1118 = vld [vmem:[%s3 + $0x768] sm:$0xff]
  %v1119 = vld [vmem:[%s3 + $0x770] sm:$0xff]
  %v1120 = vld [vmem:[%s3 + $0x778] sm:$0xff]
  %v1121 = vld [vmem:[%s3 + $0x780] sm:$0xff]
  %v1122 = vld [vmem:[%s3 + $0x788] sm:$0xff]
  %v1123 = vld [vmem:[%s3 + $0x790] sm:$0xff]
  %v1124 = vld [vmem:[%s3 + $0x798] sm:$0xff]
  %v1125 = vld [vmem:[%s3 + $0x7a0] sm:$0xff]
  %v1126 = vld [vmem:[%s3 + $0x7a8] sm:$0xff]
  %v1127 = vld [vmem:[%s3 + $0x7b0] sm:$0xff]
  %v1128 = vld [vmem:[%s3 + $0x7b8] sm:$0xff]
  %v1129 = vld [vmem:[%s3 + $0x7c0] sm:$0xff]
  %v1130 = vld [vmem:[%s3 + $0x7c8] sm:$0xff]
  %v1131 = vld [vmem:[%s3 + $0x7d0] sm:$0xff]
  %v1132 = vld [vmem:[%s3 + $0x7d8] sm:$0xff]
  %v1133 = vld [vmem:[%s3 + $0x7e0] sm:$0xff]
  %v1134 = vld [vmem:[%s3 + $0x7e8] sm:$0xff]
  %v1135 = vld [vmem:[%s3 + $0x7f0] sm:$0xff]
  %v1136 = vld [vmem:[%s3 + $0x7f8] sm:$0xff]
  %v1137 = vld [vmem:[%s4] sm:$0x1]
  %v1139 = vlaneseq
  %v1140 = vshrl.u32 %v1139, 7
  %v1141 = vsub.s32 0, %v1140
  %v1142 = vrot.slane %v1137, %v1141
  %1144 = vmatprep.subr.mxu0 0.0
  %1145 = vmatpush1.msra.mxu0 %v896
  %1146 = vmatprep.subr.mxu0 0.0
  %1147 = vmatpush1.msra.mxu0 %v895
  %1148 = vmatprep.subr.mxu0 0.0
  %1149 = vmatpush1.msra.mxu0 %v894
  %1150 = vmatprep.subr.mxu0 0.0
  %1151 = vmatpush1.msra.mxu0 %v893
  %1152 = vmatprep.subr.mxu0 0.0
  %1153 = vmatpush1.msra.mxu0 %v892
  %1154 = vmatprep.subr.mxu0 0.0
  %1155 = vmatpush1.msra.mxu0 %v891
  %1156 = vmatprep.subr.mxu0 0.0
  %1157 = vmatpush1.msra.mxu0 %v890
  %1158 = vmatprep.subr.mxu0 0.0
  %1159 = vmatpush1.msra.mxu0 %v889
  %1160 = vmatprep.subr.mxu0 0.0
  %1161 = vmatpush1.msra.mxu0 %v888
  %1162 = vmatprep.subr.mxu0 0.0
  %1163 = vmatpush1.msra.mxu0 %v887
  %1164 = vmatprep.subr.mxu0 0.0
  %1165 = vmatpush1.msra.mxu0 %v886
  %1166 = vmatprep.subr.mxu0 0.0
  %1167 = vmatpush1.msra.mxu0 %v885
  %1168 = vmatprep.subr.mxu0 0.0
  %1169 = vmatpush1.msra.mxu0 %v884
  %1170 = vmatprep.subr.mxu0 0.0
  %1171 = vmatpush1.msra.mxu0 %v883
  %1172 = vmatprep.subr.mxu0 0.0
  %1173 = vmatpush1.msra.mxu0 %v882
  %1174 = vmatprep.subr.mxu0 0.0
  %1175 = vmatpush1.msra.mxu0 %v881
  %1176 = vmatprep.subr.mxu0 0.0
  %1177 = vmatpush2.msra.mxu0 %v912
  %1178 = vmatprep.subr.mxu0 0.0
  %1179 = vmatpush2.msra.mxu0 %v911
  %1180 = vmatprep.subr.mxu0 0.0
  %1181 = vmatpush2.msra.mxu0 %v910
  %1182 = vmatprep.subr.mxu0 0.0
  %1183 = vmatpush2.msra.mxu0 %v909
  %1184 = vmatprep.subr.mxu0 0.0
  %1185 = vmatpush2.msra.mxu0 %v908
  %1186 = vmatprep.subr.mxu0 0.0
  %1187 = vmatpush2.msra.mxu0 %v907
  %1188 = vmatprep.subr.mxu0 0.0
  %1189 = vmatpush2.msra.mxu0 %v906
  %1190 = vmatprep.subr.mxu0 0.0
  %1191 = vmatpush2.msra.mxu0 %v905
  %1192 = vmatprep.subr.mxu0 0.0
  %1193 = vmatpush2.msra.mxu0 %v904
  %1194 = vmatprep.subr.mxu0 0.0
  %1195 = vmatpush2.msra.mxu0 %v903
  %1196 = vmatprep.subr.mxu0 0.0
  %1197 = vmatpush2.msra.mxu0 %v902
  %1198 = vmatprep.subr.mxu0 0.0
  %1199 = vmatpush2.msra.mxu0 %v901
  %1200 = vmatprep.subr.mxu0 0.0
  %1201 = vmatpush2.msra.mxu0 %v900
  %1202 = vmatprep.subr.mxu0 0.0
  %1203 = vmatpush2.msra.mxu0 %v899
  %1204 = vmatprep.subr.mxu0 0.0
  %1205 = vmatpush2.msra.mxu0 %v898
  %1206 = vmatprep.subr.mxu0 0.0
  %1207 = vmatpush2.msra.mxu0 %v897
  %1208 = vmatprep.mubr.f32.mxu0 %v866
  %1209 = vmatmul.mubr.f32.gmra.mxu0 %v865
  %v1210 = vpop.f32.mrf.mxu0
  %v1211 = vadd.f32 %v1142, %v1210
  %v1212 = vpop.f32.mrf.mxu0
  %1213 = vdwg.mxu0
  %1214 = vmatprep.subr.mxu0 0.0
  %1215 = vmatpush1.msra.mxu0 %v928
  %1216 = vmatprep.subr.mxu0 0.0
  %1217 = vmatpush1.msra.mxu0 %v927
  %1218 = vmatprep.subr.mxu0 0.0
  %1219 = vmatpush1.msra.mxu0 %v926
  %1220 = vmatprep.subr.mxu0 0.0
  %1221 = vmatpush1.msra.mxu0 %v925
  %1222 = vmatprep.subr.mxu0 0.0
  %1223 = vmatpush1.msra.mxu0 %v924
  %1224 = vmatprep.subr.mxu0 0.0
  %1225 = vmatpush1.msra.mxu0 %v923
  %1226 = vmatprep.subr.mxu0 0.0
  %1227 = vmatpush1.msra.mxu0 %v922
  %1228 = vmatprep.subr.mxu0 0.0
  %1229 = vmatpush1.msra.mxu0 %v921
  %1230 = vmatprep.subr.mxu0 0.0
  %1231 = vmatpush1.msra.mxu0 %v920
  %1232 = vmatprep.subr.mxu0 0.0
  %1233 = vmatpush1.msra.mxu0 %v919
  %1234 = vmatprep.subr.mxu0 0.0
  %1235 = vmatpush1.msra.mxu0 %v918
  %1236 = vmatprep.subr.mxu0 0.0
  %1237 = vmatpush1.msra.mxu0 %v917
  %1238 = vmatprep.subr.mxu0 0.0
  %1239 = vmatpush1.msra.mxu0 %v916
  %1240 = vmatprep.subr.mxu0 0.0
  %1241 = vmatpush1.msra.mxu0 %v915
  %1242 = vmatprep.subr.mxu0 0.0
  %1243 = vmatpush1.msra.mxu0 %v914
  %1244 = vmatprep.subr.mxu0 0.0
  %1245 = vmatpush1.msra.mxu0 %v913
  %1246 = vmatprep.subr.mxu0 0.0
  %1247 = vmatpush2.msra.mxu0 %v944
  %1248 = vmatprep.subr.mxu0 0.0
  %1249 = vmatpush2.msra.mxu0 %v943
  %1250 = vmatprep.subr.mxu0 0.0
  %1251 = vmatpush2.msra.mxu0 %v942
  %1252 = vmatprep.subr.mxu0 0.0
  %1253 = vmatpush2.msra.mxu0 %v941
  %1254 = vmatprep.subr.mxu0 0.0
  %1255 = vmatpush2.msra.mxu0 %v940
  %1256 = vmatprep.subr.mxu0 0.0
  %1257 = vmatpush2.msra.mxu0 %v939
  %1258 = vmatprep.subr.mxu0 0.0
  %1259 = vmatpush2.msra.mxu0 %v938
  %1260 = vmatprep.subr.mxu0 0.0
  %1261 = vmatpush2.msra.mxu0 %v937
  %1262 = vmatprep.subr.mxu0 0.0
  %1263 = vmatpush2.msra.mxu0 %v936
  %1264 = vmatprep.subr.mxu0 0.0
  %1265 = vmatpush2.msra.mxu0 %v935
  %1266 = vmatprep.subr.mxu0 0.0
  %1267 = vmatpush2.msra.mxu0 %v934
  %1268 = vmatprep.subr.mxu0 0.0
  %1269 = vmatpush2.msra.mxu0 %v933
  %1270 = vmatprep.subr.mxu0 0.0
  %1271 = vmatpush2.msra.mxu0 %v932
  %1272 = vmatprep.subr.mxu0 0.0
  %1273 = vmatpush2.msra.mxu0 %v931
  %1274 = vmatprep.subr.mxu0 0.0
  %1275 = vmatpush2.msra.mxu0 %v930
  %1276 = vmatprep.subr.mxu0 0.0
  %1277 = vmatpush2.msra.mxu0 %v929
  %1278 = vmatprep.mubr.f32.mxu0 %v868
  %1279 = vmatmul.mubr.f32.gmra.mxu0 %v867
  %v1280 = vpop.f32.mrf.mxu0
  %v1281 = vadd.f32 %v1211, %v1280
  %v1282 = vpop.f32.mrf.mxu0
  %1283 = vdwg.mxu0
  %1284 = vmatprep.subr.mxu0 0.0
  %1285 = vmatpush1.msra.mxu0 %v960
  %1286 = vmatprep.subr.mxu0 0.0
  %1287 = vmatpush1.msra.mxu0 %v959
  %1288 = vmatprep.subr.mxu0 0.0
  %1289 = vmatpush1.msra.mxu0 %v958
  %1290 = vmatprep.subr.mxu0 0.0
  %1291 = vmatpush1.msra.mxu0 %v957
  %1292 = vmatprep.subr.mxu0 0.0
  %1293 = vmatpush1.msra.mxu0 %v956
  %1294 = vmatprep.subr.mxu0 0.0
  %1295 = vmatpush1.msra.mxu0 %v955
  %1296 = vmatprep.subr.mxu0 0.0
  %1297 = vmatpush1.msra.mxu0 %v954
  %1298 = vmatprep.subr.mxu0 0.0
  %1299 = vmatpush1.msra.mxu0 %v953
  %1300 = vmatprep.subr.mxu0 0.0
  %1301 = vmatpush1.msra.mxu0 %v952
  %1302 = vmatprep.subr.mxu0 0.0
  %1303 = vmatpush1.msra.mxu0 %v951
  %1304 = vmatprep.subr.mxu0 0.0
  %1305 = vmatpush1.msra.mxu0 %v950
  %1306 = vmatprep.subr.mxu0 0.0
  %1307 = vmatpush1.msra.mxu0 %v949
  %1308 = vmatprep.subr.mxu0 0.0
  %1309 = vmatpush1.msra.mxu0 %v948
  %1310 = vmatprep.subr.mxu0 0.0
  %1311 = vmatpush1.msra.mxu0 %v947
  %1312 = vmatprep.subr.mxu0 0.0
  %1313 = vmatpush1.msra.mxu0 %v946
  %1314 = vmatprep.subr.mxu0 0.0
  %1315 = vmatpush1.msra.mxu0 %v945
  %1316 = vmatprep.subr.mxu0 0.0
  %1317 = vmatpush2.msra.mxu0 %v976
  %1318 = vmatprep.subr.mxu0 0.0
  %1319 = vmatpush2.msra.mxu0 %v975
  %1320 = vmatprep.subr.mxu0 0.0
  %1321 = vmatpush2.msra.mxu0 %v974
  %1322 = vmatprep.subr.mxu0 0.0
  %1323 = vmatpush2.msra.mxu0 %v973
  %1324 = vmatprep.subr.mxu0 0.0
  %1325 = vmatpush2.msra.mxu0 %v972
  %1326 = vmatprep.subr.mxu0 0.0
  %1327 = vmatpush2.msra.mxu0 %v971
  %1328 = vmatprep.subr.mxu0 0.0
  %1329 = vmatpush2.msra.mxu0 %v970
  %1330 = vmatprep.subr.mxu0 0.0
  %1331 = vmatpush2.msra.mxu0 %v969
  %1332 = vmatprep.subr.mxu0 0.0
  %1333 = vmatpush2.msra.mxu0 %v968
  %1334 = vmatprep.subr.mxu0 0.0
  %1335 = vmatpush2.msra.mxu0 %v967
  %1336 = vmatprep.subr.mxu0 0.0
  %1337 = vmatpush2.msra.mxu0 %v966
  %1338 = vmatprep.subr.mxu0 0.0
  %1339 = vmatpush2.msra.mxu0 %v965
  %1340 = vmatprep.subr.mxu0 0.0
  %1341 = vmatpush2.msra.mxu0 %v964
  %1342 = vmatprep.subr.mxu0 0.0
  %1343 = vmatpush2.msra.mxu0 %v963
  %1344 = vmatprep.subr.mxu0 0.0
  %1345 = vmatpush2.msra.mxu0 %v962
  %1346 = vmatprep.subr.mxu0 0.0
  %1347 = vmatpush2.msra.mxu0 %v961
  %1348 = vmatprep.mubr.f32.mxu0 %v870
  %1349 = vmatmul.mubr.f32.gmra.mxu0 %v869
  %v1350 = vpop.f32.mrf.mxu0
  %v1351 = vadd.f32 %v1281, %v1350
  %v1352 = vpop.f32.mrf.mxu0
  %1353 = vdwg.mxu0
  %1354 = vmatprep.subr.mxu0 0.0
  %1355 = vmatpush1.msra.mxu0 %v992
  %1356 = vmatprep.subr.mxu0 0.0
  %1357 = vmatpush1.msra.mxu0 %v991
  %1358 = vmatprep.subr.mxu0 0.0
  %1359 = vmatpush1.msra.mxu0 %v990
  %1360 = vmatprep.subr.mxu0 0.0
  %1361 = vmatpush1.msra.mxu0 %v989
  %1362 = vmatprep.subr.mxu0 0.0
  %1363 = vmatpush1.msra.mxu0 %v988
  %1364 = vmatprep.subr.mxu0 0.0
  %1365 = vmatpush1.msra.mxu0 %v987
  %1366 = vmatprep.subr.mxu0 0.0
  %1367 = vmatpush1.msra.mxu0 %v986
  %1368 = vmatprep.subr.mxu0 0.0
  %1369 = vmatpush1.msra.mxu0 %v985
  %1370 = vmatprep.subr.mxu0 0.0
  %1371 = vmatpush1.msra.mxu0 %v984
  %1372 = vmatprep.subr.mxu0 0.0
  %1373 = vmatpush1.msra.mxu0 %v983
  %1374 = vmatprep.subr.mxu0 0.0
  %1375 = vmatpush1.msra.mxu0 %v982
  %1376 = vmatprep.subr.mxu0 0.0
  %1377 = vmatpush1.msra.mxu0 %v981
  %1378 = vmatprep.subr.mxu0 0.0
  %1379 = vmatpush1.msra.mxu0 %v980
  %1380 = vmatprep.subr.mxu0 0.0
  %1381 = vmatpush1.msra.mxu0 %v979
  %1382 = vmatprep.subr.mxu0 0.0
  %1383 = vmatpush1.msra.mxu0 %v978
  %1384 = vmatprep.subr.mxu0 0.0
  %1385 = vmatpush1.msra.mxu0 %v977
  %1386 = vmatprep.subr.mxu0 0.0
  %1387 = vmatpush2.msra.mxu0 %v1008
  %1388 = vmatprep.subr.mxu0 0.0
  %1389 = vmatpush2.msra.mxu0 %v1007
  %1390 = vmatprep.subr.mxu0 0.0
  %1391 = vmatpush2.msra.mxu0 %v1006
  %1392 = vmatprep.subr.mxu0 0.0
  %1393 = vmatpush2.msra.mxu0 %v1005
  %1394 = vmatprep.subr.mxu0 0.0
  %1395 = vmatpush2.msra.mxu0 %v1004
  %1396 = vmatprep.subr.mxu0 0.0
  %1397 = vmatpush2.msra.mxu0 %v1003
  %1398 = vmatprep.subr.mxu0 0.0
  %1399 = vmatpush2.msra.mxu0 %v1002
  %1400 = vmatprep.subr.mxu0 0.0
  %1401 = vmatpush2.msra.mxu0 %v1001
  %1402 = vmatprep.subr.mxu0 0.0
  %1403 = vmatpush2.msra.mxu0 %v1000
  %1404 = vmatprep.subr.mxu0 0.0
  %1405 = vmatpush2.msra.mxu0 %v999
  %1406 = vmatprep.subr.mxu0 0.0
  %1407 = vmatpush2.msra.mxu0 %v998
  %1408 = vmatprep.subr.mxu0 0.0
  %1409 = vmatpush2.msra.mxu0 %v997
  %1410 = vmatprep.subr.mxu0 0.0
  %1411 = vmatpush2.msra.mxu0 %v996
  %1412 = vmatprep.subr.mxu0 0.0
  %1413 = vmatpush2.msra.mxu0 %v995
  %1414 = vmatprep.subr.mxu0 0.0
  %1415 = vmatpush2.msra.mxu0 %v994
  %1416 = vmatprep.subr.mxu0 0.0
  %1417 = vmatpush2.msra.mxu0 %v993
  %1418 = vmatprep.mubr.f32.mxu0 %v872
  %1419 = vmatmul.mubr.f32.gmra.mxu0 %v871
  %v1420 = vpop.f32.mrf.mxu0
  %v1421 = vadd.f32 %v1351, %v1420
  %v1422 = vpop.f32.mrf.mxu0
  %1423 = vdwg.mxu0
  %1424 = vmatprep.subr.mxu0 0.0
  %1425 = vmatpush1.msra.mxu0 %v1024
  %1426 = vmatprep.subr.mxu0 0.0
  %1427 = vmatpush1.msra.mxu0 %v1023
  %1428 = vmatprep.subr.mxu0 0.0
  %1429 = vmatpush1.msra.mxu0 %v1022
  %1430 = vmatprep.subr.mxu0 0.0
  %1431 = vmatpush1.msra.mxu0 %v1021
  %1432 = vmatprep.subr.mxu0 0.0
  %1433 = vmatpush1.msra.mxu0 %v1020
  %1434 = vmatprep.subr.mxu0 0.0
  %1435 = vmatpush1.msra.mxu0 %v1019
  %1436 = vmatprep.subr.mxu0 0.0
  %1437 = vmatpush1.msra.mxu0 %v1018
  %1438 = vmatprep.subr.mxu0 0.0
  %1439 = vmatpush1.msra.mxu0 %v1017
  %1440 = vmatprep.subr.mxu0 0.0
  %1441 = vmatpush1.msra.mxu0 %v1016
  %1442 = vmatprep.subr.mxu0 0.0
  %1443 = vmatpush1.msra.mxu0 %v1015
  %1444 = vmatprep.subr.mxu0 0.0
  %1445 = vmatpush1.msra.mxu0 %v1014
  %1446 = vmatprep.subr.mxu0 0.0
  %1447 = vmatpush1.msra.mxu0 %v1013
  %1448 = vmatprep.subr.mxu0 0.0
  %1449 = vmatpush1.msra.mxu0 %v1012
  %1450 = vmatprep.subr.mxu0 0.0
  %1451 = vmatpush1.msra.mxu0 %v1011
  %1452 = vmatprep.subr.mxu0 0.0
  %1453 = vmatpush1.msra.mxu0 %v1010
  %1454 = vmatprep.subr.mxu0 0.0
  %1455 = vmatpush1.msra.mxu0 %v1009
  %1456 = vmatprep.subr.mxu0 0.0
  %1457 = vmatpush2.msra.mxu0 %v1040
  %1458 = vmatprep.subr.mxu0 0.0
  %1459 = vmatpush2.msra.mxu0 %v1039
  %1460 = vmatprep.subr.mxu0 0.0
  %1461 = vmatpush2.msra.mxu0 %v1038
  %1462 = vmatprep.subr.mxu0 0.0
  %1463 = vmatpush2.msra.mxu0 %v1037
  %1464 = vmatprep.subr.mxu0 0.0
  %1465 = vmatpush2.msra.mxu0 %v1036
  %1466 = vmatprep.subr.mxu0 0.0
  %1467 = vmatpush2.msra.mxu0 %v1035
  %1468 = vmatprep.subr.mxu0 0.0
  %1469 = vmatpush2.msra.mxu0 %v1034
  %1470 = vmatprep.subr.mxu0 0.0
  %1471 = vmatpush2.msra.mxu0 %v1033
  %1472 = vmatprep.subr.mxu0 0.0
  %1473 = vmatpush2.msra.mxu0 %v1032
  %1474 = vmatprep.subr.mxu0 0.0
  %1475 = vmatpush2.msra.mxu0 %v1031
  %1476 = vmatprep.subr.mxu0 0.0
  %1477 = vmatpush2.msra.mxu0 %v1030
  %1478 = vmatprep.subr.mxu0 0.0
  %1479 = vmatpush2.msra.mxu0 %v1029
  %1480 = vmatprep.subr.mxu0 0.0
  %1481 = vmatpush2.msra.mxu0 %v1028
  %1482 = vmatprep.subr.mxu0 0.0
  %1483 = vmatpush2.msra.mxu0 %v1027
  %1484 = vmatprep.subr.mxu0 0.0
  %1485 = vmatpush2.msra.mxu0 %v1026
  %1486 = vmatprep.subr.mxu0 0.0
  %1487 = vmatpush2.msra.mxu0 %v1025
  %1488 = vmatprep.mubr.f32.mxu0 %v874
  %1489 = vmatmul.mubr.f32.gmra.mxu0 %v873
  %v1490 = vpop.f32.mrf.mxu0
  %v1491 = vadd.f32 %v1421, %v1490
  %v1492 = vpop.f32.mrf.mxu0
  %1493 = vdwg.mxu0
  %1494 = vmatprep.subr.mxu0 0.0
  %1495 = vmatpush1.msra.mxu0 %v1056
  %1496 = vmatprep.subr.mxu0 0.0
  %1497 = vmatpush1.msra.mxu0 %v1055
  %1498 = vmatprep.subr.mxu0 0.0
  %1499 = vmatpush1.msra.mxu0 %v1054
  %1500 = vmatprep.subr.mxu0 0.0
  %1501 = vmatpush1.msra.mxu0 %v1053
  %1502 = vmatprep.subr.mxu0 0.0
  %1503 = vmatpush1.msra.mxu0 %v1052
  %1504 = vmatprep.subr.mxu0 0.0
  %1505 = vmatpush1.msra.mxu0 %v1051
  %1506 = vmatprep.subr.mxu0 0.0
  %1507 = vmatpush1.msra.mxu0 %v1050
  %1508 = vmatprep.subr.mxu0 0.0
  %1509 = vmatpush1.msra.mxu0 %v1049
  %1510 = vmatprep.subr.mxu0 0.0
  %1511 = vmatpush1.msra.mxu0 %v1048
  %1512 = vmatprep.subr.mxu0 0.0
  %1513 = vmatpush1.msra.mxu0 %v1047
  %1514 = vmatprep.subr.mxu0 0.0
  %1515 = vmatpush1.msra.mxu0 %v1046
  %1516 = vmatprep.subr.mxu0 0.0
  %1517 = vmatpush1.msra.mxu0 %v1045
  %1518 = vmatprep.subr.mxu0 0.0
  %1519 = vmatpush1.msra.mxu0 %v1044
  %1520 = vmatprep.subr.mxu0 0.0
  %1521 = vmatpush1.msra.mxu0 %v1043
  %1522 = vmatprep.subr.mxu0 0.0
  %1523 = vmatpush1.msra.mxu0 %v1042
  %1524 = vmatprep.subr.mxu0 0.0
  %1525 = vmatpush1.msra.mxu0 %v1041
  %1526 = vmatprep.subr.mxu0 0.0
  %1527 = vmatpush2.msra.mxu0 %v1072
  %1528 = vmatprep.subr.mxu0 0.0
  %1529 = vmatpush2.msra.mxu0 %v1071
  %1530 = vmatprep.subr.mxu0 0.0
  %1531 = vmatpush2.msra.mxu0 %v1070
  %1532 = vmatprep.subr.mxu0 0.0
  %1533 = vmatpush2.msra.mxu0 %v1069
  %1534 = vmatprep.subr.mxu0 0.0
  %1535 = vmatpush2.msra.mxu0 %v1068
  %1536 = vmatprep.subr.mxu0 0.0
  %1537 = vmatpush2.msra.mxu0 %v1067
  %1538 = vmatprep.subr.mxu0 0.0
  %1539 = vmatpush2.msra.mxu0 %v1066
  %1540 = vmatprep.subr.mxu0 0.0
  %1541 = vmatpush2.msra.mxu0 %v1065
  %1542 = vmatprep.subr.mxu0 0.0
  %1543 = vmatpush2.msra.mxu0 %v1064
  %1544 = vmatprep.subr.mxu0 0.0
  %1545 = vmatpush2.msra.mxu0 %v1063
  %1546 = vmatprep.subr.mxu0 0.0
  %1547 = vmatpush2.msra.mxu0 %v1062
  %1548 = vmatprep.subr.mxu0 0.0
  %1549 = vmatpush2.msra.mxu0 %v1061
  %1550 = vmatprep.subr.mxu0 0.0
  %1551 = vmatpush2.msra.mxu0 %v1060
  %1552 = vmatprep.subr.mxu0 0.0
  %1553 = vmatpush2.msra.mxu0 %v1059
  %1554 = vmatprep.subr.mxu0 0.0
  %1555 = vmatpush2.msra.mxu0 %v1058
  %1556 = vmatprep.subr.mxu0 0.0
  %1557 = vmatpush2.msra.mxu0 %v1057
  %1558 = vmatprep.mubr.f32.mxu0 %v876
  %1559 = vmatmul.mubr.f32.gmra.mxu0 %v875
  %v1560 = vpop.f32.mrf.mxu0
  %v1561 = vadd.f32 %v1491, %v1560
  %v1562 = vpop.f32.mrf.mxu0
  %1563 = vdwg.mxu0
  %1564 = vmatprep.subr.mxu0 0.0
  %1565 = vmatpush1.msra.mxu0 %v1088
  %1566 = vmatprep.subr.mxu0 0.0
  %1567 = vmatpush1.msra.mxu0 %v1087
  %1568 = vmatprep.subr.mxu0 0.0
  %1569 = vmatpush1.msra.mxu0 %v1086
  %1570 = vmatprep.subr.mxu0 0.0
  %1571 = vmatpush1.msra.mxu0 %v1085
  %1572 = vmatprep.subr.mxu0 0.0
  %1573 = vmatpush1.msra.mxu0 %v1084
  %1574 = vmatprep.subr.mxu0 0.0
  %1575 = vmatpush1.msra.mxu0 %v1083
  %1576 = vmatprep.subr.mxu0 0.0
  %1577 = vmatpush1.msra.mxu0 %v1082
  %1578 = vmatprep.subr.mxu0 0.0
  %1579 = vmatpush1.msra.mxu0 %v1081
  %1580 = vmatprep.subr.mxu0 0.0
  %1581 = vmatpush1.msra.mxu0 %v1080
  %1582 = vmatprep.subr.mxu0 0.0
  %1583 = vmatpush1.msra.mxu0 %v1079
  %1584 = vmatprep.subr.mxu0 0.0
  %1585 = vmatpush1.msra.mxu0 %v1078
  %1586 = vmatprep.subr.mxu0 0.0
  %1587 = vmatpush1.msra.mxu0 %v1077
  %1588 = vmatprep.subr.mxu0 0.0
  %1589 = vmatpush1.msra.mxu0 %v1076
  %1590 = vmatprep.subr.mxu0 0.0
  %1591 = vmatpush1.msra.mxu0 %v1075
  %1592 = vmatprep.subr.mxu0 0.0
  %1593 = vmatpush1.msra.mxu0 %v1074
  %1594 = vmatprep.subr.mxu0 0.0
  %1595 = vmatpush1.msra.mxu0 %v1073
  %1596 = vmatprep.subr.mxu0 0.0
  %1597 = vmatpush2.msra.mxu0 %v1104
  %1598 = vmatprep.subr.mxu0 0.0
  %1599 = vmatpush2.msra.mxu0 %v1103
  %1600 = vmatprep.subr.mxu0 0.0
  %1601 = vmatpush2.msra.mxu0 %v1102
  %1602 = vmatprep.subr.mxu0 0.0
  %1603 = vmatpush2.msra.mxu0 %v1101
  %1604 = vmatprep.subr.mxu0 0.0
  %1605 = vmatpush2.msra.mxu0 %v1100
  %1606 = vmatprep.subr.mxu0 0.0
  %1607 = vmatpush2.msra.mxu0 %v1099
  %1608 = vmatprep.subr.mxu0 0.0
  %1609 = vmatpush2.msra.mxu0 %v1098
  %1610 = vmatprep.subr.mxu0 0.0
  %1611 = vmatpush2.msra.mxu0 %v1097
  %1612 = vmatprep.subr.mxu0 0.0
  %1613 = vmatpush2.msra.mxu0 %v1096
  %1614 = vmatprep.subr.mxu0 0.0
  %1615 = vmatpush2.msra.mxu0 %v1095
  %1616 = vmatprep.subr.mxu0 0.0
  %1617 = vmatpush2.msra.mxu0 %v1094
  %1618 = vmatprep.subr.mxu0 0.0
  %1619 = vmatpush2.msra.mxu0 %v1093
  %1620 = vmatprep.subr.mxu0 0.0
  %1621 = vmatpush2.msra.mxu0 %v1092
  %1622 = vmatprep.subr.mxu0 0.0
  %1623 = vmatpush2.msra.mxu0 %v1091
  %1624 = vmatprep.subr.mxu0 0.0
  %1625 = vmatpush2.msra.mxu0 %v1090
  %1626 = vmatprep.subr.mxu0 0.0
  %1627 = vmatpush2.msra.mxu0 %v1089
  %1628 = vmatprep.mubr.f32.mxu0 %v878
  %1629 = vmatmul.mubr.f32.gmra.mxu0 %v877
  %v1630 = vpop.f32.mrf.mxu0
  %v1631 = vadd.f32 %v1561, %v1630
  %v1632 = vpop.f32.mrf.mxu0
  %1633 = vdwg.mxu0
  %1634 = vmatprep.subr.mxu0 0.0
  %1635 = vmatpush1.msra.mxu0 %v1120
  %1636 = vmatprep.subr.mxu0 0.0
  %1637 = vmatpush1.msra.mxu0 %v1119
  %1638 = vmatprep.subr.mxu0 0.0
  %1639 = vmatpush1.msra.mxu0 %v1118
  %1640 = vmatprep.subr.mxu0 0.0
  %1641 = vmatpush1.msra.mxu0 %v1117
  %1642 = vmatprep.subr.mxu0 0.0
  %1643 = vmatpush1.msra.mxu0 %v1116
  %1644 = vmatprep.subr.mxu0 0.0
  %1645 = vmatpush1.msra.mxu0 %v1115
  %1646 = vmatprep.subr.mxu0 0.0
  %1647 = vmatpush1.msra.mxu0 %v1114
  %1648 = vmatprep.subr.mxu0 0.0
  %1649 = vmatpush1.msra.mxu0 %v1113
  %1650 = vmatprep.subr.mxu0 0.0
  %1651 = vmatpush1.msra.mxu0 %v1112
  %1652 = vmatprep.subr.mxu0 0.0
  %1653 = vmatpush1.msra.mxu0 %v1111
  %1654 = vmatprep.subr.mxu0 0.0
  %1655 = vmatpush1.msra.mxu0 %v1110
  %1656 = vmatprep.subr.mxu0 0.0
  %1657 = vmatpush1.msra.mxu0 %v1109
  %1658 = vmatprep.subr.mxu0 0.0
  %1659 = vmatpush1.msra.mxu0 %v1108
  %1660 = vmatprep.subr.mxu0 0.0
  %1661 = vmatpush1.msra.mxu0 %v1107
  %1662 = vmatprep.subr.mxu0 0.0
  %1663 = vmatpush1.msra.mxu0 %v1106
  %1664 = vmatprep.subr.mxu0 0.0
  %1665 = vmatpush1.msra.mxu0 %v1105
  %1666 = vmatprep.subr.mxu0 0.0
  %1667 = vmatpush2.msra.mxu0 %v1136
  %1668 = vmatprep.subr.mxu0 0.0
  %1669 = vmatpush2.msra.mxu0 %v1135
  %1670 = vmatprep.subr.mxu0 0.0
  %1671 = vmatpush2.msra.mxu0 %v1134
  %1672 = vmatprep.subr.mxu0 0.0
  %1673 = vmatpush2.msra.mxu0 %v1133
  %1674 = vmatprep.subr.mxu0 0.0
  %1675 = vmatpush2.msra.mxu0 %v1132
  %1676 = vmatprep.subr.mxu0 0.0
  %1677 = vmatpush2.msra.mxu0 %v1131
  %1678 = vmatprep.subr.mxu0 0.0
  %1679 = vmatpush2.msra.mxu0 %v1130
  %1680 = vmatprep.subr.mxu0 0.0
  %1681 = vmatpush2.msra.mxu0 %v1129
  %1682 = vmatprep.subr.mxu0 0.0
  %1683 = vmatpush2.msra.mxu0 %v1128
  %1684 = vmatprep.subr.mxu0 0.0
  %1685 = vmatpush2.msra.mxu0 %v1127
  %1686 = vmatprep.subr.mxu0 0.0
  %1687 = vmatpush2.msra.mxu0 %v1126
  %1688 = vmatprep.subr.mxu0 0.0
  %1689 = vmatpush2.msra.mxu0 %v1125
  %1690 = vmatprep.subr.mxu0 0.0
  %1691 = vmatpush2.msra.mxu0 %v1124
  %1692 = vmatprep.subr.mxu0 0.0
  %1693 = vmatpush2.msra.mxu0 %v1123
  %1694 = vmatprep.subr.mxu0 0.0
  %1695 = vmatpush2.msra.mxu0 %v1122
  %1696 = vmatprep.subr.mxu0 0.0
  %1697 = vmatpush2.msra.mxu0 %v1121
  %1698 = vmatprep.mubr.f32.mxu0 %v880
  %1699 = vmatmul.mubr.f32.gmra.mxu0 %v879
  %v1700 = vpop.f32.mrf.mxu0
  %v1701 = vadd.f32 %v1631, %v1700
  %v1702 = vpop.f32.mrf.mxu0
  %1703 = vdwg.mxu0
  %v1704 = vld [vmem:[%s5] sm:$0xff]
  %v1705 = vld [vmem:[%s5 + $0x8] sm:$0xf]
  %v1706 = vld [vmem:[%s6] sm:$0x1]
  %v1708 = vlaneseq
  %v1709 = vshrl.u32 %v1708, 7
  %v1710 = vsub.s32 0, %v1709
  %v1711 = vrot.slane %v1706, %v1710
  %v1714 = vsel %vm80, %v64, 0
  %v1717 = vsel %vm80, %v65, 0
  %v1720 = vsel %vm80, %v66, 0
  %v1723 = vsel %vm80, %v67, 0
  %v1726 = vsel %vm80, %v68, 0
  %v1729 = vsel %vm80, %v69, 0
  %v1732 = vsel %vm80, %v70, 0
  %v1735 = vsel %vm80, %v71, 0
  %v1738 = vsel %vm80, %v72, 0
  %v1741 = vsel %vm80, %v73, 0
  %v1744 = vsel %vm80, %v74, 0
  %v1747 = vsel %vm80, %v75, 0
  %v1750 = vsel %vm80, %v76, 0
  %v1753 = vsel %vm80, %v77, 0
  %v1756 = vsel %vm80, %v78, 0
  %v1759 = vsel %vm80, %v79, 0
  %v1762 = vsel %vm248, %v1705, 0
  %1764 = vmatprep.subr.mxu0 0.0
  %1765 = vmatpush1.msra.mxu0 0.0
  %1766 = vmatprep.subr.mxu0 0.0
  %1767 = vmatpush1.msra.mxu0 0.0
  %1768 = vmatprep.subr.mxu0 0.0
  %1769 = vmatpush1.msra.mxu0 0.0
  %1770 = vmatprep.subr.mxu0 0.0
  %1771 = vmatpush1.msra.mxu0 0.0
  %1772 = vmatprep.subr.mxu0 0.0
  %1773 = vmatpush1.msra.mxu0 0.0
  %1774 = vmatprep.subr.mxu0 0.0
  %1775 = vmatpush1.msra.mxu0 0.0
  %1776 = vmatprep.subr.mxu0 0.0
  %1777 = vmatpush1.msra.mxu0 0.0
  %1778 = vmatprep.subr.mxu0 0.0
  %1779 = vmatpush1.msra.mxu0 0.0
  %1780 = vmatprep.subr.mxu0 0.0
  %1781 = vmatpush1.msra.mxu0 0.0
  %1782 = vmatprep.subr.mxu0 0.0
  %1783 = vmatpush1.msra.mxu0 0.0
  %1784 = vmatprep.subr.mxu0 0.0
  %1785 = vmatpush1.msra.mxu0 0.0
  %1786 = vmatprep.subr.mxu0 0.0
  %1787 = vmatpush1.msra.mxu0 0.0
  %1788 = vmatprep.subr.mxu0 0.0
  %1789 = vmatpush1.msra.mxu0 0.0
  %1790 = vmatprep.subr.mxu0 0.0
  %1791 = vmatpush1.msra.mxu0 0.0
  %1792 = vmatprep.subr.mxu0 0.0
  %1793 = vmatpush1.msra.mxu0 %v1762
  %1794 = vmatprep.subr.mxu0 0.0
  %1795 = vmatpush1.msra.mxu0 %v1704
  %1796 = vmatprep.subr.mxu0 0.0
  %1797 = vmatpush2.msra.mxu0 0.0
  %1798 = vmatprep.subr.mxu0 0.0
  %1799 = vmatpush2.msra.mxu0 0.0
  %1800 = vmatprep.subr.mxu0 0.0
  %1801 = vmatpush2.msra.mxu0 0.0
  %1802 = vmatprep.subr.mxu0 0.0
  %1803 = vmatpush2.msra.mxu0 0.0
  %1804 = vmatprep.subr.mxu0 0.0
  %1805 = vmatpush2.msra.mxu0 0.0
  %1806 = vmatprep.subr.mxu0 0.0
  %1807 = vmatpush2.msra.mxu0 0.0
  %1808 = vmatprep.subr.mxu0 0.0
  %1809 = vmatpush2.msra.mxu0 0.0
  %1810 = vmatprep.subr.mxu0 0.0
  %1811 = vmatpush2.msra.mxu0 0.0
  %1812 = vmatprep.subr.mxu0 0.0
  %1813 = vmatpush2.msra.mxu0 0.0
  %1814 = vmatprep.subr.mxu0 0.0
  %1815 = vmatpush2.msra.mxu0 0.0
  %1816 = vmatprep.subr.mxu0 0.0
  %1817 = vmatpush2.msra.mxu0 0.0
  %1818 = vmatprep.subr.mxu0 0.0
  %1819 = vmatpush2.msra.mxu0 0.0
  %1820 = vmatprep.subr.mxu0 0.0
  %1821 = vmatpush2.msra.mxu0 0.0
  %1822 = vmatprep.subr.mxu0 0.0
  %1823 = vmatpush2.msra.mxu0 0.0
  %1824 = vmatprep.subr.mxu0 0.0
  %1825 = vmatpush2.msra.mxu0 0.0
  %1826 = vmatprep.subr.mxu0 0.0
  %1827 = vmatpush2.msra.mxu0 0.0
  %1828 = vmatprep.mubr.f32.mxu0 0.0
  %1829 = vmatmul.mubr.f32.gmra.mxu0 %v1714
  %v1830 = vpop.f32.mrf.mxu0
  %v1831 = vadd.f32 %v1711, %v1830
  %v1832 = vpop.f32.mrf.mxu0
  %1833 = vmatprep.mubr.f32.mxu0 0.0
  %1834 = vmatmul.mubr.f32.gmra.mxu0 %v1717
  %v1835 = vpop.f32.mrf.mxu0
  %v1836 = vadd.f32 %v1711, %v1835
  %v1837 = vpop.f32.mrf.mxu0
  %1838 = vmatprep.mubr.f32.mxu0 0.0
  %1839 = vmatmul.mubr.f32.gmra.mxu0 %v1720
  %v1840 = vpop.f32.mrf.mxu0
  %v1841 = vadd.f32 %v1711, %v1840
  %v1842 = vpop.f32.mrf.mxu0
  %1843 = vmatprep.mubr.f32.mxu0 0.0
  %1844 = vmatmul.mubr.f32.gmra.mxu0 %v1723
  %v1845 = vpop.f32.mrf.mxu0
  %v1846 = vadd.f32 %v1711, %v1845
  %v1847 = vpop.f32.mrf.mxu0
  %1848 = vmatprep.mubr.f32.mxu0 0.0
  %1849 = vmatmul.mubr.f32.gmra.mxu0 %v1726
  %v1850 = vpop.f32.mrf.mxu0
  %v1851 = vadd.f32 %v1711, %v1850
  %v1852 = vpop.f32.mrf.mxu0
  %1853 = vmatprep.mubr.f32.mxu0 0.0
  %1854 = vmatmul.mubr.f32.gmra.mxu0 %v1729
  %v1855 = vpop.f32.mrf.mxu0
  %v1856 = vadd.f32 %v1711, %v1855
  %v1857 = vpop.f32.mrf.mxu0
  %1858 = vmatprep.mubr.f32.mxu0 0.0
  %1859 = vmatmul.mubr.f32.gmra.mxu0 %v1732
  %v1860 = vpop.f32.mrf.mxu0
  %v1861 = vadd.f32 %v1711, %v1860
  %v1862 = vpop.f32.mrf.mxu0
  %1863 = vmatprep.mubr.f32.mxu0 0.0
  %1864 = vmatmul.mubr.f32.gmra.mxu0 %v1735
  %v1865 = vpop.f32.mrf.mxu0
  %v1866 = vadd.f32 %v1711, %v1865
  %v1867 = vpop.f32.mrf.mxu0
  %1868 = vmatprep.mubr.f32.mxu0 0.0
  %1869 = vmatmul.mubr.f32.gmra.mxu0 %v1738
  %v1870 = vpop.f32.mrf.mxu0
  %v1871 = vadd.f32 %v1711, %v1870
  %v1872 = vpop.f32.mrf.mxu0
  %1873 = vmatprep.mubr.f32.mxu0 0.0
  %1874 = vmatmul.mubr.f32.gmra.mxu0 %v1741
  %v1875 = vpop.f32.mrf.mxu0
  %v1876 = vadd.f32 %v1711, %v1875
  %v1877 = vpop.f32.mrf.mxu0
  %1878 = vmatprep.mubr.f32.mxu0 0.0
  %1879 = vmatmul.mubr.f32.gmra.mxu0 %v1744
  %v1880 = vpop.f32.mrf.mxu0
  %v1881 = vadd.f32 %v1711, %v1880
  %v1882 = vpop.f32.mrf.mxu0
  %1883 = vmatprep.mubr.f32.mxu0 0.0
  %1884 = vmatmul.mubr.f32.gmra.mxu0 %v1747
  %v1885 = vpop.f32.mrf.mxu0
  %v1886 = vadd.f32 %v1711, %v1885
  %v1887 = vpop.f32.mrf.mxu0
  %1888 = vmatprep.mubr.f32.mxu0 0.0
  %1889 = vmatmul.mubr.f32.gmra.mxu0 %v1750
  %v1890 = vpop.f32.mrf.mxu0
  %v1891 = vadd.f32 %v1711, %v1890
  %v1892 = vpop.f32.mrf.mxu0
  %1893 = vmatprep.mubr.f32.mxu0 0.0
  %1894 = vmatmul.mubr.f32.gmra.mxu0 %v1753
  %v1895 = vpop.f32.mrf.mxu0
  %v1896 = vadd.f32 %v1711, %v1895
  %v1897 = vpop.f32.mrf.mxu0
  %1898 = vmatprep.mubr.f32.mxu0 0.0
  %1899 = vmatmul.mubr.f32.gmra.mxu0 %v1756
  %v1900 = vpop.f32.mrf.mxu0
  %v1901 = vadd.f32 %v1711, %v1900
  %v1902 = vpop.f32.mrf.mxu0
  %1903 = vmatprep.mubr.f32.mxu0 0.0
  %1904 = vmatmul.mubr.f32.gmra.mxu0 %v1759
  %v1905 = vpop.f32.mrf.mxu0
  %v1906 = vadd.f32 %v1711, %v1905
  %v1907 = vpop.f32.mrf.mxu0
  %1908 = vdwg.mxu0
  %v1909 = vld [vmem:[%s9] sm:$0xff]
  %v1910 = vld [vmem:[%s9 + $0x8] sm:$0xff]
  %v1911 = vld [vmem:[%s9 + $0x10] sm:$0xff]
  %v1912 = vld [vmem:[%s9 + $0x18] sm:$0xff]
  %v1913 = vld [vmem:[%s10] sm:$0x1]
  %v1915 = vlaneseq
  %v1916 = vshrl.u32 %v1915, 7
  %v1917 = vsub.s32 0, %v1916
  %v1918 = vrot.slane %v1913, %v1917
  %vm1920 = vcmask 261120
  %v1922 = vsel %vm1920, %v1701, 0
  %1924 = vmatprep.subr.mxu0 0.0
  %1925 = vmatpush1.msra.mxu0 0.0
  %1926 = vmatprep.subr.mxu0 0.0
  %1927 = vmatpush1.msra.mxu0 0.0
  %1928 = vmatprep.subr.mxu0 0.0
  %1929 = vmatpush1.msra.mxu0 0.0
  %1930 = vmatprep.subr.mxu0 0.0
  %1931 = vmatpush1.msra.mxu0 0.0
  %1932 = vmatprep.subr.mxu0 0.0
  %1933 = vmatpush1.msra.mxu0 0.0
  %1934 = vmatprep.subr.mxu0 0.0
  %1935 = vmatpush1.msra.mxu0 0.0
  %1936 = vmatprep.subr.mxu0 0.0
  %1937 = vmatpush1.msra.mxu0 0.0
  %1938 = vmatprep.subr.mxu0 0.0
  %1939 = vmatpush1.msra.mxu0 0.0
  %1940 = vmatprep.subr.mxu0 0.0
  %1941 = vmatpush1.msra.mxu0 0.0
  %1942 = vmatprep.subr.mxu0 0.0
  %1943 = vmatpush1.msra.mxu0 0.0
  %1944 = vmatprep.subr.mxu0 0.0
  %1945 = vmatpush1.msra.mxu0 0.0
  %1946 = vmatprep.subr.mxu0 0.0
  %1947 = vmatpush1.msra.mxu0 0.0
  %1948 = vmatprep.subr.mxu0 0.0
  %1949 = vmatpush1.msra.mxu0 %v1912
  %1950 = vmatprep.subr.mxu0 0.0
  %1951 = vmatpush1.msra.mxu0 %v1911
  %1952 = vmatprep.subr.mxu0 0.0
  %1953 = vmatpush1.msra.mxu0 %v1910
  %1954 = vmatprep.subr.mxu0 0.0
  %1955 = vmatpush1.msra.mxu0 %v1909
  %1956 = vmatprep.subr.mxu0 0.0
  %1957 = vmatpush2.msra.mxu0 0.0
  %1958 = vmatprep.subr.mxu0 0.0
  %1959 = vmatpush2.msra.mxu0 0.0
  %1960 = vmatprep.subr.mxu0 0.0
  %1961 = vmatpush2.msra.mxu0 0.0
  %1962 = vmatprep.subr.mxu0 0.0
  %1963 = vmatpush2.msra.mxu0 0.0
  %1964 = vmatprep.subr.mxu0 0.0
  %1965 = vmatpush2.msra.mxu0 0.0
  %1966 = vmatprep.subr.mxu0 0.0
  %1967 = vmatpush2.msra.mxu0 0.0
  %1968 = vmatprep.subr.mxu0 0.0
  %1969 = vmatpush2.msra.mxu0 0.0
  %1970 = vmatprep.subr.mxu0 0.0
  %1971 = vmatpush2.msra.mxu0 0.0
  %1972 = vmatprep.subr.mxu0 0.0
  %1973 = vmatpush2.msra.mxu0 0.0
  %1974 = vmatprep.subr.mxu0 0.0
  %1975 = vmatpush2.msra.mxu0 0.0
  %1976 = vmatprep.subr.mxu0 0.0
  %1977 = vmatpush2.msra.mxu0 0.0
  %1978 = vmatprep.subr.mxu0 0.0
  %1979 = vmatpush2.msra.mxu0 0.0
  %1980 = vmatprep.subr.mxu0 0.0
  %1981 = vmatpush2.msra.mxu0 0.0
  %1982 = vmatprep.subr.mxu0 0.0
  %1983 = vmatpush2.msra.mxu0 0.0
  %1984 = vmatprep.subr.mxu0 0.0
  %1985 = vmatpush2.msra.mxu0 0.0
  %1986 = vmatprep.subr.mxu0 0.0
  %1987 = vmatpush2.msra.mxu0 0.0
  %1988 = vmatprep.mubr.f32.mxu0 0.0
  %1989 = vmatmul.mubr.f32.gmra.mxu0 %v1922
  %v1990 = vpop.f32.mrf.mxu0
  %v1991 = vadd.f32 %v1918, %v1990
  %v1992 = vpop.f32.mrf.mxu0
  %1993 = vdwg.mxu0
  %v1994 = vld [vmem:[%s13] sm:$0xff]
  %v1995 = vld [vmem:[%s13 + $0x8] sm:$0xff]
  %v1996 = vld [vmem:[%s13 + $0x10] sm:$0xff]
  %v1997 = vld [vmem:[%s13 + $0x18] sm:$0xff]
  %v1998 = vld [vmem:[%s13 + $0x20] sm:$0xff]
  %v1999 = vld [vmem:[%s13 + $0x28] sm:$0xff]
  %v2000 = vld [vmem:[%s13 + $0x30] sm:$0xff]
  %v2001 = vld [vmem:[%s13 + $0x38] sm:$0xff]
  %2002 = vmatprep.subr.mxu0 0.0
  %2003 = vmatpush1.msra.mxu0 0.0
  %2004 = vmatprep.subr.mxu0 0.0
  %2005 = vmatpush1.msra.mxu0 0.0
  %2006 = vmatprep.subr.mxu0 0.0
  %2007 = vmatpush1.msra.mxu0 0.0
  %2008 = vmatprep.subr.mxu0 0.0
  %2009 = vmatpush1.msra.mxu0 0.0
  %2010 = vmatprep.subr.mxu0 0.0
  %2011 = vmatpush1.msra.mxu0 0.0
  %2012 = vmatprep.subr.mxu0 0.0
  %2013 = vmatpush1.msra.mxu0 0.0
  %2014 = vmatprep.subr.mxu0 0.0
  %2015 = vmatpush1.msra.mxu0 0.0
  %2016 = vmatprep.subr.mxu0 0.0
  %2017 = vmatpush1.msra.mxu0 0.0
  %2018 = vmatprep.subr.mxu0 0.0
  %2019 = vmatpush1.msra.mxu0 0.0
  %2020 = vmatprep.subr.mxu0 0.0
  %2021 = vmatpush1.msra.mxu0 0.0
  %2022 = vmatprep.subr.mxu0 0.0
  %2023 = vmatpush1.msra.mxu0 0.0
  %2024 = vmatprep.subr.mxu0 0.0
  %2025 = vmatpush1.msra.mxu0 0.0
  %2026 = vmatprep.subr.mxu0 %v2001
  %2027 = vmatpush1.msra.mxu0 %v2000
  %2028 = vmatprep.subr.mxu0 %v1999
  %2029 = vmatpush1.msra.mxu0 %v1998
  %2030 = vmatprep.subr.mxu0 %v1997
  %2031 = vmatpush1.msra.mxu0 %v1996
  %2032 = vmatprep.subr.mxu0 %v1995
  %2033 = vmatpush1.msra.mxu0 %v1994
  %2034 = vmatprep.subr.mxu0 0.0
  %2035 = vmatpush2.msra.mxu0 0.0
  %2036 = vmatprep.subr.mxu0 0.0
  %2037 = vmatpush2.msra.mxu0 0.0
  %2038 = vmatprep.subr.mxu0 0.0
  %2039 = vmatpush2.msra.mxu0 0.0
  %2040 = vmatprep.subr.mxu0 0.0
  %2041 = vmatpush2.msra.mxu0 0.0
  %2042 = vmatprep.subr.mxu0 0.0
  %2043 = vmatpush2.msra.mxu0 0.0
  %2044 = vmatprep.subr.mxu0 0.0
  %2045 = vmatpush2.msra.mxu0 0.0
  %2046 = vmatprep.subr.mxu0 0.0
  %2047 = vmatpush2.msra.mxu0 0.0
  %2048 = vmatprep.subr.mxu0 0.0
  %2049 = vmatpush2.msra.mxu0 0.0
  %2050 = vmatprep.subr.mxu0 0.0
  %2051 = vmatpush2.msra.mxu0 0.0
  %2052 = vmatprep.subr.mxu0 0.0
  %2053 = vmatpush2.msra.mxu0 0.0
  %2054 = vmatprep.subr.mxu0 0.0
  %2055 = vmatpush2.msra.mxu0 0.0
  %2056 = vmatprep.subr.mxu0 0.0
  %2057 = vmatpush2.msra.mxu0 0.0
  %2058 = vmatprep.subr.mxu0 0.0
  %2059 = vmatpush2.msra.mxu0 0.0
  %2060 = vmatprep.subr.mxu0 0.0
  %2061 = vmatpush2.msra.mxu0 0.0
  %2062 = vmatprep.subr.mxu0 0.0
  %2063 = vmatpush2.msra.mxu0 0.0
  %2064 = vmatprep.subr.mxu0 0.0
  %2065 = vmatpush2.msra.mxu0 0.0
  %2066 = vmatprep.mubr.f32.mxu0 0.0
  %2067 = vmatmul.mubr.f32.gmra.mxu0 %v1922
  %v2068 = vpop.f32.mrf.mxu0
  %v2069 = vadd.f32 0.0, %v2068
  %v2070 = vpop.f32.mrf.mxu0
  %v2071 = vadd.f32 0.0, %v2070
  %2072 = vdwg.mxu0
  %v2073 = vld [vmem:[%s7] sm:$0x1]
  %v2074 = vld [vmem:[#allocation2] sm:$0x1]
  %v2075 = vld [vmem:[%s14] sm:$0xff]
  %v2076 = vld [vmem:[%s14 + $0x8] sm:$0xff]
  %v2077 = vld [vmem:[%s14 + $0x10] sm:$0xff]
  %v2078 = vld [vmem:[%s14 + $0x18] sm:$0xff]
  %v2079 = vld [vmem:[%s14 + $0x20] sm:$0xff]
  %v2080 = vld [vmem:[%s14 + $0x28] sm:$0xff]
  %v2081 = vld [vmem:[%s14 + $0x30] sm:$0xff]
  %v2082 = vld [vmem:[%s14 + $0x38] sm:$0xff]
  %v2083 = vld [vmem:[%s14 + $0x40] sm:$0xff]
  %v2084 = vld [vmem:[%s14 + $0x48] sm:$0xff]
  %v2085 = vld [vmem:[%s14 + $0x50] sm:$0xff]
  %v2086 = vld [vmem:[%s14 + $0x58] sm:$0xff]
  %v2087 = vld [vmem:[%s14 + $0x60] sm:$0xff]
  %v2088 = vld [vmem:[%s14 + $0x68] sm:$0xff]
  %v2089 = vld [vmem:[%s14 + $0x70] sm:$0xff]
  %v2090 = vld [vmem:[%s14 + $0x78] sm:$0xff]
  %v2091 = vld [vmem:[%s14 + $0x80] sm:$0xff]
  %v2092 = vld [vmem:[%s14 + $0x88] sm:$0xff]
  %v2093 = vld [vmem:[%s14 + $0x90] sm:$0xff]
  %v2094 = vld [vmem:[%s14 + $0x98] sm:$0xff]
  %v2095 = vld [vmem:[%s14 + $0xa0] sm:$0xff]
  %v2096 = vld [vmem:[%s14 + $0xa8] sm:$0xff]
  %v2097 = vld [vmem:[%s14 + $0xb0] sm:$0xff]
  %v2098 = vld [vmem:[%s14 + $0xb8] sm:$0xff]
  %v2099 = vld [vmem:[%s14 + $0xc0] sm:$0xff]
  %v2100 = vld [vmem:[%s14 + $0xc8] sm:$0xff]
  %v2101 = vld [vmem:[%s14 + $0xd0] sm:$0xff]
  %v2102 = vld [vmem:[%s14 + $0xd8] sm:$0xff]
  %v2103 = vld [vmem:[%s14 + $0xe0] sm:$0xff]
  %v2104 = vld [vmem:[%s14 + $0xe8] sm:$0xff]
  %v2105 = vld [vmem:[%s14 + $0xf0] sm:$0xff]
  %v2106 = vld [vmem:[%s14 + $0xf8] sm:$0xff]
  %v2107 = vld [vmem:[%s15] sm:$0x3]
  %v2108 = vld [vmem:[%s16] sm:$0x1]
  %v2109 = vld [vmem:[%s17] sm:$0x1]
  %v2110 = vld [vmem:[%s11] sm:$0xff]
  %v2111 = vld [vmem:[%s11 + $0x8] sm:$0xff]
  %v2112 = vld [vmem:[%s11 + $0x10] sm:$0xf]
  %v2113 = vld [vmem:[%s11 + $0x18] sm:$0xf]
  %v2114 = vld [vmem:[%s12] sm:$0x3]
  %v2115 = vld [vmem:[%s18] sm:$0xff]
  %v2116 = vld [vmem:[%s18 + $0x8] sm:$0xff]
  %v2117 = vld [vmem:[%s18 + $0x10] sm:$0xff]
  %v2118 = vld [vmem:[%s18 + $0x18] sm:$0xff]
  %v2119 = vld [vmem:[%s18 + $0x20] sm:$0xff]
  %v2120 = vld [vmem:[%s18 + $0x28] sm:$0xff]
  %v2121 = vld [vmem:[%s18 + $0x30] sm:$0xff]
  %v2122 = vld [vmem:[%s18 + $0x38] sm:$0xff]
  %v2123 = vld [vmem:[%s18 + $0x40] sm:$0xff]
  %v2124 = vld [vmem:[%s18 + $0x48] sm:$0xff]
  %v2125 = vld [vmem:[%s18 + $0x50] sm:$0xff]
  %v2126 = vld [vmem:[%s18 + $0x58] sm:$0xff]
  %v2127 = vld [vmem:[%s18 + $0x60] sm:$0xff]
  %v2128 = vld [vmem:[%s18 + $0x68] sm:$0xff]
  %v2129 = vld [vmem:[%s18 + $0x70] sm:$0xff]
  %v2130 = vld [vmem:[%s18 + $0x78] sm:$0xff]
  %v2131 = vld [vmem:[%s18 + $0x80] sm:$0xff]
  %v2132 = vld [vmem:[%s18 + $0x88] sm:$0xff]
  %v2133 = vld [vmem:[%s18 + $0x90] sm:$0xff]
  %v2134 = vld [vmem:[%s18 + $0x98] sm:$0xff]
  %v2135 = vld [vmem:[%s18 + $0xa0] sm:$0xff]
  %v2136 = vld [vmem:[%s18 + $0xa8] sm:$0xff]
  %v2137 = vld [vmem:[%s18 + $0xb0] sm:$0xff]
  %v2138 = vld [vmem:[%s18 + $0xb8] sm:$0xff]
  %v2139 = vld [vmem:[%s18 + $0xc0] sm:$0xff]
  %v2140 = vld [vmem:[%s18 + $0xc8] sm:$0xff]
  %v2141 = vld [vmem:[%s18 + $0xd0] sm:$0xff]
  %v2142 = vld [vmem:[%s18 + $0xd8] sm:$0xff]
  %v2143 = vld [vmem:[%s18 + $0xe0] sm:$0xff]
  %v2144 = vld [vmem:[%s18 + $0xe8] sm:$0xff]
  %v2145 = vld [vmem:[%s18 + $0xf0] sm:$0xff]
  %v2146 = vld [vmem:[%s18 + $0xf8] sm:$0xff]
  %vm2147 = vcmask 523264
  %v2149 = vsel %vm2147, %v1991, 0
  %2151 = vmatprep.subr.mxu0 0.0
  %2152 = vmatpush1.msra.mxu0 0.0
  %2153 = vmatprep.subr.mxu0 0.0
  %2154 = vmatpush1.msra.mxu0 0.0
  %2155 = vmatprep.subr.mxu0 0.0
  %2156 = vmatpush1.msra.mxu0 0.0
  %2157 = vmatprep.subr.mxu0 0.0
  %2158 = vmatpush1.msra.mxu0 0.0
  %2159 = vmatprep.subr.mxu0 0.0
  %2160 = vmatpush1.msra.mxu0 0.0
  %2161 = vmatprep.subr.mxu0 0.0
  %2162 = vmatpush1.msra.mxu0 0.0
  %2163 = vmatprep.subr.mxu0 0.0
  %2164 = vmatpush1.msra.mxu0 0.0
  %2165 = vmatprep.subr.mxu0 0.0
  %2166 = vmatpush1.msra.mxu0 0.0
  %2167 = vmatprep.subr.mxu0 %v2104
  %2168 = vmatpush1.msra.mxu0 %v2103
  %2169 = vmatprep.subr.mxu0 %v2100
  %2170 = vmatpush1.msra.mxu0 %v2099
  %2171 = vmatprep.subr.mxu0 %v2096
  %2172 = vmatpush1.msra.mxu0 %v2095
  %2173 = vmatprep.subr.mxu0 %v2092
  %2174 = vmatpush1.msra.mxu0 %v2091
  %2175 = vmatprep.subr.mxu0 %v2088
  %2176 = vmatpush1.msra.mxu0 %v2087
  %2177 = vmatprep.subr.mxu0 %v2084
  %2178 = vmatpush1.msra.mxu0 %v2083
  %2179 = vmatprep.subr.mxu0 %v2080
  %2180 = vmatpush1.msra.mxu0 %v2079
  %2181 = vmatprep.subr.mxu0 %v2076
  %2182 = vmatpush1.msra.mxu0 %v2075
  %2183 = vmatprep.subr.mxu0 0.0
  %2184 = vmatpush2.msra.mxu0 0.0
  %2185 = vmatprep.subr.mxu0 0.0
  %2186 = vmatpush2.msra.mxu0 0.0
  %2187 = vmatprep.subr.mxu0 0.0
  %2188 = vmatpush2.msra.mxu0 0.0
  %2189 = vmatprep.subr.mxu0 0.0
  %2190 = vmatpush2.msra.mxu0 0.0
  %2191 = vmatprep.subr.mxu0 0.0
  %2192 = vmatpush2.msra.mxu0 0.0
  %2193 = vmatprep.subr.mxu0 0.0
  %2194 = vmatpush2.msra.mxu0 0.0
  %2195 = vmatprep.subr.mxu0 0.0
  %2196 = vmatpush2.msra.mxu0 0.0
  %2197 = vmatprep.subr.mxu0 0.0
  %2198 = vmatpush2.msra.mxu0 0.0
  %2199 = vmatprep.subr.mxu0 0.0
  %2200 = vmatpush2.msra.mxu0 0.0
  %2201 = vmatprep.subr.mxu0 0.0
  %2202 = vmatpush2.msra.mxu0 0.0
  %2203 = vmatprep.subr.mxu0 0.0
  %2204 = vmatpush2.msra.mxu0 0.0
  %2205 = vmatprep.subr.mxu0 0.0
  %2206 = vmatpush2.msra.mxu0 0.0
  %2207 = vmatprep.subr.mxu0 0.0
  %2208 = vmatpush2.msra.mxu0 0.0
  %2209 = vmatprep.subr.mxu0 0.0
  %2210 = vmatpush2.msra.mxu0 0.0
  %2211 = vmatprep.subr.mxu0 0.0
  %2212 = vmatpush2.msra.mxu0 0.0
  %2213 = vmatprep.subr.mxu0 0.0
  %2214 = vmatpush2.msra.mxu0 0.0
  %2215 = vmatprep.mubr.f32.mxu0 0.0
  %2216 = vmatmul.mubr.f32.gmra.mxu0 %v2149
  %v2217 = vpop.f32.mrf.mxu0
  %v2218 = vadd.f32 0.0, %v2217
  %v2219 = vpop.f32.mrf.mxu0
  %v2220 = vadd.f32 0.0, %v2219
  %2221 = vdwg.mxu0
  %2222 = vmatprep.subr.mxu0 0.0
  %2223 = vmatpush1.msra.mxu0 0.0
  %2224 = vmatprep.subr.mxu0 0.0
  %2225 = vmatpush1.msra.mxu0 0.0
  %2226 = vmatprep.subr.mxu0 0.0
  %2227 = vmatpush1.msra.mxu0 0.0
  %2228 = vmatprep.subr.mxu0 0.0
  %2229 = vmatpush1.msra.mxu0 0.0
  %2230 = vmatprep.subr.mxu0 0.0
  %2231 = vmatpush1.msra.mxu0 0.0
  %2232 = vmatprep.subr.mxu0 0.0
  %2233 = vmatpush1.msra.mxu0 0.0
  %2234 = vmatprep.subr.mxu0 0.0
  %2235 = vmatpush1.msra.mxu0 0.0
  %2236 = vmatprep.subr.mxu0 0.0
  %2237 = vmatpush1.msra.mxu0 0.0
  %2238 = vmatprep.subr.mxu0 %v2106
  %2239 = vmatpush1.msra.mxu0 %v2105
  %2240 = vmatprep.subr.mxu0 %v2102
  %2241 = vmatpush1.msra.mxu0 %v2101
  %2242 = vmatprep.subr.mxu0 %v2098
  %2243 = vmatpush1.msra.mxu0 %v2097
  %2244 = vmatprep.subr.mxu0 %v2094
  %2245 = vmatpush1.msra.mxu0 %v2093
  %2246 = vmatprep.subr.mxu0 %v2090
  %2247 = vmatpush1.msra.mxu0 %v2089
  %2248 = vmatprep.subr.mxu0 %v2086
  %2249 = vmatpush1.msra.mxu0 %v2085
  %2250 = vmatprep.subr.mxu0 %v2082
  %2251 = vmatpush1.msra.mxu0 %v2081
  %2252 = vmatprep.subr.mxu0 %v2078
  %2253 = vmatpush1.msra.mxu0 %v2077
  %2254 = vmatprep.subr.mxu0 0.0
  %2255 = vmatpush2.msra.mxu0 0.0
  %2256 = vmatprep.subr.mxu0 0.0
  %2257 = vmatpush2.msra.mxu0 0.0
  %2258 = vmatprep.subr.mxu0 0.0
  %2259 = vmatpush2.msra.mxu0 0.0
  %2260 = vmatprep.subr.mxu0 0.0
  %2261 = vmatpush2.msra.mxu0 0.0
  %2262 = vmatprep.subr.mxu0 0.0
  %2263 = vmatpush2.msra.mxu0 0.0
  %2264 = vmatprep.subr.mxu0 0.0
  %2265 = vmatpush2.msra.mxu0 0.0
  %2266 = vmatprep.subr.mxu0 0.0
  %2267 = vmatpush2.msra.mxu0 0.0
  %2268 = vmatprep.subr.mxu0 0.0
  %2269 = vmatpush2.msra.mxu0 0.0
  %2270 = vmatprep.subr.mxu0 0.0
  %2271 = vmatpush2.msra.mxu0 0.0
  %2272 = vmatprep.subr.mxu0 0.0
  %2273 = vmatpush2.msra.mxu0 0.0
  %2274 = vmatprep.subr.mxu0 0.0
  %2275 = vmatpush2.msra.mxu0 0.0
  %2276 = vmatprep.subr.mxu0 0.0
  %2277 = vmatpush2.msra.mxu0 0.0
  %2278 = vmatprep.subr.mxu0 0.0
  %2279 = vmatpush2.msra.mxu0 0.0
  %2280 = vmatprep.subr.mxu0 0.0
  %2281 = vmatpush2.msra.mxu0 0.0
  %2282 = vmatprep.subr.mxu0 0.0
  %2283 = vmatpush2.msra.mxu0 0.0
  %2284 = vmatprep.subr.mxu0 0.0
  %2285 = vmatpush2.msra.mxu0 0.0
  %2286 = vmatprep.mubr.f32.mxu0 0.0
  %2287 = vmatmul.mubr.f32.gmra.mxu0 %v2149
  %v2288 = vpop.f32.mrf.mxu0
  %v2289 = vpop.f32.mrf.mxu0
  %v2290 = vadd.f32 0.0, %v2289
  %2291 = vdwg.mxu0
  %v2293 = vlaneseq
  %v2294 = vshrl.u32 %v2293, 7
  %v2295 = vsub.s32 0, %v2294
  %v2296 = vrot.slane %v2109, %v2295
  %v2298 = vadd.f32 %v2290, %v2296
  %v2301 = vunpack.c.l.s4 1966171168
  %v2302 = vunpack.c.0.s8 %v2301
  %v2303 = vlaneseq
  %v2304 = vshrl.u32 %v2303, 7
  %v2305 = vsub.s32 %v2302, %v2304
  %v2306 = vrot.slane %v2298, %v2305
  %v2307 = vcombine.high %v2306, %v2306
  %v2309 = vunpack.c.l.s4 1966171168
  %v2310 = vunpack.c.0.s8 %v2309
  %v2311 = vlaneseq
  %v2312 = vshrl.u32 %v2311, 7
  %v2313 = vsub.s32 %v2310, %v2312
  %v2314 = vrot.slane %v2306, %v2313
  %v2316 = vunpack.c.l.s4 1966171168
  %v2317 = vunpack.c.0.s8 %v2316
  %v2318 = vlaneseq
  %v2319 = vshrl.u32 %v2318, 7
  %v2320 = vsub.s32 %v2317, %v2319
  %v2321 = vrot.slane %v2307, %v2320
  %v2322 = vlaneseq
  %v2323 = vshrl.u32 %v2322, 7
  %v2324 = vsub.s32 0, %v2323
  %v2325 = vrot.slane %v2314, %v2324
  %v2326 = vlaneseq
  %v2327 = vshrl.u32 %v2326, 7
  %v2328 = vsub.s32 0, %v2327
  %v2329 = vrot.slane %v2321, %v2328
  %v2332 = vadd.f32 %v1831, %v2325
  %v2333 = vadd.f32 %v1836, %v2325
  %v2334 = vadd.f32 %v1841, %v2325
  %v2335 = vadd.f32 %v1846, %v2325
  %v2336 = vadd.f32 %v1851, %v2325
  %v2337 = vadd.f32 %v1856, %v2325
  %v2338 = vadd.f32 %v1861, %v2325
  %v2339 = vadd.f32 %v1866, %v2325
  %v2340 = vadd.f32 %v1871, %v2329
  %v2341 = vadd.f32 %v1876, %v2329
  %v2342 = vadd.f32 %v1881, %v2329
  %v2343 = vadd.f32 %v1886, %v2329
  %v2344 = vadd.f32 %v1891, %v2329
  %v2345 = vadd.f32 %v1896, %v2329
  %v2346 = vadd.f32 %v1901, %v2329
  %v2347 = vadd.f32 %v1906, %v2329
  %v2348 = vtanh.pop %v2332
  %v2349 = vtanh.pop %v2333
  %v2350 = vtanh.pop %v2334
  %v2351 = vtanh.pop %v2335
  %v2352 = vtanh.pop %v2336
  %v2353 = vtanh.pop %v2337
  %v2354 = vtanh.pop %v2338
  %v2355 = vtanh.pop %v2339
  %v2356 = vtanh.pop %v2340
  %v2357 = vtanh.pop %v2341
  %v2358 = vtanh.pop %v2342
  %v2359 = vtanh.pop %v2343
  %v2360 = vtanh.pop %v2344
  %v2361 = vtanh.pop %v2345
  %v2362 = vtanh.pop %v2346
  %v2363 = vtanh.pop %v2347
  %v2365 = vlaneseq
  %v2366 = vshrl.u32 %v2365, 7
  %v2367 = vsub.s32 0, %v2366
  %v2368 = vrot.slane %v2073, %v2367
  %v2370 = vmul.f32 %v2348, %v2368
  %v2371 = vmul.f32 %v2349, %v2368
  %v2372 = vmul.f32 %v2350, %v2368
  %v2373 = vmul.f32 %v2351, %v2368
  %v2374 = vmul.f32 %v2352, %v2368
  %v2375 = vmul.f32 %v2353, %v2368
  %v2376 = vmul.f32 %v2354, %v2368
  %v2377 = vmul.f32 %v2355, %v2368
  %v2378 = vmul.f32 %v2356, %v2368
  %v2379 = vmul.f32 %v2357, %v2368
  %v2380 = vmul.f32 %v2358, %v2368
  %v2381 = vmul.f32 %v2359, %v2368
  %v2382 = vmul.f32 %v2360, %v2368
  %v2383 = vmul.f32 %v2361, %v2368
  %v2384 = vmul.f32 %v2362, %v2368
  %v2385 = vmul.f32 %v2363, %v2368
  %v2386 = vsel %vm1920, %v2370, 0.0
  %2387 = vadd.xlane.f32.xlu0 %v2386
  %v2388 = vpop.xlane.xlu0 %2387
  %v2389 = vsel %vm1920, %v2371, 0.0
  %2390 = vadd.xlane.f32.xlu0 %v2389
  %v2391 = vpop.xlane.xlu0 %2390
  %v2392 = vsel %vm1920, %v2372, 0.0
  %2393 = vadd.xlane.f32.xlu0 %v2392
  %v2394 = vpop.xlane.xlu0 %2393
  %v2395 = vsel %vm1920, %v2373, 0.0
  %2396 = vadd.xlane.f32.xlu0 %v2395
  %v2397 = vpop.xlane.xlu0 %2396
  %v2398 = vsel %vm1920, %v2374, 0.0
  %2399 = vadd.xlane.f32.xlu0 %v2398
  %v2400 = vpop.xlane.xlu0 %2399
  %v2401 = vsel %vm1920, %v2375, 0.0
  %2402 = vadd.xlane.f32.xlu0 %v2401
  %v2403 = vpop.xlane.xlu0 %2402
  %v2404 = vsel %vm1920, %v2376, 0.0
  %2405 = vadd.xlane.f32.xlu0 %v2404
  %v2406 = vpop.xlane.xlu0 %2405
  %v2407 = vsel %vm1920, %v2377, 0.0
  %2408 = vadd.xlane.f32.xlu0 %v2407
  %v2409 = vpop.xlane.xlu0 %2408
  %v2410 = vsel %vm1920, %v2378, 0.0
  %2411 = vadd.xlane.f32.xlu0 %v2410
  %v2412 = vpop.xlane.xlu0 %2411
  %v2413 = vsel %vm1920, %v2379, 0.0
  %2414 = vadd.xlane.f32.xlu0 %v2413
  %v2415 = vpop.xlane.xlu0 %2414
  %v2416 = vsel %vm1920, %v2380, 0.0
  %2417 = vadd.xlane.f32.xlu0 %v2416
  %v2418 = vpop.xlane.xlu0 %2417
  %v2419 = vsel %vm1920, %v2381, 0.0
  %2420 = vadd.xlane.f32.xlu0 %v2419
  %v2421 = vpop.xlane.xlu0 %2420
  %v2422 = vsel %vm1920, %v2382, 0.0
  %2423 = vadd.xlane.f32.xlu0 %v2422
  %v2424 = vpop.xlane.xlu0 %2423
  %v2425 = vsel %vm1920, %v2383, 0.0
  %2426 = vadd.xlane.f32.xlu0 %v2425
  %v2427 = vpop.xlane.xlu0 %2426
  %v2428 = vsel %vm1920, %v2384, 0.0
  %2429 = vadd.xlane.f32.xlu0 %v2428
  %v2430 = vpop.xlane.xlu0 %2429
  %v2431 = vsel %vm1920, %v2385, 0.0
  %2432 = vadd.xlane.f32.xlu0 %v2431
  %v2433 = vpop.xlane.xlu0 %2432
  %v2435 = vlaneseq
  %v2436 = vshrl.u32 %v2435, 7
  %v2437 = vsub.s32 0, %v2436
  %v2438 = vrot.slane %v2074, %v2437
  %2439 = vset.pattern.permute.xlu0 0
  %2440 = vperm.xlu0 %2439, %v2438
  %v2441 = vpop.permute.xlu0 %2440
  %v2443 = vadd.f32 %v2388, %v2441
  %v2444 = vadd.f32 %v2391, %v2441
  %v2445 = vadd.f32 %v2394, %v2441
  %v2446 = vadd.f32 %v2397, %v2441
  %v2447 = vadd.f32 %v2400, %v2441
  %v2448 = vadd.f32 %v2403, %v2441
  %v2449 = vadd.f32 %v2406, %v2441
  %v2450 = vadd.f32 %v2409, %v2441
  %v2451 = vadd.f32 %v2412, %v2441
  %v2452 = vadd.f32 %v2415, %v2441
  %v2453 = vadd.f32 %v2418, %v2441
  %v2454 = vadd.f32 %v2421, %v2441
  %v2455 = vadd.f32 %v2424, %v2441
  %v2456 = vadd.f32 %v2427, %v2441
  %v2457 = vadd.f32 %v2430, %v2441
  %v2458 = vadd.f32 %v2433, %v2441
  %v2475 = vlaneseq
  %v2476 = vand.u32 %v2475, 127
  %v2477 = vlaneseq
  %v2478 = vshrl.u32 %v2477, 7
  %v2479 = vsub.s32 %v2476, %v2478
  %v2480 = vrot.slane %v2443, %v2479
  %v2481 = vadd.s32 %v2476, 4294967288
  %v2482 = vlaneseq
  %v2483 = vshrl.u32 %v2482, 7
  %v2484 = vsub.s32 %v2481, %v2483
  %v2485 = vrot.slane %v2444, %v2484
  %vm2486 = vcmask 130112
  %v2487 = vsel %vm2486, %v2485, %v2480
  %v2488 = vadd.s32 %v2476, 4294967280
  %v2489 = vlaneseq
  %v2490 = vshrl.u32 %v2489, 7
  %v2491 = vsub.s32 %v2488, %v2490
  %v2492 = vrot.slane %v2445, %v2491
  %vm2493 = vcmask 195712
  %v2494 = vsel %vm2493, %v2492, %v2487
  %v2495 = vadd.s32 %v2476, 4294967272
  %v2496 = vlaneseq
  %v2497 = vshrl.u32 %v2496, 7
  %v2498 = vsub.s32 %v2495, %v2497
  %v2499 = vrot.slane %v2446, %v2498
  %vm2500 = vcmask 261312
  %v2501 = vsel %vm2500, %v2499, %v2494
  %v2502 = vadd.s32 %v2476, 4294967264
  %v2503 = vlaneseq
  %v2504 = vshrl.u32 %v2503, 7
  %v2505 = vsub.s32 %v2502, %v2504
  %v2506 = vrot.slane %v2447, %v2505
  %vm2507 = vcmask 326912
  %v2508 = vsel %vm2507, %v2506, %v2501
  %v2509 = vadd.s32 %v2476, 4294967256
  %v2510 = vlaneseq
  %v2511 = vshrl.u32 %v2510, 7
  %v2512 = vsub.s32 %v2509, %v2511
  %v2513 = vrot.slane %v2448, %v2512
  %vm2514 = vcmask 392512
  %v2515 = vsel %vm2514, %v2513, %v2508
  %v2516 = vadd.s32 %v2476, 4294967248
  %v2517 = vlaneseq
  %v2518 = vshrl.u32 %v2517, 7
  %v2519 = vsub.s32 %v2516, %v2518
  %v2520 = vrot.slane %v2449, %v2519
  %vm2521 = vcmask 458112
  %v2522 = vsel %vm2521, %v2520, %v2515
  %v2523 = vadd.s32 %v2476, 4294967240
  %v2524 = vlaneseq
  %v2525 = vshrl.u32 %v2524, 7
  %v2526 = vsub.s32 %v2523, %v2525
  %v2527 = vrot.slane %v2450, %v2526
  %vm2528 = vcmask 523712
  %v2529 = vsel %vm2528, %v2527, %v2522
  %v2530 = vlaneseq
  %v2531 = vshrl.u32 %v2530, 7
  %v2532 = vsub.s32 %v2476, %v2531
  %v2533 = vrot.slane %v2451, %v2532
  %v2534 = vlaneseq
  %v2535 = vshrl.u32 %v2534, 7
  %v2536 = vsub.s32 %v2481, %v2535
  %v2537 = vrot.slane %v2452, %v2536
  %v2538 = vsel %vm2486, %v2537, %v2533
  %v2539 = vlaneseq
  %v2540 = vshrl.u32 %v2539, 7
  %v2541 = vsub.s32 %v2488, %v2540
  %v2542 = vrot.slane %v2453, %v2541
  %v2543 = vsel %vm2493, %v2542, %v2538
  %v2544 = vlaneseq
  %v2545 = vshrl.u32 %v2544, 7
  %v2546 = vsub.s32 %v2495, %v2545
  %v2547 = vrot.slane %v2454, %v2546
  %v2548 = vsel %vm2500, %v2547, %v2543
  %v2549 = vlaneseq
  %v2550 = vshrl.u32 %v2549, 7
  %v2551 = vsub.s32 %v2502, %v2550
  %v2552 = vrot.slane %v2455, %v2551
  %v2553 = vsel %vm2507, %v2552, %v2548
  %v2554 = vlaneseq
  %v2555 = vshrl.u32 %v2554, 7
  %v2556 = vsub.s32 %v2509, %v2555
  %v2557 = vrot.slane %v2456, %v2556
  %v2558 = vsel %vm2514, %v2557, %v2553
  %v2559 = vlaneseq
  %v2560 = vshrl.u32 %v2559, 7
  %v2561 = vsub.s32 %v2516, %v2560
  %v2562 = vrot.slane %v2457, %v2561
  %v2563 = vsel %vm2521, %v2562, %v2558
  %v2564 = vlaneseq
  %v2565 = vshrl.u32 %v2564, 7
  %v2566 = vsub.s32 %v2523, %v2565
  %v2567 = vrot.slane %v2458, %v2566
  %v2568 = vsel %vm2528, %v2567, %v2563
  %v2569 = vsel %vm244, %v2568, %v2529
  %vm2571 = vcmask 517120
  %v2572 = vsel %vm2571, %v2569, -inf
  %2573 = vmax.xlane.f32.xlu0 %v2572
  %v2574 = vpop.xlane.xlu0 %2573
  %v2576 = vlaneseq
  %v2577 = vshrl.u32 %v2576, 7
  %v2578 = vsub.s32 0, %v2577
  %v2579 = vrot.slane %v2574, %v2578
  %v2580 = vlaneseq
  %v2581 = vshrl.u32 %v2580, 7
  %v2582 = vsub.s32 1, %v2581
  %v2583 = vrot.slane %v2574, %v2582
  %v2586 = vsub.f32 %v2443, %v2579
  %v2587 = vsub.f32 %v2444, %v2579
  %v2588 = vsub.f32 %v2445, %v2579
  %v2589 = vsub.f32 %v2446, %v2579
  %v2590 = vsub.f32 %v2447, %v2579
  %v2591 = vsub.f32 %v2448, %v2579
  %v2592 = vsub.f32 %v2449, %v2579
  %v2593 = vsub.f32 %v2450, %v2579
  %v2594 = vsub.f32 %v2451, %v2583
  %v2595 = vsub.f32 %v2452, %v2583
  %v2596 = vsub.f32 %v2453, %v2583
  %v2597 = vsub.f32 %v2454, %v2583
  %v2598 = vsub.f32 %v2455, %v2583
  %v2599 = vsub.f32 %v2456, %v2583
  %v2600 = vsub.f32 %v2457, %v2583
  %v2601 = vsub.f32 %v2458, %v2583
  %v2602 = vmul.f32 %v2586, 1.442695
  %v2603 = vpow.pop %v2602
  %v2604 = vmul.f32 %v2587, 1.442695
  %v2605 = vpow.pop %v2604
  %v2606 = vmul.f32 %v2588, 1.442695
  %v2607 = vpow.pop %v2606
  %v2608 = vmul.f32 %v2589, 1.442695
  %v2609 = vpow.pop %v2608
  %v2610 = vmul.f32 %v2590, 1.442695
  %v2611 = vpow.pop %v2610
  %v2612 = vmul.f32 %v2591, 1.442695
  %v2613 = vpow.pop %v2612
  %v2614 = vmul.f32 %v2592, 1.442695
  %v2615 = vpow.pop %v2614
  %v2616 = vmul.f32 %v2593, 1.442695
  %v2617 = vpow.pop %v2616
  %v2618 = vmul.f32 %v2594, 1.442695
  %v2619 = vpow.pop %v2618
  %v2620 = vmul.f32 %v2595, 1.442695
  %v2621 = vpow.pop %v2620
  %v2622 = vmul.f32 %v2596, 1.442695
  %v2623 = vpow.pop %v2622
  %v2624 = vmul.f32 %v2597, 1.442695
  %v2625 = vpow.pop %v2624
  %v2626 = vmul.f32 %v2598, 1.442695
  %v2627 = vpow.pop %v2626
  %v2628 = vmul.f32 %v2599, 1.442695
  %v2629 = vpow.pop %v2628
  %v2630 = vmul.f32 %v2600, 1.442695
  %v2631 = vpow.pop %v2630
  %v2632 = vmul.f32 %v2601, 1.442695
  %v2633 = vpow.pop %v2632
  %2650 = vset.pattern.permute.xlu0 0
  %2651 = vperm.xlu0 %2650, %v2603
  %v2652 = vpop.permute.xlu0 %2651
  %2653 = vset.pattern.permute.xlu0 0
  %2654 = vperm.xlu0 %2653, %v2605
  %v2655 = vpop.permute.xlu0 %2654
  %2656 = vset.pattern.permute.xlu0 0
  %2657 = vperm.xlu0 %2656, %v2607
  %v2658 = vpop.permute.xlu0 %2657
  %2659 = vset.pattern.permute.xlu0 0
  %2660 = vperm.xlu0 %2659, %v2609
  %v2661 = vpop.permute.xlu0 %2660
  %2662 = vset.pattern.permute.xlu0 0
  %2663 = vperm.xlu0 %2662, %v2611
  %v2664 = vpop.permute.xlu0 %2663
  %2665 = vset.pattern.permute.xlu0 0
  %2666 = vperm.xlu0 %2665, %v2613
  %v2667 = vpop.permute.xlu0 %2666
  %2668 = vset.pattern.permute.xlu0 0
  %2669 = vperm.xlu0 %2668, %v2615
  %v2670 = vpop.permute.xlu0 %2669
  %2671 = vset.pattern.permute.xlu0 0
  %2672 = vperm.xlu0 %2671, %v2617
  %v2673 = vpop.permute.xlu0 %2672
  %2674 = vset.pattern.permute.xlu0 0
  %2675 = vperm.xlu0 %2674, %v2619
  %v2676 = vpop.permute.xlu0 %2675
  %2677 = vset.pattern.permute.xlu0 0
  %2678 = vperm.xlu0 %2677, %v2621
  %v2679 = vpop.permute.xlu0 %2678
  %2680 = vset.pattern.permute.xlu0 0
  %2681 = vperm.xlu0 %2680, %v2623
  %v2682 = vpop.permute.xlu0 %2681
  %2683 = vset.pattern.permute.xlu0 0
  %2684 = vperm.xlu0 %2683, %v2625
  %v2685 = vpop.permute.xlu0 %2684
  %2686 = vset.pattern.permute.xlu0 0
  %2687 = vperm.xlu0 %2686, %v2627
  %v2688 = vpop.permute.xlu0 %2687
  %2689 = vset.pattern.permute.xlu0 0
  %2690 = vperm.xlu0 %2689, %v2629
  %v2691 = vpop.permute.xlu0 %2690
  %2692 = vset.pattern.permute.xlu0 0
  %2693 = vperm.xlu0 %2692, %v2631
  %v2694 = vpop.permute.xlu0 %2693
  %2695 = vset.pattern.permute.xlu0 0
  %2696 = vperm.xlu0 %2695, %v2633
  %v2697 = vpop.permute.xlu0 %2696
  %v2698 = vlaneseq
  %v2699 = vshrl.u32 %v2698, 7
  %v2700 = vsub.s32 %v2476, %v2699
  %v2701 = vrot.slane %v2652, %v2700
  %v2702 = vlaneseq
  %v2703 = vshrl.u32 %v2702, 7
  %v2704 = vsub.s32 %v2481, %v2703
  %v2705 = vrot.slane %v2655, %v2704
  %v2706 = vsel %vm2486, %v2705, %v2701
  %v2707 = vlaneseq
  %v2708 = vshrl.u32 %v2707, 7
  %v2709 = vsub.s32 %v2488, %v2708
  %v2710 = vrot.slane %v2658, %v2709
  %v2711 = vsel %vm2493, %v2710, %v2706
  %v2712 = vlaneseq
  %v2713 = vshrl.u32 %v2712, 7
  %v2714 = vsub.s32 %v2495, %v2713
  %v2715 = vrot.slane %v2661, %v2714
  %v2716 = vsel %vm2500, %v2715, %v2711
  %v2717 = vlaneseq
  %v2718 = vshrl.u32 %v2717, 7
  %v2719 = vsub.s32 %v2502, %v2718
  %v2720 = vrot.slane %v2664, %v2719
  %v2721 = vsel %vm2507, %v2720, %v2716
  %v2722 = vlaneseq
  %v2723 = vshrl.u32 %v2722, 7
  %v2724 = vsub.s32 %v2509, %v2723
  %v2725 = vrot.slane %v2667, %v2724
  %v2726 = vsel %vm2514, %v2725, %v2721
  %v2727 = vlaneseq
  %v2728 = vshrl.u32 %v2727, 7
  %v2729 = vsub.s32 %v2516, %v2728
  %v2730 = vrot.slane %v2670, %v2729
  %v2731 = vsel %vm2521, %v2730, %v2726
  %v2732 = vlaneseq
  %v2733 = vshrl.u32 %v2732, 7
  %v2734 = vsub.s32 %v2523, %v2733
  %v2735 = vrot.slane %v2673, %v2734
  %v2736 = vsel %vm2528, %v2735, %v2731
  %v2737 = vlaneseq
  %v2738 = vshrl.u32 %v2737, 7
  %v2739 = vsub.s32 %v2476, %v2738
  %v2740 = vrot.slane %v2676, %v2739
  %v2741 = vlaneseq
  %v2742 = vshrl.u32 %v2741, 7
  %v2743 = vsub.s32 %v2481, %v2742
  %v2744 = vrot.slane %v2679, %v2743
  %v2745 = vsel %vm2486, %v2744, %v2740
  %v2746 = vlaneseq
  %v2747 = vshrl.u32 %v2746, 7
  %v2748 = vsub.s32 %v2488, %v2747
  %v2749 = vrot.slane %v2682, %v2748
  %v2750 = vsel %vm2493, %v2749, %v2745
  %v2751 = vlaneseq
  %v2752 = vshrl.u32 %v2751, 7
  %v2753 = vsub.s32 %v2495, %v2752
  %v2754 = vrot.slane %v2685, %v2753
  %v2755 = vsel %vm2500, %v2754, %v2750
  %v2756 = vlaneseq
  %v2757 = vshrl.u32 %v2756, 7
  %v2758 = vsub.s32 %v2502, %v2757
  %v2759 = vrot.slane %v2688, %v2758
  %v2760 = vsel %vm2507, %v2759, %v2755
  %v2761 = vlaneseq
  %v2762 = vshrl.u32 %v2761, 7
  %v2763 = vsub.s32 %v2509, %v2762
  %v2764 = vrot.slane %v2691, %v2763
  %v2765 = vsel %vm2514, %v2764, %v2760
  %v2766 = vlaneseq
  %v2767 = vshrl.u32 %v2766, 7
  %v2768 = vsub.s32 %v2516, %v2767
  %v2769 = vrot.slane %v2694, %v2768
  %v2770 = vsel %vm2521, %v2769, %v2765
  %v2771 = vlaneseq
  %v2772 = vshrl.u32 %v2771, 7
  %v2773 = vsub.s32 %v2523, %v2772
  %v2774 = vrot.slane %v2697, %v2773
  %v2775 = vsel %vm2528, %v2774, %v2770
  %v2776 = vsel %vm244, %v2775, %v2736
  %v2778 = vsel %vm2571, %v2776, 0.0
  %2779 = vadd.xlane.f32.xlu0 %v2778
  %v2780 = vpop.xlane.xlu0 %2779
  %v2782 = vlaneseq
  %v2783 = vshrl.u32 %v2782, 7
  %v2784 = vsub.s32 0, %v2783
  %v2785 = vrot.slane %v2780, %v2784
  %v2786 = vlaneseq
  %v2787 = vshrl.u32 %v2786, 7
  %v2788 = vsub.s32 1, %v2787
  %v2789 = vrot.slane %v2780, %v2788
  %v2792 = vrcp.pop %v2785
  %v2793 = vmul.f32 %v2603, %v2792
  %v2794 = vmul.f32 %v2605, %v2792
  %v2795 = vmul.f32 %v2607, %v2792
  %v2796 = vmul.f32 %v2609, %v2792
  %v2797 = vmul.f32 %v2611, %v2792
  %v2798 = vmul.f32 %v2613, %v2792
  %v2799 = vmul.f32 %v2615, %v2792
  %v2800 = vmul.f32 %v2617, %v2792
  %v2801 = vrcp.pop %v2789
  %v2802 = vmul.f32 %v2619, %v2801
  %v2803 = vmul.f32 %v2621, %v2801
  %v2804 = vmul.f32 %v2623, %v2801
  %v2805 = vmul.f32 %v2625, %v2801
  %v2806 = vmul.f32 %v2627, %v2801
  %v2807 = vmul.f32 %v2629, %v2801
  %v2808 = vmul.f32 %v2631, %v2801
  %v2809 = vmul.f32 %v2633, %v2801
  %2811 = vset.pattern.permute.xlu0 0
  %2812 = vperm.xlu0 %2811, %v2793
  %v2813 = vpop.permute.xlu0 %2812
  %2816 = vset.pattern.permute.xlu0 0
  %2817 = vperm.xlu0 %2816, %v2794
  %v2818 = vpop.permute.xlu0 %2817
  %2821 = vset.pattern.permute.xlu0 0
  %2822 = vperm.xlu0 %2821, %v2795
  %v2823 = vpop.permute.xlu0 %2822
  %2826 = vset.pattern.permute.xlu0 0
  %2827 = vperm.xlu0 %2826, %v2796
  %v2828 = vpop.permute.xlu0 %2827
  %2831 = vset.pattern.permute.xlu0 0
  %2832 = vperm.xlu0 %2831, %v2797
  %v2833 = vpop.permute.xlu0 %2832
  %2836 = vset.pattern.permute.xlu0 0
  %2837 = vperm.xlu0 %2836, %v2798
  %v2838 = vpop.permute.xlu0 %2837
  %2841 = vset.pattern.permute.xlu0 0
  %2842 = vperm.xlu0 %2841, %v2799
  %v2843 = vpop.permute.xlu0 %2842
  %2846 = vset.pattern.permute.xlu0 0
  %2847 = vperm.xlu0 %2846, %v2800
  %v2848 = vpop.permute.xlu0 %2847
  %2851 = vset.pattern.permute.xlu0 0
  %2852 = vperm.xlu0 %2851, %v2802
  %v2853 = vpop.permute.xlu0 %2852
  %2856 = vset.pattern.permute.xlu0 0
  %2857 = vperm.xlu0 %2856, %v2803
  %v2858 = vpop.permute.xlu0 %2857
  %2861 = vset.pattern.permute.xlu0 0
  %2862 = vperm.xlu0 %2861, %v2804
  %v2863 = vpop.permute.xlu0 %2862
  %2866 = vset.pattern.permute.xlu0 0
  %2867 = vperm.xlu0 %2866, %v2805
  %v2868 = vpop.permute.xlu0 %2867
  %2871 = vset.pattern.permute.xlu0 0
  %2872 = vperm.xlu0 %2871, %v2806
  %v2873 = vpop.permute.xlu0 %2872
  %2876 = vset.pattern.permute.xlu0 0
  %2877 = vperm.xlu0 %2876, %v2807
  %v2878 = vpop.permute.xlu0 %2877
  %2881 = vset.pattern.permute.xlu0 0
  %2882 = vperm.xlu0 %2881, %v2808
  %v2883 = vpop.permute.xlu0 %2882
  %2886 = vset.pattern.permute.xlu0 0
  %2887 = vperm.xlu0 %2886, %v2809
  %v2888 = vpop.permute.xlu0 %2887
  %v2890 = vmul.f32 %v2813, %v64
  %v2891 = vmul.f32 %v2818, %v65
  %v2892 = vmul.f32 %v2823, %v66
  %v2893 = vmul.f32 %v2828, %v67
  %v2894 = vmul.f32 %v2833, %v68
  %v2895 = vmul.f32 %v2838, %v69
  %v2896 = vmul.f32 %v2843, %v70
  %v2897 = vmul.f32 %v2848, %v71
  %v2898 = vmul.f32 %v2853, %v72
  %v2899 = vmul.f32 %v2858, %v73
  %v2900 = vmul.f32 %v2863, %v74
  %v2901 = vmul.f32 %v2868, %v75
  %v2902 = vmul.f32 %v2873, %v76
  %v2903 = vmul.f32 %v2878, %v77
  %v2904 = vmul.f32 %v2883, %v78
  %v2905 = vmul.f32 %v2888, %v79
  %v2906 = vsel %vm80, %v2890, 0.0
  %v2907 = vsel %vm80, %v2891, 0.0
  %v2908 = vadd.f32 %v2906, %v2907
  %v2909 = vsel %vm80, %v2892, 0.0
  %v2910 = vadd.f32 %v2908, %v2909
  %v2911 = vsel %vm80, %v2893, 0.0
  %v2912 = vadd.f32 %v2910, %v2911
  %v2913 = vsel %vm80, %v2894, 0.0
  %v2914 = vadd.f32 %v2912, %v2913
  %v2915 = vsel %vm80, %v2895, 0.0
  %v2916 = vadd.f32 %v2914, %v2915
  %v2917 = vsel %vm80, %v2896, 0.0
  %v2918 = vadd.f32 %v2916, %v2917
  %v2919 = vsel %vm80, %v2897, 0.0
  %v2920 = vadd.f32 %v2918, %v2919
  %v2921 = vrot.slane %v2920, 4
  %v2922 = vadd.f32 %v2920, %v2921
  %v2923 = vrot.slane %v2922, 2
  %v2924 = vadd.f32 %v2922, %v2923
  %v2925 = vrot.slane %v2924, 1
  %v2926 = vadd.f32 %v2924, %v2925
  %v2927 = vsel %vm80, %v2898, 0.0
  %v2928 = vsel %vm80, %v2899, 0.0
  %v2929 = vadd.f32 %v2927, %v2928
  %v2930 = vsel %vm80, %v2900, 0.0
  %v2931 = vadd.f32 %v2929, %v2930
  %v2932 = vsel %vm80, %v2901, 0.0
  %v2933 = vadd.f32 %v2931, %v2932
  %v2934 = vsel %vm80, %v2902, 0.0
  %v2935 = vadd.f32 %v2933, %v2934
  %v2936 = vsel %vm80, %v2903, 0.0
  %v2937 = vadd.f32 %v2935, %v2936
  %v2938 = vsel %vm80, %v2904, 0.0
  %v2939 = vadd.f32 %v2937, %v2938
  %v2940 = vsel %vm80, %v2905, 0.0
  %v2941 = vadd.f32 %v2939, %v2940
  %v2942 = vrot.slane %v2941, 4
  %v2943 = vadd.f32 %v2941, %v2942
  %v2944 = vrot.slane %v2943, 2
  %v2945 = vadd.f32 %v2943, %v2944
  %v2946 = vrot.slane %v2945, 1
  %v2947 = vadd.f32 %v2945, %v2946
  %v2949 = vlaneseq
  %v2950 = vshrl.u32 %v2949, 7
  %v2951 = vsub.s32 0, %v2950
  %v2952 = vrot.slane %v2114, %v2951
  %v2953 = vlaneseq
  %v2954 = vshrl.u32 %v2953, 7
  %v2955 = vsub.s32 1, %v2954
  %v2956 = vrot.slane %v2114, %v2955
  %v2961 = vsel %vm244, %v2947, %v2926
  %v2962 = vsel %vm80, %v2961, 0
  %v2965 = vsel %vm248, %v2112, 0
  %v2968 = vsel %vm248, %v2113, 0
  %2970 = vmatprep.subr.mxu0 0.0
  %2971 = vmatpush1.msra.mxu0 0.0
  %2972 = vmatprep.subr.mxu0 0.0
  %2973 = vmatpush1.msra.mxu0 0.0
  %2974 = vmatprep.subr.mxu0 0.0
  %2975 = vmatpush1.msra.mxu0 0.0
  %2976 = vmatprep.subr.mxu0 0.0
  %2977 = vmatpush1.msra.mxu0 0.0
  %2978 = vmatprep.subr.mxu0 0.0
  %2979 = vmatpush1.msra.mxu0 0.0
  %2980 = vmatprep.subr.mxu0 0.0
  %2981 = vmatpush1.msra.mxu0 0.0
  %2982 = vmatprep.subr.mxu0 0.0
  %2983 = vmatpush1.msra.mxu0 0.0
  %2984 = vmatprep.subr.mxu0 0.0
  %2985 = vmatpush1.msra.mxu0 0.0
  %2986 = vmatprep.subr.mxu0 0.0
  %2987 = vmatpush1.msra.mxu0 0.0
  %2988 = vmatprep.subr.mxu0 0.0
  %2989 = vmatpush1.msra.mxu0 0.0
  %2990 = vmatprep.subr.mxu0 0.0
  %2991 = vmatpush1.msra.mxu0 0.0
  %2992 = vmatprep.subr.mxu0 0.0
  %2993 = vmatpush1.msra.mxu0 0.0
  %2994 = vmatprep.subr.mxu0 0.0
  %2995 = vmatpush1.msra.mxu0 0.0
  %2996 = vmatprep.subr.mxu0 0.0
  %2997 = vmatpush1.msra.mxu0 0.0
  %2998 = vmatprep.subr.mxu0 %v2968
  %2999 = vmatpush1.msra.mxu0 %v2965
  %3000 = vmatprep.subr.mxu0 %v2111
  %3001 = vmatpush1.msra.mxu0 %v2110
  %3002 = vmatprep.subr.mxu0 0.0
  %3003 = vmatpush2.msra.mxu0 0.0
  %3004 = vmatprep.subr.mxu0 0.0
  %3005 = vmatpush2.msra.mxu0 0.0
  %3006 = vmatprep.subr.mxu0 0.0
  %3007 = vmatpush2.msra.mxu0 0.0
  %3008 = vmatprep.subr.mxu0 0.0
  %3009 = vmatpush2.msra.mxu0 0.0
  %3010 = vmatprep.subr.mxu0 0.0
  %3011 = vmatpush2.msra.mxu0 0.0
  %3012 = vmatprep.subr.mxu0 0.0
  %3013 = vmatpush2.msra.mxu0 0.0
  %3014 = vmatprep.subr.mxu0 0.0
  %3015 = vmatpush2.msra.mxu0 0.0
  %3016 = vmatprep.subr.mxu0 0.0
  %3017 = vmatpush2.msra.mxu0 0.0
  %3018 = vmatprep.subr.mxu0 0.0
  %3019 = vmatpush2.msra.mxu0 0.0
  %3020 = vmatprep.subr.mxu0 0.0
  %3021 = vmatpush2.msra.mxu0 0.0
  %3022 = vmatprep.subr.mxu0 0.0
  %3023 = vmatpush2.msra.mxu0 0.0
  %3024 = vmatprep.subr.mxu0 0.0
  %3025 = vmatpush2.msra.mxu0 0.0
  %3026 = vmatprep.subr.mxu0 0.0
  %3027 = vmatpush2.msra.mxu0 0.0
  %3028 = vmatprep.subr.mxu0 0.0
  %3029 = vmatpush2.msra.mxu0 0.0
  %3030 = vmatprep.subr.mxu0 0.0
  %3031 = vmatpush2.msra.mxu0 0.0
  %3032 = vmatprep.subr.mxu0 0.0
  %3033 = vmatpush2.msra.mxu0 0.0
  %3034 = vmatprep.mubr.f32.mxu0 0.0
  %3035 = vmatmul.mubr.f32.gmra.mxu0 %v2962
  %v3036 = vpop.f32.mrf.mxu0
  %v3037 = vadd.f32 %v2952, %v3036
  %v3038 = vpop.f32.mrf.mxu0
  %v3039 = vadd.f32 %v2956, %v3038
  %3040 = vdwg.mxu0
  %v3041 = vadd.f32 %v3037, %v2069
  %v3042 = vadd.f32 %v3039, %v2071
  %v3043 = vadd.f32 %v3041, %v2218
  %v3044 = vadd.f32 %v3042, %v2220
  %v3046 = vlaneseq
  %v3047 = vshrl.u32 %v3046, 7
  %v3048 = vsub.s32 0, %v3047
  %v3049 = vrot.slane %v2107, %v3048
  %v3050 = vlaneseq
  %v3051 = vshrl.u32 %v3050, 7
  %v3052 = vsub.s32 1, %v3051
  %v3053 = vrot.slane %v2107, %v3052
  %v3056 = vadd.f32 %v3043, %v3049
  %v3057 = vadd.f32 %v3044, %v3053
  %v3058 = vxor.u32 %v3056, 2147483648
  %v3059 = vmul.f32 %v3058, 1.442695
  %v3060 = vpow.pop %v3059
  %v3061 = vadd.f32 %v3060, 1.0
  %v3062 = vrcp.pop %v3061
  %v3063 = vmul.f32 1.0, %v3062
  %v3064 = vtanh.pop %v3057
  %v3065 = vxor.u32 %v3057, 2147483648
  %v3066 = vmul.f32 %v3065, 1.442695
  %v3067 = vpow.pop %v3066
  %v3068 = vadd.f32 %v3067, 1.0
  %v3069 = vrcp.pop %v3068
  %v3070 = vmul.f32 1.0, %v3069
  %3071 = vrot.lane.b32.xlu0 %v1991, 64
  %v3072 = vpop.permute.xlu0 %3071
  %v3074 = vmul.f32 %v3063, %v3072
  %v3075 = vmul.f32 %v3063, %v3064
  %3077 = vrot.lane.b32.xlu0 %v3075, 64
  %v3078 = vpop.permute.xlu0 %3077
  %v3080 = vadd.f32 %v3074, %v3078
  %v3081 = vtanh.pop %v3080
  %v3082 = vmul.f32 %v3070, %v3081
  %3084 = vrot.lane.b32.xlu0 %v3082, 64
  %v3085 = vpop.permute.xlu0 %3084
  %v3086 = vsel %vm2147, %v3085, 0
  %3088 = vmatprep.subr.mxu0 0.0
  %3089 = vmatpush1.msra.mxu0 0.0
  %3090 = vmatprep.subr.mxu0 0.0
  %3091 = vmatpush1.msra.mxu0 0.0
  %3092 = vmatprep.subr.mxu0 0.0
  %3093 = vmatpush1.msra.mxu0 0.0
  %3094 = vmatprep.subr.mxu0 0.0
  %3095 = vmatpush1.msra.mxu0 0.0
  %3096 = vmatprep.subr.mxu0 0.0
  %3097 = vmatpush1.msra.mxu0 0.0
  %3098 = vmatprep.subr.mxu0 0.0
  %3099 = vmatpush1.msra.mxu0 0.0
  %3100 = vmatprep.subr.mxu0 0.0
  %3101 = vmatpush1.msra.mxu0 0.0
  %3102 = vmatprep.subr.mxu0 0.0
  %3103 = vmatpush1.msra.mxu0 0.0
  %3104 = vmatprep.subr.mxu0 %v2104
  %3105 = vmatpush1.msra.mxu0 %v2103
  %3106 = vmatprep.subr.mxu0 %v2100
  %3107 = vmatpush1.msra.mxu0 %v2099
  %3108 = vmatprep.subr.mxu0 %v2096
  %3109 = vmatpush1.msra.mxu0 %v2095
  %3110 = vmatprep.subr.mxu0 %v2092
  %3111 = vmatpush1.msra.mxu0 %v2091
  %3112 = vmatprep.subr.mxu0 %v2088
  %3113 = vmatpush1.msra.mxu0 %v2087
  %3114 = vmatprep.subr.mxu0 %v2084
  %3115 = vmatpush1.msra.mxu0 %v2083
  %3116 = vmatprep.subr.mxu0 %v2080
  %3117 = vmatpush1.msra.mxu0 %v2079
  %3118 = vmatprep.subr.mxu0 %v2076
  %3119 = vmatpush1.msra.mxu0 %v2075
  %3120 = vmatprep.subr.mxu0 0.0
  %3121 = vmatpush2.msra.mxu0 0.0
  %3122 = vmatprep.subr.mxu0 0.0
  %3123 = vmatpush2.msra.mxu0 0.0
  %3124 = vmatprep.subr.mxu0 0.0
  %3125 = vmatpush2.msra.mxu0 0.0
  %3126 = vmatprep.subr.mxu0 0.0
  %3127 = vmatpush2.msra.mxu0 0.0
  %3128 = vmatprep.subr.mxu0 0.0
  %3129 = vmatpush2.msra.mxu0 0.0
  %3130 = vmatprep.subr.mxu0 0.0
  %3131 = vmatpush2.msra.mxu0 0.0
  %3132 = vmatprep.subr.mxu0 0.0
  %3133 = vmatpush2.msra.mxu0 0.0
  %3134 = vmatprep.subr.mxu0 0.0
  %3135 = vmatpush2.msra.mxu0 0.0
  %3136 = vmatprep.subr.mxu0 0.0
  %3137 = vmatpush2.msra.mxu0 0.0
  %3138 = vmatprep.subr.mxu0 0.0
  %3139 = vmatpush2.msra.mxu0 0.0
  %3140 = vmatprep.subr.mxu0 0.0
  %3141 = vmatpush2.msra.mxu0 0.0
  %3142 = vmatprep.subr.mxu0 0.0
  %3143 = vmatpush2.msra.mxu0 0.0
  %3144 = vmatprep.subr.mxu0 0.0
  %3145 = vmatpush2.msra.mxu0 0.0
  %3146 = vmatprep.subr.mxu0 0.0
  %3147 = vmatpush2.msra.mxu0 0.0
  %3148 = vmatprep.subr.mxu0 0.0
  %3149 = vmatpush2.msra.mxu0 0.0
  %3150 = vmatprep.subr.mxu0 0.0
  %3151 = vmatpush2.msra.mxu0 0.0
  %3152 = vmatprep.mubr.f32.mxu0 0.0
  %3153 = vmatmul.mubr.f32.gmra.mxu0 %v3086
  %v3154 = vpop.f32.mrf.mxu0
  %v3155 = vadd.f32 0.0, %v3154
  %v3156 = vpop.f32.mrf.mxu0
  %v3157 = vadd.f32 0.0, %v3156
  %3158 = vdwg.mxu0
  %3159 = vmatprep.subr.mxu0 0.0
  %3160 = vmatpush1.msra.mxu0 0.0
  %3161 = vmatprep.subr.mxu0 0.0
  %3162 = vmatpush1.msra.mxu0 0.0
  %3163 = vmatprep.subr.mxu0 0.0
  %3164 = vmatpush1.msra.mxu0 0.0
  %3165 = vmatprep.subr.mxu0 0.0
  %3166 = vmatpush1.msra.mxu0 0.0
  %3167 = vmatprep.subr.mxu0 0.0
  %3168 = vmatpush1.msra.mxu0 0.0
  %3169 = vmatprep.subr.mxu0 0.0
  %3170 = vmatpush1.msra.mxu0 0.0
  %3171 = vmatprep.subr.mxu0 0.0
  %3172 = vmatpush1.msra.mxu0 0.0
  %3173 = vmatprep.subr.mxu0 0.0
  %3174 = vmatpush1.msra.mxu0 0.0
  %3175 = vmatprep.subr.mxu0 %v2106
  %3176 = vmatpush1.msra.mxu0 %v2105
  %3177 = vmatprep.subr.mxu0 %v2102
  %3178 = vmatpush1.msra.mxu0 %v2101
  %3179 = vmatprep.subr.mxu0 %v2098
  %3180 = vmatpush1.msra.mxu0 %v2097
  %3181 = vmatprep.subr.mxu0 %v2094
  %3182 = vmatpush1.msra.mxu0 %v2093
  %3183 = vmatprep.subr.mxu0 %v2090
  %3184 = vmatpush1.msra.mxu0 %v2089
  %3185 = vmatprep.subr.mxu0 %v2086
  %3186 = vmatpush1.msra.mxu0 %v2085
  %3187 = vmatprep.subr.mxu0 %v2082
  %3188 = vmatpush1.msra.mxu0 %v2081
  %3189 = vmatprep.subr.mxu0 %v2078
  %3190 = vmatpush1.msra.mxu0 %v2077
  %3191 = vmatprep.subr.mxu0 0.0
  %3192 = vmatpush2.msra.mxu0 0.0
  %3193 = vmatprep.subr.mxu0 0.0
  %3194 = vmatpush2.msra.mxu0 0.0
  %3195 = vmatprep.subr.mxu0 0.0
  %3196 = vmatpush2.msra.mxu0 0.0
  %3197 = vmatprep.subr.mxu0 0.0
  %3198 = vmatpush2.msra.mxu0 0.0
  %3199 = vmatprep.subr.mxu0 0.0
  %3200 = vmatpush2.msra.mxu0 0.0
  %3201 = vmatprep.subr.mxu0 0.0
  %3202 = vmatpush2.msra.mxu0 0.0
  %3203 = vmatprep.subr.mxu0 0.0
  %3204 = vmatpush2.msra.mxu0 0.0
  %3205 = vmatprep.subr.mxu0 0.0
  %3206 = vmatpush2.msra.mxu0 0.0
  %3207 = vmatprep.subr.mxu0 0.0
  %3208 = vmatpush2.msra.mxu0 0.0
  %3209 = vmatprep.subr.mxu0 0.0
  %3210 = vmatpush2.msra.mxu0 0.0
  %3211 = vmatprep.subr.mxu0 0.0
  %3212 = vmatpush2.msra.mxu0 0.0
  %3213 = vmatprep.subr.mxu0 0.0
  %3214 = vmatpush2.msra.mxu0 0.0
  %3215 = vmatprep.subr.mxu0 0.0
  %3216 = vmatpush2.msra.mxu0 0.0
  %3217 = vmatprep.subr.mxu0 0.0
  %3218 = vmatpush2.msra.mxu0 0.0
  %3219 = vmatprep.subr.mxu0 0.0
  %3220 = vmatpush2.msra.mxu0 0.0
  %3221 = vmatprep.subr.mxu0 0.0
  %3222 = vmatpush2.msra.mxu0 0.0
  %3223 = vmatprep.mubr.f32.mxu0 0.0
  %3224 = vmatmul.mubr.f32.gmra.mxu0 %v3086
  %v3225 = vpop.f32.mrf.mxu0
  %v3226 = vadd.f32 0.0, %v3225
  %v3227 = vpop.f32.mrf.mxu0
  %v3228 = vadd.f32 0.0, %v3227
  %3229 = vdwg.mxu0
  %v3231 = vlaneseq
  %v3232 = vshrl.u32 %v3231, 7
  %v3233 = vsub.s32 0, %v3232
  %v3234 = vrot.slane %v2108, %v3233
  %v3236 = vadd.f32 %v3226, %v3234
  %3237 = vst [vmem:[%s19] sm:$0x3] %v3236
  %v3238 = vadd.f32 %v3228, %v2296
  %v3241 = vunpack.c.l.s4 1966171168
  %v3242 = vunpack.c.0.s8 %v3241
  %v3243 = vlaneseq
  %v3244 = vshrl.u32 %v3243, 7
  %v3245 = vsub.s32 %v3242, %v3244
  %v3246 = vrot.slane %v3238, %v3245
  %v3247 = vcombine.high %v3246, %v3246
  %v3249 = vunpack.c.l.s4 1966171168
  %v3250 = vunpack.c.0.s8 %v3249
  %v3251 = vlaneseq
  %v3252 = vshrl.u32 %v3251, 7
  %v3253 = vsub.s32 %v3250, %v3252
  %v3254 = vrot.slane %v3246, %v3253
  %v3256 = vunpack.c.l.s4 1966171168
  %v3257 = vunpack.c.0.s8 %v3256
  %v3258 = vlaneseq
  %v3259 = vshrl.u32 %v3258, 7
  %v3260 = vsub.s32 %v3257, %v3259
  %v3261 = vrot.slane %v3247, %v3260
  %v3262 = vlaneseq
  %v3263 = vshrl.u32 %v3262, 7
  %v3264 = vsub.s32 0, %v3263
  %v3265 = vrot.slane %v3254, %v3264
  %v3266 = vlaneseq
  %v3267 = vshrl.u32 %v3266, 7
  %v3268 = vsub.s32 0, %v3267
  %v3269 = vrot.slane %v3261, %v3268
  %v3272 = vadd.f32 %v1831, %v3265
  %v3273 = vadd.f32 %v1836, %v3265
  %v3274 = vadd.f32 %v1841, %v3265
  %v3275 = vadd.f32 %v1846, %v3265
  %v3276 = vadd.f32 %v1851, %v3265
  %v3277 = vadd.f32 %v1856, %v3265
  %v3278 = vadd.f32 %v1861, %v3265
  %v3279 = vadd.f32 %v1866, %v3265
  %v3280 = vadd.f32 %v1871, %v3269
  %v3281 = vadd.f32 %v1876, %v3269
  %v3282 = vadd.f32 %v1881, %v3269
  %v3283 = vadd.f32 %v1886, %v3269
  %v3284 = vadd.f32 %v1891, %v3269
  %v3285 = vadd.f32 %v1896, %v3269
  %v3286 = vadd.f32 %v1901, %v3269
  %v3287 = vadd.f32 %v1906, %v3269
  %v3288 = vtanh.pop %v3272
  %v3289 = vtanh.pop %v3273
  %v3290 = vtanh.pop %v3274
  %v3291 = vtanh.pop %v3275
  %v3292 = vtanh.pop %v3276
  %v3293 = vtanh.pop %v3277
  %v3294 = vtanh.pop %v3278
  %v3295 = vtanh.pop %v3279
  %v3296 = vtanh.pop %v3280
  %v3297 = vtanh.pop %v3281
  %v3298 = vtanh.pop %v3282
  %v3299 = vtanh.pop %v3283
  %v3300 = vtanh.pop %v3284
  %v3301 = vtanh.pop %v3285
  %v3302 = vtanh.pop %v3286
  %v3303 = vtanh.pop %v3287
  %v3304 = vmul.f32 %v3288, %v2368
  %v3305 = vmul.f32 %v3289, %v2368
  %v3306 = vmul.f32 %v3290, %v2368
  %v3307 = vmul.f32 %v3291, %v2368
  %v3308 = vmul.f32 %v3292, %v2368
  %v3309 = vmul.f32 %v3293, %v2368
  %v3310 = vmul.f32 %v3294, %v2368
  %v3311 = vmul.f32 %v3295, %v2368
  %v3312 = vmul.f32 %v3296, %v2368
  %v3313 = vmul.f32 %v3297, %v2368
  %v3314 = vmul.f32 %v3298, %v2368
  %v3315 = vmul.f32 %v3299, %v2368
  %v3316 = vmul.f32 %v3300, %v2368
  %v3317 = vmul.f32 %v3301, %v2368
  %v3318 = vmul.f32 %v3302, %v2368
  %v3319 = vmul.f32 %v3303, %v2368
  %v3320 = vsel %vm1920, %v3304, 0.0
  %3321 = vadd.xlane.f32.xlu0 %v3320
  %v3322 = vpop.xlane.xlu0 %3321
  %v3323 = vsel %vm1920, %v3305, 0.0
  %3324 = vadd.xlane.f32.xlu0 %v3323
  %v3325 = vpop.xlane.xlu0 %3324
  %v3326 = vsel %vm1920, %v3306, 0.0
  %3327 = vadd.xlane.f32.xlu0 %v3326
  %v3328 = vpop.xlane.xlu0 %3327
  %v3329 = vsel %vm1920, %v3307, 0.0
  %3330 = vadd.xlane.f32.xlu0 %v3329
  %v3331 = vpop.xlane.xlu0 %3330
  %v3332 = vsel %vm1920, %v3308, 0.0
  %3333 = vadd.xlane.f32.xlu0 %v3332
  %v3334 = vpop.xlane.xlu0 %3333
  %v3335 = vsel %vm1920, %v3309, 0.0
  %3336 = vadd.xlane.f32.xlu0 %v3335
  %v3337 = vpop.xlane.xlu0 %3336
  %v3338 = vsel %vm1920, %v3310, 0.0
  %3339 = vadd.xlane.f32.xlu0 %v3338
  %v3340 = vpop.xlane.xlu0 %3339
  %v3341 = vsel %vm1920, %v3311, 0.0
  %3342 = vadd.xlane.f32.xlu0 %v3341
  %v3343 = vpop.xlane.xlu0 %3342
  %v3344 = vsel %vm1920, %v3312, 0.0
  %3345 = vadd.xlane.f32.xlu0 %v3344
  %v3346 = vpop.xlane.xlu0 %3345
  %v3347 = vsel %vm1920, %v3313, 0.0
  %3348 = vadd.xlane.f32.xlu0 %v3347
  %v3349 = vpop.xlane.xlu0 %3348
  %v3350 = vsel %vm1920, %v3314, 0.0
  %3351 = vadd.xlane.f32.xlu0 %v3350
  %v3352 = vpop.xlane.xlu0 %3351
  %v3353 = vsel %vm1920, %v3315, 0.0
  %3354 = vadd.xlane.f32.xlu0 %v3353
  %v3355 = vpop.xlane.xlu0 %3354
  %v3356 = vsel %vm1920, %v3316, 0.0
  %3357 = vadd.xlane.f32.xlu0 %v3356
  %v3358 = vpop.xlane.xlu0 %3357
  %v3359 = vsel %vm1920, %v3317, 0.0
  %3360 = vadd.xlane.f32.xlu0 %v3359
  %v3361 = vpop.xlane.xlu0 %3360
  %v3362 = vsel %vm1920, %v3318, 0.0
  %3363 = vadd.xlane.f32.xlu0 %v3362
  %v3364 = vpop.xlane.xlu0 %3363
  %v3365 = vsel %vm1920, %v3319, 0.0
  %3366 = vadd.xlane.f32.xlu0 %v3365
  %v3367 = vpop.xlane.xlu0 %3366
  %v3368 = vadd.f32 %v3322, %v2441
  %v3369 = vadd.f32 %v3325, %v2441
  %v3370 = vadd.f32 %v3328, %v2441
  %v3371 = vadd.f32 %v3331, %v2441
  %v3372 = vadd.f32 %v3334, %v2441
  %v3373 = vadd.f32 %v3337, %v2441
  %v3374 = vadd.f32 %v3340, %v2441
  %v3375 = vadd.f32 %v3343, %v2441
  %v3376 = vadd.f32 %v3346, %v2441
  %v3377 = vadd.f32 %v3349, %v2441
  %v3378 = vadd.f32 %v3352, %v2441
  %v3379 = vadd.f32 %v3355, %v2441
  %v3380 = vadd.f32 %v3358, %v2441
  %v3381 = vadd.f32 %v3361, %v2441
  %v3382 = vadd.f32 %v3364, %v2441
  %v3383 = vadd.f32 %v3367, %v2441
  %v3400 = vlaneseq
  %v3401 = vshrl.u32 %v3400, 7
  %v3402 = vsub.s32 %v2476, %v3401
  %v3403 = vrot.slane %v3368, %v3402
  %v3404 = vlaneseq
  %v3405 = vshrl.u32 %v3404, 7
  %v3406 = vsub.s32 %v2481, %v3405
  %v3407 = vrot.slane %v3369, %v3406
  %v3408 = vsel %vm2486, %v3407, %v3403
  %v3409 = vlaneseq
  %v3410 = vshrl.u32 %v3409, 7
  %v3411 = vsub.s32 %v2488, %v3410
  %v3412 = vrot.slane %v3370, %v3411
  %v3413 = vsel %vm2493, %v3412, %v3408
  %v3414 = vlaneseq
  %v3415 = vshrl.u32 %v3414, 7
  %v3416 = vsub.s32 %v2495, %v3415
  %v3417 = vrot.slane %v3371, %v3416
  %v3418 = vsel %vm2500, %v3417, %v3413
  %v3419 = vlaneseq
  %v3420 = vshrl.u32 %v3419, 7
  %v3421 = vsub.s32 %v2502, %v3420
  %v3422 = vrot.slane %v3372, %v3421
  %v3423 = vsel %vm2507, %v3422, %v3418
  %v3424 = vlaneseq
  %v3425 = vshrl.u32 %v3424, 7
  %v3426 = vsub.s32 %v2509, %v3425
  %v3427 = vrot.slane %v3373, %v3426
  %v3428 = vsel %vm2514, %v3427, %v3423
  %v3429 = vlaneseq
  %v3430 = vshrl.u32 %v3429, 7
  %v3431 = vsub.s32 %v2516, %v3430
  %v3432 = vrot.slane %v3374, %v3431
  %v3433 = vsel %vm2521, %v3432, %v3428
  %v3434 = vlaneseq
  %v3435 = vshrl.u32 %v3434, 7
  %v3436 = vsub.s32 %v2523, %v3435
  %v3437 = vrot.slane %v3375, %v3436
  %v3438 = vsel %vm2528, %v3437, %v3433
  %v3439 = vlaneseq
  %v3440 = vshrl.u32 %v3439, 7
  %v3441 = vsub.s32 %v2476, %v3440
  %v3442 = vrot.slane %v3376, %v3441
  %v3443 = vlaneseq
  %v3444 = vshrl.u32 %v3443, 7
  %v3445 = vsub.s32 %v2481, %v3444
  %v3446 = vrot.slane %v3377, %v3445
  %v3447 = vsel %vm2486, %v3446, %v3442
  %v3448 = vlaneseq
  %v3449 = vshrl.u32 %v3448, 7
  %v3450 = vsub.s32 %v2488, %v3449
  %v3451 = vrot.slane %v3378, %v3450
  %v3452 = vsel %vm2493, %v3451, %v3447
  %v3453 = vlaneseq
  %v3454 = vshrl.u32 %v3453, 7
  %v3455 = vsub.s32 %v2495, %v3454
  %v3456 = vrot.slane %v3379, %v3455
  %v3457 = vsel %vm2500, %v3456, %v3452
  %v3458 = vlaneseq
  %v3459 = vshrl.u32 %v3458, 7
  %v3460 = vsub.s32 %v2502, %v3459
  %v3461 = vrot.slane %v3380, %v3460
  %v3462 = vsel %vm2507, %v3461, %v3457
  %v3463 = vlaneseq
  %v3464 = vshrl.u32 %v3463, 7
  %v3465 = vsub.s32 %v2509, %v3464
  %v3466 = vrot.slane %v3381, %v3465
  %v3467 = vsel %vm2514, %v3466, %v3462
  %v3468 = vlaneseq
  %v3469 = vshrl.u32 %v3468, 7
  %v3470 = vsub.s32 %v2516, %v3469
  %v3471 = vrot.slane %v3382, %v3470
  %v3472 = vsel %vm2521, %v3471, %v3467
  %v3473 = vlaneseq
  %v3474 = vshrl.u32 %v3473, 7
  %v3475 = vsub.s32 %v2523, %v3474
  %v3476 = vrot.slane %v3383, %v3475
  %v3477 = vsel %vm2528, %v3476, %v3472
  %v3478 = vsel %vm244, %v3477, %v3438
  %v3480 = vsel %vm2571, %v3478, -inf
  %3481 = vmax.xlane.f32.xlu0 %v3480
  %v3482 = vpop.xlane.xlu0 %3481
  %v3484 = vlaneseq
  %v3485 = vshrl.u32 %v3484, 7
  %v3486 = vsub.s32 0, %v3485
  %v3487 = vrot.slane %v3482, %v3486
  %v3488 = vlaneseq
  %v3489 = vshrl.u32 %v3488, 7
  %v3490 = vsub.s32 1, %v3489
  %v3491 = vrot.slane %v3482, %v3490
  %v3494 = vsub.f32 %v3368, %v3487
  %v3495 = vsub.f32 %v3369, %v3487
  %v3496 = vsub.f32 %v3370, %v3487
  %v3497 = vsub.f32 %v3371, %v3487
  %v3498 = vsub.f32 %v3372, %v3487
  %v3499 = vsub.f32 %v3373, %v3487
  %v3500 = vsub.f32 %v3374, %v3487
  %v3501 = vsub.f32 %v3375, %v3487
  %v3502 = vsub.f32 %v3376, %v3491
  %v3503 = vsub.f32 %v3377, %v3491
  %v3504 = vsub.f32 %v3378, %v3491
  %v3505 = vsub.f32 %v3379, %v3491
  %v3506 = vsub.f32 %v3380, %v3491
  %v3507 = vsub.f32 %v3381, %v3491
  %v3508 = vsub.f32 %v3382, %v3491
  %v3509 = vsub.f32 %v3383, %v3491
  %v3510 = vmul.f32 %v3494, 1.442695
  %v3511 = vpow.pop %v3510
  %v3512 = vmul.f32 %v3495, 1.442695
  %v3513 = vpow.pop %v3512
  %v3514 = vmul.f32 %v3496, 1.442695
  %v3515 = vpow.pop %v3514
  %v3516 = vmul.f32 %v3497, 1.442695
  %v3517 = vpow.pop %v3516
  %v3518 = vmul.f32 %v3498, 1.442695
  %v3519 = vpow.pop %v3518
  %v3520 = vmul.f32 %v3499, 1.442695
  %v3521 = vpow.pop %v3520
  %v3522 = vmul.f32 %v3500, 1.442695
  %v3523 = vpow.pop %v3522
  %v3524 = vmul.f32 %v3501, 1.442695
  %v3525 = vpow.pop %v3524
  %v3526 = vmul.f32 %v3502, 1.442695
  %v3527 = vpow.pop %v3526
  %v3528 = vmul.f32 %v3503, 1.442695
  %v3529 = vpow.pop %v3528
  %v3530 = vmul.f32 %v3504, 1.442695
  %v3531 = vpow.pop %v3530
  %v3532 = vmul.f32 %v3505, 1.442695
  %v3533 = vpow.pop %v3532
  %v3534 = vmul.f32 %v3506, 1.442695
  %v3535 = vpow.pop %v3534
  %v3536 = vmul.f32 %v3507, 1.442695
  %v3537 = vpow.pop %v3536
  %v3538 = vmul.f32 %v3508, 1.442695
  %v3539 = vpow.pop %v3538
  %v3540 = vmul.f32 %v3509, 1.442695
  %v3541 = vpow.pop %v3540
  %3558 = vset.pattern.permute.xlu0 0
  %3559 = vperm.xlu0 %3558, %v3511
  %v3560 = vpop.permute.xlu0 %3559
  %3561 = vset.pattern.permute.xlu0 0
  %3562 = vperm.xlu0 %3561, %v3513
  %v3563 = vpop.permute.xlu0 %3562
  %3564 = vset.pattern.permute.xlu0 0
  %3565 = vperm.xlu0 %3564, %v3515
  %v3566 = vpop.permute.xlu0 %3565
  %3567 = vset.pattern.permute.xlu0 0
  %3568 = vperm.xlu0 %3567, %v3517
  %v3569 = vpop.permute.xlu0 %3568
  %3570 = vset.pattern.permute.xlu0 0
  %3571 = vperm.xlu0 %3570, %v3519
  %v3572 = vpop.permute.xlu0 %3571
  %3573 = vset.pattern.permute.xlu0 0
  %3574 = vperm.xlu0 %3573, %v3521
  %v3575 = vpop.permute.xlu0 %3574
  %3576 = vset.pattern.permute.xlu0 0
  %3577 = vperm.xlu0 %3576, %v3523
  %v3578 = vpop.permute.xlu0 %3577
  %3579 = vset.pattern.permute.xlu0 0
  %3580 = vperm.xlu0 %3579, %v3525
  %v3581 = vpop.permute.xlu0 %3580
  %3582 = vset.pattern.permute.xlu0 0
  %3583 = vperm.xlu0 %3582, %v3527
  %v3584 = vpop.permute.xlu0 %3583
  %3585 = vset.pattern.permute.xlu0 0
  %3586 = vperm.xlu0 %3585, %v3529
  %v3587 = vpop.permute.xlu0 %3586
  %3588 = vset.pattern.permute.xlu0 0
  %3589 = vperm.xlu0 %3588, %v3531
  %v3590 = vpop.permute.xlu0 %3589
  %3591 = vset.pattern.permute.xlu0 0
  %3592 = vperm.xlu0 %3591, %v3533
  %v3593 = vpop.permute.xlu0 %3592
  %3594 = vset.pattern.permute.xlu0 0
  %3595 = vperm.xlu0 %3594, %v3535
  %v3596 = vpop.permute.xlu0 %3595
  %3597 = vset.pattern.permute.xlu0 0
  %3598 = vperm.xlu0 %3597, %v3537
  %v3599 = vpop.permute.xlu0 %3598
  %3600 = vset.pattern.permute.xlu0 0
  %3601 = vperm.xlu0 %3600, %v3539
  %v3602 = vpop.permute.xlu0 %3601
  %3603 = vset.pattern.permute.xlu0 0
  %3604 = vperm.xlu0 %3603, %v3541
  %v3605 = vpop.permute.xlu0 %3604
  %v3606 = vlaneseq
  %v3607 = vshrl.u32 %v3606, 7
  %v3608 = vsub.s32 %v2476, %v3607
  %v3609 = vrot.slane %v3560, %v3608
  %v3610 = vlaneseq
  %v3611 = vshrl.u32 %v3610, 7
  %v3612 = vsub.s32 %v2481, %v3611
  %v3613 = vrot.slane %v3563, %v3612
  %v3614 = vsel %vm2486, %v3613, %v3609
  %v3615 = vlaneseq
  %v3616 = vshrl.u32 %v3615, 7
  %v3617 = vsub.s32 %v2488, %v3616
  %v3618 = vrot.slane %v3566, %v3617
  %v3619 = vsel %vm2493, %v3618, %v3614
  %v3620 = vlaneseq
  %v3621 = vshrl.u32 %v3620, 7
  %v3622 = vsub.s32 %v2495, %v3621
  %v3623 = vrot.slane %v3569, %v3622
  %v3624 = vsel %vm2500, %v3623, %v3619
  %v3625 = vlaneseq
  %v3626 = vshrl.u32 %v3625, 7
  %v3627 = vsub.s32 %v2502, %v3626
  %v3628 = vrot.slane %v3572, %v3627
  %v3629 = vsel %vm2507, %v3628, %v3624
  %v3630 = vlaneseq
  %v3631 = vshrl.u32 %v3630, 7
  %v3632 = vsub.s32 %v2509, %v3631
  %v3633 = vrot.slane %v3575, %v3632
  %v3634 = vsel %vm2514, %v3633, %v3629
  %v3635 = vlaneseq
  %v3636 = vshrl.u32 %v3635, 7
  %v3637 = vsub.s32 %v2516, %v3636
  %v3638 = vrot.slane %v3578, %v3637
  %v3639 = vsel %vm2521, %v3638, %v3634
  %v3640 = vlaneseq
  %v3641 = vshrl.u32 %v3640, 7
  %v3642 = vsub.s32 %v2523, %v3641
  %v3643 = vrot.slane %v3581, %v3642
  %v3644 = vsel %vm2528, %v3643, %v3639
  %v3645 = vlaneseq
  %v3646 = vshrl.u32 %v3645, 7
  %v3647 = vsub.s32 %v2476, %v3646
  %v3648 = vrot.slane %v3584, %v3647
  %v3649 = vlaneseq
  %v3650 = vshrl.u32 %v3649, 7
  %v3651 = vsub.s32 %v2481, %v3650
  %v3652 = vrot.slane %v3587, %v3651
  %v3653 = vsel %vm2486, %v3652, %v3648
  %v3654 = vlaneseq
  %v3655 = vshrl.u32 %v3654, 7
  %v3656 = vsub.s32 %v2488, %v3655
  %v3657 = vrot.slane %v3590, %v3656
  %v3658 = vsel %vm2493, %v3657, %v3653
  %v3659 = vlaneseq
  %v3660 = vshrl.u32 %v3659, 7
  %v3661 = vsub.s32 %v2495, %v3660
  %v3662 = vrot.slane %v3593, %v3661
  %v3663 = vsel %vm2500, %v3662, %v3658
  %v3664 = vlaneseq
  %v3665 = vshrl.u32 %v3664, 7
  %v3666 = vsub.s32 %v2502, %v3665
  %v3667 = vrot.slane %v3596, %v3666
  %v3668 = vsel %vm2507, %v3667, %v3663
  %v3669 = vlaneseq
  %v3670 = vshrl.u32 %v3669, 7
  %v3671 = vsub.s32 %v2509, %v3670
  %v3672 = vrot.slane %v3599, %v3671
  %v3673 = vsel %vm2514, %v3672, %v3668
  %v3674 = vlaneseq
  %v3675 = vshrl.u32 %v3674, 7
  %v3676 = vsub.s32 %v2516, %v3675
  %v3677 = vrot.slane %v3602, %v3676
  %v3678 = vsel %vm2521, %v3677, %v3673
  %v3679 = vlaneseq
  %v3680 = vshrl.u32 %v3679, 7
  %v3681 = vsub.s32 %v2523, %v3680
  %v3682 = vrot.slane %v3605, %v3681
  %v3683 = vsel %vm2528, %v3682, %v3678
  %v3684 = vsel %vm244, %v3683, %v3644
  %v3686 = vsel %vm2571, %v3684, 0.0
  %3687 = vadd.xlane.f32.xlu0 %v3686
  %v3688 = vpop.xlane.xlu0 %3687
  %v3690 = vlaneseq
  %v3691 = vshrl.u32 %v3690, 7
  %v3692 = vsub.s32 0, %v3691
  %v3693 = vrot.slane %v3688, %v3692
  %v3694 = vlaneseq
  %v3695 = vshrl.u32 %v3694, 7
  %v3696 = vsub.s32 1, %v3695
  %v3697 = vrot.slane %v3688, %v3696
  %v3700 = vrcp.pop %v3693
  %v3701 = vmul.f32 %v3511, %v3700
  %v3702 = vmul.f32 %v3513, %v3700
  %v3703 = vmul.f32 %v3515, %v3700
  %v3704 = vmul.f32 %v3517, %v3700
  %v3705 = vmul.f32 %v3519, %v3700
  %v3706 = vmul.f32 %v3521, %v3700
  %v3707 = vmul.f32 %v3523, %v3700
  %v3708 = vmul.f32 %v3525, %v3700
  %v3709 = vrcp.pop %v3697
  %v3710 = vmul.f32 %v3527, %v3709
  %v3711 = vmul.f32 %v3529, %v3709
  %v3712 = vmul.f32 %v3531, %v3709
  %v3713 = vmul.f32 %v3533, %v3709
  %v3714 = vmul.f32 %v3535, %v3709
  %v3715 = vmul.f32 %v3537, %v3709
  %v3716 = vmul.f32 %v3539, %v3709
  %v3717 = vmul.f32 %v3541, %v3709
  %3719 = vset.pattern.permute.xlu0 0
  %3720 = vperm.xlu0 %3719, %v3701
  %v3721 = vpop.permute.xlu0 %3720
  %3724 = vset.pattern.permute.xlu0 0
  %3725 = vperm.xlu0 %3724, %v3702
  %v3726 = vpop.permute.xlu0 %3725
  %3729 = vset.pattern.permute.xlu0 0
  %3730 = vperm.xlu0 %3729, %v3703
  %v3731 = vpop.permute.xlu0 %3730
  %3734 = vset.pattern.permute.xlu0 0
  %3735 = vperm.xlu0 %3734, %v3704
  %v3736 = vpop.permute.xlu0 %3735
  %3739 = vset.pattern.permute.xlu0 0
  %3740 = vperm.xlu0 %3739, %v3705
  %v3741 = vpop.permute.xlu0 %3740
  %3744 = vset.pattern.permute.xlu0 0
  %3745 = vperm.xlu0 %3744, %v3706
  %v3746 = vpop.permute.xlu0 %3745
  %3749 = vset.pattern.permute.xlu0 0
  %3750 = vperm.xlu0 %3749, %v3707
  %v3751 = vpop.permute.xlu0 %3750
  %3754 = vset.pattern.permute.xlu0 0
  %3755 = vperm.xlu0 %3754, %v3708
  %v3756 = vpop.permute.xlu0 %3755
  %3759 = vset.pattern.permute.xlu0 0
  %3760 = vperm.xlu0 %3759, %v3710
  %v3761 = vpop.permute.xlu0 %3760
  %3764 = vset.pattern.permute.xlu0 0
  %3765 = vperm.xlu0 %3764, %v3711
  %v3766 = vpop.permute.xlu0 %3765
  %3769 = vset.pattern.permute.xlu0 0
  %3770 = vperm.xlu0 %3769, %v3712
  %v3771 = vpop.permute.xlu0 %3770
  %3774 = vset.pattern.permute.xlu0 0
  %3775 = vperm.xlu0 %3774, %v3713
  %v3776 = vpop.permute.xlu0 %3775
  %3779 = vset.pattern.permute.xlu0 0
  %3780 = vperm.xlu0 %3779, %v3714
  %v3781 = vpop.permute.xlu0 %3780
  %3784 = vset.pattern.permute.xlu0 0
  %3785 = vperm.xlu0 %3784, %v3715
  %v3786 = vpop.permute.xlu0 %3785
  %3789 = vset.pattern.permute.xlu0 0
  %3790 = vperm.xlu0 %3789, %v3716
  %v3791 = vpop.permute.xlu0 %3790
  %3794 = vset.pattern.permute.xlu0 0
  %3795 = vperm.xlu0 %3794, %v3717
  %v3796 = vpop.permute.xlu0 %3795
  %v3798 = vmul.f32 %v3721, %v64
  %v3799 = vmul.f32 %v3726, %v65
  %v3800 = vmul.f32 %v3731, %v66
  %v3801 = vmul.f32 %v3736, %v67
  %v3802 = vmul.f32 %v3741, %v68
  %v3803 = vmul.f32 %v3746, %v69
  %v3804 = vmul.f32 %v3751, %v70
  %v3805 = vmul.f32 %v3756, %v71
  %v3806 = vmul.f32 %v3761, %v72
  %v3807 = vmul.f32 %v3766, %v73
  %v3808 = vmul.f32 %v3771, %v74
  %v3809 = vmul.f32 %v3776, %v75
  %v3810 = vmul.f32 %v3781, %v76
  %v3811 = vmul.f32 %v3786, %v77
  %v3812 = vmul.f32 %v3791, %v78
  %v3813 = vmul.f32 %v3796, %v79
  %v3814 = vsel %vm80, %v3798, 0.0
  %v3815 = vsel %vm80, %v3799, 0.0
  %v3816 = vadd.f32 %v3814, %v3815
  %v3817 = vsel %vm80, %v3800, 0.0
  %v3818 = vadd.f32 %v3816, %v3817
  %v3819 = vsel %vm80, %v3801, 0.0
  %v3820 = vadd.f32 %v3818, %v3819
  %v3821 = vsel %vm80, %v3802, 0.0
  %v3822 = vadd.f32 %v3820, %v3821
  %v3823 = vsel %vm80, %v3803, 0.0
  %v3824 = vadd.f32 %v3822, %v3823
  %v3825 = vsel %vm80, %v3804, 0.0
  %v3826 = vadd.f32 %v3824, %v3825
  %v3827 = vsel %vm80, %v3805, 0.0
  %v3828 = vadd.f32 %v3826, %v3827
  %v3829 = vrot.slane %v3828, 4
  %v3830 = vadd.f32 %v3828, %v3829
  %v3831 = vrot.slane %v3830, 2
  %v3832 = vadd.f32 %v3830, %v3831
  %v3833 = vrot.slane %v3832, 1
  %v3834 = vadd.f32 %v3832, %v3833
  %v3835 = vsel %vm80, %v3806, 0.0
  %v3836 = vsel %vm80, %v3807, 0.0
  %v3837 = vadd.f32 %v3835, %v3836
  %v3838 = vsel %vm80, %v3808, 0.0
  %v3839 = vadd.f32 %v3837, %v3838
  %v3840 = vsel %vm80, %v3809, 0.0
  %v3841 = vadd.f32 %v3839, %v3840
  %v3842 = vsel %vm80, %v3810, 0.0
  %v3843 = vadd.f32 %v3841, %v3842
  %v3844 = vsel %vm80, %v3811, 0.0
  %v3845 = vadd.f32 %v3843, %v3844
  %v3846 = vsel %vm80, %v3812, 0.0
  %v3847 = vadd.f32 %v3845, %v3846
  %v3848 = vsel %vm80, %v3813, 0.0
  %v3849 = vadd.f32 %v3847, %v3848
  %v3850 = vrot.slane %v3849, 4
  %v3851 = vadd.f32 %v3849, %v3850
  %v3852 = vrot.slane %v3851, 2
  %v3853 = vadd.f32 %v3851, %v3852
  %v3854 = vrot.slane %v3853, 1
  %v3855 = vadd.f32 %v3853, %v3854
  %v3858 = vsel %vm244, %v3855, %v3834
  %v3859 = vsel %vm80, %v3858, 0
  %3861 = vmatprep.subr.mxu0 0.0
  %3862 = vmatpush1.msra.mxu0 0.0
  %3863 = vmatprep.subr.mxu0 0.0
  %3864 = vmatpush1.msra.mxu0 0.0
  %3865 = vmatprep.subr.mxu0 0.0
  %3866 = vmatpush1.msra.mxu0 0.0
  %3867 = vmatprep.subr.mxu0 0.0
  %3868 = vmatpush1.msra.mxu0 0.0
  %3869 = vmatprep.subr.mxu0 0.0
  %3870 = vmatpush1.msra.mxu0 0.0
  %3871 = vmatprep.subr.mxu0 0.0
  %3872 = vmatpush1.msra.mxu0 0.0
  %3873 = vmatprep.subr.mxu0 0.0
  %3874 = vmatpush1.msra.mxu0 0.0
  %3875 = vmatprep.subr.mxu0 0.0
  %3876 = vmatpush1.msra.mxu0 0.0
  %3877 = vmatprep.subr.mxu0 0.0
  %3878 = vmatpush1.msra.mxu0 0.0
  %3879 = vmatprep.subr.mxu0 0.0
  %3880 = vmatpush1.msra.mxu0 0.0
  %3881 = vmatprep.subr.mxu0 0.0
  %3882 = vmatpush1.msra.mxu0 0.0
  %3883 = vmatprep.subr.mxu0 0.0
  %3884 = vmatpush1.msra.mxu0 0.0
  %3885 = vmatprep.subr.mxu0 0.0
  %3886 = vmatpush1.msra.mxu0 0.0
  %3887 = vmatprep.subr.mxu0 0.0
  %3888 = vmatpush1.msra.mxu0 0.0
  %3889 = vmatprep.subr.mxu0 %v2968
  %3890 = vmatpush1.msra.mxu0 %v2965
  %3891 = vmatprep.subr.mxu0 %v2111
  %3892 = vmatpush1.msra.mxu0 %v2110
  %3893 = vmatprep.subr.mxu0 0.0
  %3894 = vmatpush2.msra.mxu0 0.0
  %3895 = vmatprep.subr.mxu0 0.0
  %3896 = vmatpush2.msra.mxu0 0.0
  %3897 = vmatprep.subr.mxu0 0.0
  %3898 = vmatpush2.msra.mxu0 0.0
  %3899 = vmatprep.subr.mxu0 0.0
  %3900 = vmatpush2.msra.mxu0 0.0
  %3901 = vmatprep.subr.mxu0 0.0
  %3902 = vmatpush2.msra.mxu0 0.0
  %3903 = vmatprep.subr.mxu0 0.0
  %3904 = vmatpush2.msra.mxu0 0.0
  %3905 = vmatprep.subr.mxu0 0.0
  %3906 = vmatpush2.msra.mxu0 0.0
  %3907 = vmatprep.subr.mxu0 0.0
  %3908 = vmatpush2.msra.mxu0 0.0
  %3909 = vmatprep.subr.mxu0 0.0
  %3910 = vmatpush2.msra.mxu0 0.0
  %3911 = vmatprep.subr.mxu0 0.0
  %3912 = vmatpush2.msra.mxu0 0.0
  %3913 = vmatprep.subr.mxu0 0.0
  %3914 = vmatpush2.msra.mxu0 0.0
  %3915 = vmatprep.subr.mxu0 0.0
  %3916 = vmatpush2.msra.mxu0 0.0
  %3917 = vmatprep.subr.mxu0 0.0
  %3918 = vmatpush2.msra.mxu0 0.0
  %3919 = vmatprep.subr.mxu0 0.0
  %3920 = vmatpush2.msra.mxu0 0.0
  %3921 = vmatprep.subr.mxu0 0.0
  %3922 = vmatpush2.msra.mxu0 0.0
  %3923 = vmatprep.subr.mxu0 0.0
  %3924 = vmatpush2.msra.mxu0 0.0
  %3925 = vmatprep.mubr.f32.mxu0 0.0
  %3926 = vmatmul.mubr.f32.gmra.mxu0 %v3859
  %v3927 = vpop.f32.mrf.mxu0
  %v3928 = vadd.f32 %v2952, %v3927
  %v3929 = vpop.f32.mrf.mxu0
  %v3930 = vadd.f32 %v2956, %v3929
  %3931 = vdwg.mxu0
  %vm3932 = vcmask 1041408
  %v3933 = vsel %vm3932, %v3236, -inf
  %3934 = vmax.xlane.f32.xlu0 %v3933
  %v3935 = vpop.xlane.xlu0 %3934
  %vm3936 = vcmp.eq.f32.partialorder %v3236, %v3935
  %v3937 = vsel %vm3936, %v2476, 128
  %v3938 = vsel %vm3932, %v3937, 2147483647
  %v3939 = vand.u32 %v3938, 65535
  %v3940 = vshra.s32 %v3938, 16
  %v3941 = vcvt.s32.f32 %v3939
  %v3942 = vcvt.s32.f32 %v3940
  %3943 = vmin.xlane.f32.xlu0 %v3942
  %v3944 = vpop.xlane.xlu0 %3943
  %vm3945 = vcmp.eq.f32.partialorder %v3942, %v3944
  %v3946 = vsel %vm3945, %v3941, inf
  %3947 = vmin.xlane.f32.xlu0 %v3946
  %v3948 = vpop.xlane.xlu0 %3947
  %v3949 = vcvt.f32.s32 %v3948
  %v3950 = vcvt.f32.s32 %v3944
  %v3951 = vshll.u32 %v3950, 16
  %v3952 = vadd.s32 %v3951, %v3949
  %vm3953 = vcmp.eq.s32.totalorder %v2476, %v3952
  %v3954 = vsel %vm3953, 1, 0
  %v3955 = vcvt.s32.f32 %v3954
  %3956 = vmatprep.subr.mxu0 %v2146
  %3957 = vmatpush1.msra.mxu0 %v2145
  %3958 = vmatprep.subr.mxu0 %v2144
  %3959 = vmatpush1.msra.mxu0 %v2143
  %3960 = vmatprep.subr.mxu0 %v2142
  %3961 = vmatpush1.msra.mxu0 %v2141
  %3962 = vmatprep.subr.mxu0 %v2140
  %3963 = vmatpush1.msra.mxu0 %v2139
  %3964 = vmatprep.subr.mxu0 %v2138
  %3965 = vmatpush1.msra.mxu0 %v2137
  %3966 = vmatprep.subr.mxu0 %v2136
  %3967 = vmatpush1.msra.mxu0 %v2135
  %3968 = vmatprep.subr.mxu0 %v2134
  %3969 = vmatpush1.msra.mxu0 %v2133
  %3970 = vmatprep.subr.mxu0 %v2132
  %3971 = vmatpush1.msra.mxu0 %v2131
  %3972 = vmatprep.subr.mxu0 %v2130
  %3973 = vmatpush1.msra.mxu0 %v2129
  %3974 = vmatprep.subr.mxu0 %v2128
  %3975 = vmatpush1.msra.mxu0 %v2127
  %3976 = vmatprep.subr.mxu0 %v2126
  %3977 = vmatpush1.msra.mxu0 %v2125
  %3978 = vmatprep.subr.mxu0 %v2124
  %3979 = vmatpush1.msra.mxu0 %v2123
  %3980 = vmatprep.subr.mxu0 %v2122
  %3981 = vmatpush1.msra.mxu0 %v2121
  %3982 = vmatprep.subr.mxu0 %v2120
  %3983 = vmatpush1.msra.mxu0 %v2119
  %3984 = vmatprep.subr.mxu0 %v2118
  %3985 = vmatpush1.msra.mxu0 %v2117
  %3986 = vmatprep.subr.mxu0 %v2116
  %3987 = vmatpush1.msra.mxu0 %v2115
  %3988 = vmatprep.subr.mxu0 0.0
  %3989 = vmatpush2.msra.mxu0 0.0
  %3990 = vmatprep.subr.mxu0 0.0
  %3991 = vmatpush2.msra.mxu0 0.0
  %3992 = vmatprep.subr.mxu0 0.0
  %3993 = vmatpush2.msra.mxu0 0.0
  %3994 = vmatprep.subr.mxu0 0.0
  %3995 = vmatpush2.msra.mxu0 0.0
  %3996 = vmatprep.subr.mxu0 0.0
  %3997 = vmatpush2.msra.mxu0 0.0
  %3998 = vmatprep.subr.mxu0 0.0
  %3999 = vmatpush2.msra.mxu0 0.0
  %4000 = vmatprep.subr.mxu0 0.0
  %4001 = vmatpush2.msra.mxu0 0.0
  %4002 = vmatprep.subr.mxu0 0.0
  %4003 = vmatpush2.msra.mxu0 0.0
  %4004 = vmatprep.subr.mxu0 0.0
  %4005 = vmatpush2.msra.mxu0 0.0
  %4006 = vmatprep.subr.mxu0 0.0
  %4007 = vmatpush2.msra.mxu0 0.0
  %4008 = vmatprep.subr.mxu0 0.0
  %4009 = vmatpush2.msra.mxu0 0.0
  %4010 = vmatprep.subr.mxu0 0.0
  %4011 = vmatpush2.msra.mxu0 0.0
  %4012 = vmatprep.subr.mxu0 0.0
  %4013 = vmatpush2.msra.mxu0 0.0
  %4014 = vmatprep.subr.mxu0 0.0
  %4015 = vmatpush2.msra.mxu0 0.0
  %4016 = vmatprep.subr.mxu0 0.0
  %4017 = vmatpush2.msra.mxu0 0.0
  %4018 = vmatprep.subr.mxu0 0.0
  %4019 = vmatpush2.msra.mxu0 0.0
  %4020 = vmatprep.mubr.f32.mxu0 0.0
  %4021 = vmatmul.mubr.f32.gmra.mxu0 %v3955
  %v4022 = vpop.f32.mrf.mxu0
  %v4023 = vadd.f32 0.0, %v4022
  %v4024 = vpop.f32.mrf.mxu0
  %v4025 = vadd.f32 0.0, %v4024
  %4026 = vdwg.mxu0
  %v4027 = vadd.f32 %v3928, %v4023
  %v4028 = vadd.f32 %v3930, %v4025
  %v4029 = vadd.f32 %v4027, %v3155
  %v4030 = vadd.f32 %v4028, %v3157
  %v4031 = vadd.f32 %v4029, %v3049
  %v4032 = vadd.f32 %v4030, %v3053
  %v4033 = vxor.u32 %v4031, 2147483648
  %v4034 = vmul.f32 %v4033, 1.442695
  %v4035 = vpow.pop %v4034
  %v4036 = vadd.f32 %v4035, 1.0
  %v4037 = vrcp.pop %v4036
  %v4038 = vmul.f32 1.0, %v4037
  %v4039 = vtanh.pop %v4032
  %v4040 = vxor.u32 %v4032, 2147483648
  %v4041 = vmul.f32 %v4040, 1.442695
  %v4042 = vpow.pop %v4041
  %v4043 = vadd.f32 %v4042, 1.0
  %v4044 = vrcp.pop %v4043
  %v4045 = vmul.f32 1.0, %v4044
  %v4046 = vmul.f32 %v4038, %v3080
  %v4047 = vmul.f32 %v4038, %v4039
  %4049 = vrot.lane.b32.xlu0 %v4047, 64
  %v4050 = vpop.permute.xlu0 %4049
  %v4052 = vadd.f32 %v4046, %v4050
  %v4053 = vtanh.pop %v4052
  %v4054 = vmul.f32 %v4045, %v4053
  %4056 = vrot.lane.b32.xlu0 %v4054, 64
  %v4057 = vpop.permute.xlu0 %4056
  %v4058 = vsel %vm2147, %v4057, 0
  %4060 = vmatprep.subr.mxu0 0.0
  %4061 = vmatpush1.msra.mxu0 0.0
  %4062 = vmatprep.subr.mxu0 0.0
  %4063 = vmatpush1.msra.mxu0 0.0
  %4064 = vmatprep.subr.mxu0 0.0
  %4065 = vmatpush1.msra.mxu0 0.0
  %4066 = vmatprep.subr.mxu0 0.0
  %4067 = vmatpush1.msra.mxu0 0.0
  %4068 = vmatprep.subr.mxu0 0.0
  %4069 = vmatpush1.msra.mxu0 0.0
  %4070 = vmatprep.subr.mxu0 0.0
  %4071 = vmatpush1.msra.mxu0 0.0
  %4072 = vmatprep.subr.mxu0 0.0
  %4073 = vmatpush1.msra.mxu0 0.0
  %4074 = vmatprep.subr.mxu0 0.0
  %4075 = vmatpush1.msra.mxu0 0.0
  %4076 = vmatprep.subr.mxu0 %v2104
  %4077 = vmatpush1.msra.mxu0 %v2103
  %4078 = vmatprep.subr.mxu0 %v2100
  %4079 = vmatpush1.msra.mxu0 %v2099
  %4080 = vmatprep.subr.mxu0 %v2096
  %4081 = vmatpush1.msra.mxu0 %v2095
  %4082 = vmatprep.subr.mxu0 %v2092
  %4083 = vmatpush1.msra.mxu0 %v2091
  %4084 = vmatprep.subr.mxu0 %v2088
  %4085 = vmatpush1.msra.mxu0 %v2087
  %4086 = vmatprep.subr.mxu0 %v2084
  %4087 = vmatpush1.msra.mxu0 %v2083
  %4088 = vmatprep.subr.mxu0 %v2080
  %4089 = vmatpush1.msra.mxu0 %v2079
  %4090 = vmatprep.subr.mxu0 %v2076
  %4091 = vmatpush1.msra.mxu0 %v2075
  %4092 = vmatprep.subr.mxu0 0.0
  %4093 = vmatpush2.msra.mxu0 0.0
  %4094 = vmatprep.subr.mxu0 0.0
  %4095 = vmatpush2.msra.mxu0 0.0
  %4096 = vmatprep.subr.mxu0 0.0
  %4097 = vmatpush2.msra.mxu0 0.0
  %4098 = vmatprep.subr.mxu0 0.0
  %4099 = vmatpush2.msra.mxu0 0.0
  %4100 = vmatprep.subr.mxu0 0.0
  %4101 = vmatpush2.msra.mxu0 0.0
  %4102 = vmatprep.subr.mxu0 0.0
  %4103 = vmatpush2.msra.mxu0 0.0
  %4104 = vmatprep.subr.mxu0 0.0
  %4105 = vmatpush2.msra.mxu0 0.0
  %4106 = vmatprep.subr.mxu0 0.0
  %4107 = vmatpush2.msra.mxu0 0.0
  %4108 = vmatprep.subr.mxu0 0.0
  %4109 = vmatpush2.msra.mxu0 0.0
  %4110 = vmatprep.subr.mxu0 0.0
  %4111 = vmatpush2.msra.mxu0 0.0
  %4112 = vmatprep.subr.mxu0 0.0
  %4113 = vmatpush2.msra.mxu0 0.0
  %4114 = vmatprep.subr.mxu0 0.0
  %4115 = vmatpush2.msra.mxu0 0.0
  %4116 = vmatprep.subr.mxu0 0.0
  %4117 = vmatpush2.msra.mxu0 0.0
  %4118 = vmatprep.subr.mxu0 0.0
  %4119 = vmatpush2.msra.mxu0 0.0
  %4120 = vmatprep.subr.mxu0 0.0
  %4121 = vmatpush2.msra.mxu0 0.0
  %4122 = vmatprep.subr.mxu0 0.0
  %4123 = vmatpush2.msra.mxu0 0.0
  %4124 = vmatprep.mubr.f32.mxu0 0.0
  %4125 = vmatmul.mubr.f32.gmra.mxu0 %v4058
  %v4126 = vpop.f32.mrf.mxu0
  %v4127 = vadd.f32 0.0, %v4126
  %v4128 = vpop.f32.mrf.mxu0
  %v4129 = vadd.f32 0.0, %v4128
  %4130 = vdwg.mxu0
  %4131 = vmatprep.subr.mxu0 0.0
  %4132 = vmatpush1.msra.mxu0 0.0
  %4133 = vmatprep.subr.mxu0 0.0
  %4134 = vmatpush1.msra.mxu0 0.0
  %4135 = vmatprep.subr.mxu0 0.0
  %4136 = vmatpush1.msra.mxu0 0.0
  %4137 = vmatprep.subr.mxu0 0.0
  %4138 = vmatpush1.msra.mxu0 0.0
  %4139 = vmatprep.subr.mxu0 0.0
  %4140 = vmatpush1.msra.mxu0 0.0
  %4141 = vmatprep.subr.mxu0 0.0
  %4142 = vmatpush1.msra.mxu0 0.0
  %4143 = vmatprep.subr.mxu0 0.0
  %4144 = vmatpush1.msra.mxu0 0.0
  %4145 = vmatprep.subr.mxu0 0.0
  %4146 = vmatpush1.msra.mxu0 0.0
  %4147 = vmatprep.subr.mxu0 %v2106
  %4148 = vmatpush1.msra.mxu0 %v2105
  %4149 = vmatprep.subr.mxu0 %v2102
  %4150 = vmatpush1.msra.mxu0 %v2101
  %4151 = vmatprep.subr.mxu0 %v2098
  %4152 = vmatpush1.msra.mxu0 %v2097
  %4153 = vmatprep.subr.mxu0 %v2094
  %4154 = vmatpush1.msra.mxu0 %v2093
  %4155 = vmatprep.subr.mxu0 %v2090
  %4156 = vmatpush1.msra.mxu0 %v2089
  %4157 = vmatprep.subr.mxu0 %v2086
  %4158 = vmatpush1.msra.mxu0 %v2085
  %4159 = vmatprep.subr.mxu0 %v2082
  %4160 = vmatpush1.msra.mxu0 %v2081
  %4161 = vmatprep.subr.mxu0 %v2078
  %4162 = vmatpush1.msra.mxu0 %v2077
  %4163 = vmatprep.subr.mxu0 0.0
  %4164 = vmatpush2.msra.mxu0 0.0
  %4165 = vmatprep.subr.mxu0 0.0
  %4166 = vmatpush2.msra.mxu0 0.0
  %4167 = vmatprep.subr.mxu0 0.0
  %4168 = vmatpush2.msra.mxu0 0.0
  %4169 = vmatprep.subr.mxu0 0.0
  %4170 = vmatpush2.msra.mxu0 0.0
  %4171 = vmatprep.subr.mxu0 0.0
  %4172 = vmatpush2.msra.mxu0 0.0
  %4173 = vmatprep.subr.mxu0 0.0
  %4174 = vmatpush2.msra.mxu0 0.0
  %4175 = vmatprep.subr.mxu0 0.0
  %4176 = vmatpush2.msra.mxu0 0.0
  %4177 = vmatprep.subr.mxu0 0.0
  %4178 = vmatpush2.msra.mxu0 0.0
  %4179 = vmatprep.subr.mxu0 0.0
  %4180 = vmatpush2.msra.mxu0 0.0
  %4181 = vmatprep.subr.mxu0 0.0
  %4182 = vmatpush2.msra.mxu0 0.0
  %4183 = vmatprep.subr.mxu0 0.0
  %4184 = vmatpush2.msra.mxu0 0.0
  %4185 = vmatprep.subr.mxu0 0.0
  %4186 = vmatpush2.msra.mxu0 0.0
  %4187 = vmatprep.subr.mxu0 0.0
  %4188 = vmatpush2.msra.mxu0 0.0
  %4189 = vmatprep.subr.mxu0 0.0
  %4190 = vmatpush2.msra.mxu0 0.0
  %4191 = vmatprep.subr.mxu0 0.0
  %4192 = vmatpush2.msra.mxu0 0.0
  %4193 = vmatprep.subr.mxu0 0.0
  %4194 = vmatpush2.msra.mxu0 0.0
  %4195 = vmatprep.mubr.f32.mxu0 0.0
  %4196 = vmatmul.mubr.f32.gmra.mxu0 %v4058
  %v4197 = vpop.f32.mrf.mxu0
  %v4198 = vadd.f32 0.0, %v4197
  %v4199 = vpop.f32.mrf.mxu0
  %v4200 = vadd.f32 0.0, %v4199
  %4201 = vdwg.mxu0
  %v4202 = vadd.f32 %v4198, %v3234
  %s4203 = scalar_lea.vmem %s19, 2
  %4204 = vst [vmem:[%s4203] sm:$0x3] %v4202
  %v4205 = vadd.f32 %v4200, %v2296
  %v4208 = vunpack.c.l.s4 1966171168
  %v4209 = vunpack.c.0.s8 %v4208
  %v4210 = vlaneseq
  %v4211 = vshrl.u32 %v4210, 7
  %v4212 = vsub.s32 %v4209, %v4211
  %v4213 = vrot.slane %v4205, %v4212
  %v4214 = vcombine.high %v4213, %v4213
  %v4216 = vunpack.c.l.s4 1966171168
  %v4217 = vunpack.c.0.s8 %v4216
  %v4218 = vlaneseq
  %v4219 = vshrl.u32 %v4218, 7
  %v4220 = vsub.s32 %v4217, %v4219
  %v4221 = vrot.slane %v4213, %v4220
  %v4223 = vunpack.c.l.s4 1966171168
  %v4224 = vunpack.c.0.s8 %v4223
  %v4225 = vlaneseq
  %v4226 = vshrl.u32 %v4225, 7
  %v4227 = vsub.s32 %v4224, %v4226
  %v4228 = vrot.slane %v4214, %v4227
  %v4229 = vlaneseq
  %v4230 = vshrl.u32 %v4229, 7
  %v4231 = vsub.s32 0, %v4230
  %v4232 = vrot.slane %v4221, %v4231
  %v4233 = vlaneseq
  %v4234 = vshrl.u32 %v4233, 7
  %v4235 = vsub.s32 0, %v4234
  %v4236 = vrot.slane %v4228, %v4235
  %v4239 = vadd.f32 %v1831, %v4232
  %v4240 = vadd.f32 %v1836, %v4232
  %v4241 = vadd.f32 %v1841, %v4232
  %v4242 = vadd.f32 %v1846, %v4232
  %v4243 = vadd.f32 %v1851, %v4232
  %v4244 = vadd.f32 %v1856, %v4232
  %v4245 = vadd.f32 %v1861, %v4232
  %v4246 = vadd.f32 %v1866, %v4232
  %v4247 = vadd.f32 %v1871, %v4236
  %v4248 = vadd.f32 %v1876, %v4236
  %v4249 = vadd.f32 %v1881, %v4236
  %v4250 = vadd.f32 %v1886, %v4236
  %v4251 = vadd.f32 %v1891, %v4236
  %v4252 = vadd.f32 %v1896, %v4236
  %v4253 = vadd.f32 %v1901, %v4236
  %v4254 = vadd.f32 %v1906, %v4236
  %v4255 = vtanh.pop %v4239
  %v4256 = vtanh.pop %v4240
  %v4257 = vtanh.pop %v4241
  %v4258 = vtanh.pop %v4242
  %v4259 = vtanh.pop %v4243
  %v4260 = vtanh.pop %v4244
  %v4261 = vtanh.pop %v4245
  %v4262 = vtanh.pop %v4246
  %v4263 = vtanh.pop %v4247
  %v4264 = vtanh.pop %v4248
  %v4265 = vtanh.pop %v4249
  %v4266 = vtanh.pop %v4250
  %v4267 = vtanh.pop %v4251
  %v4268 = vtanh.pop %v4252
  %v4269 = vtanh.pop %v4253
  %v4270 = vtanh.pop %v4254
  %v4271 = vmul.f32 %v4255, %v2368
  %v4272 = vmul.f32 %v4256, %v2368
  %v4273 = vmul.f32 %v4257, %v2368
  %v4274 = vmul.f32 %v4258, %v2368
  %v4275 = vmul.f32 %v4259, %v2368
  %v4276 = vmul.f32 %v4260, %v2368
  %v4277 = vmul.f32 %v4261, %v2368
  %v4278 = vmul.f32 %v4262, %v2368
  %v4279 = vmul.f32 %v4263, %v2368
  %v4280 = vmul.f32 %v4264, %v2368
  %v4281 = vmul.f32 %v4265, %v2368
  %v4282 = vmul.f32 %v4266, %v2368
  %v4283 = vmul.f32 %v4267, %v2368
  %v4284 = vmul.f32 %v4268, %v2368
  %v4285 = vmul.f32 %v4269, %v2368
  %v4286 = vmul.f32 %v4270, %v2368
  %v4287 = vsel %vm1920, %v4271, 0.0
  %4288 = vadd.xlane.f32.xlu0 %v4287
  %v4289 = vpop.xlane.xlu0 %4288
  %v4290 = vsel %vm1920, %v4272, 0.0
  %4291 = vadd.xlane.f32.xlu0 %v4290
  %v4292 = vpop.xlane.xlu0 %4291
  %v4293 = vsel %vm1920, %v4273, 0.0
  %4294 = vadd.xlane.f32.xlu0 %v4293
  %v4295 = vpop.xlane.xlu0 %4294
  %v4296 = vsel %vm1920, %v4274, 0.0
  %4297 = vadd.xlane.f32.xlu0 %v4296
  %v4298 = vpop.xlane.xlu0 %4297
  %v4299 = vsel %vm1920, %v4275, 0.0
  %4300 = vadd.xlane.f32.xlu0 %v4299
  %v4301 = vpop.xlane.xlu0 %4300
  %v4302 = vsel %vm1920, %v4276, 0.0
  %4303 = vadd.xlane.f32.xlu0 %v4302
  %v4304 = vpop.xlane.xlu0 %4303
  %v4305 = vsel %vm1920, %v4277, 0.0
  %4306 = vadd.xlane.f32.xlu0 %v4305
  %v4307 = vpop.xlane.xlu0 %4306
  %v4308 = vsel %vm1920, %v4278, 0.0
  %4309 = vadd.xlane.f32.xlu0 %v4308
  %v4310 = vpop.xlane.xlu0 %4309
  %v4311 = vsel %vm1920, %v4279, 0.0
  %4312 = vadd.xlane.f32.xlu0 %v4311
  %v4313 = vpop.xlane.xlu0 %4312
  %v4314 = vsel %vm1920, %v4280, 0.0
  %4315 = vadd.xlane.f32.xlu0 %v4314
  %v4316 = vpop.xlane.xlu0 %4315
  %v4317 = vsel %vm1920, %v4281, 0.0
  %4318 = vadd.xlane.f32.xlu0 %v4317
  %v4319 = vpop.xlane.xlu0 %4318
  %v4320 = vsel %vm1920, %v4282, 0.0
  %4321 = vadd.xlane.f32.xlu0 %v4320
  %v4322 = vpop.xlane.xlu0 %4321
  %v4323 = vsel %vm1920, %v4283, 0.0
  %4324 = vadd.xlane.f32.xlu0 %v4323
  %v4325 = vpop.xlane.xlu0 %4324
  %v4326 = vsel %vm1920, %v4284, 0.0
  %4327 = vadd.xlane.f32.xlu0 %v4326
  %v4328 = vpop.xlane.xlu0 %4327
  %v4329 = vsel %vm1920, %v4285, 0.0
  %4330 = vadd.xlane.f32.xlu0 %v4329
  %v4331 = vpop.xlane.xlu0 %4330
  %v4332 = vsel %vm1920, %v4286, 0.0
  %4333 = vadd.xlane.f32.xlu0 %v4332
  %v4334 = vpop.xlane.xlu0 %4333
  %v4335 = vadd.f32 %v4289, %v2441
  %v4336 = vadd.f32 %v4292, %v2441
  %v4337 = vadd.f32 %v4295, %v2441
  %v4338 = vadd.f32 %v4298, %v2441
  %v4339 = vadd.f32 %v4301, %v2441
  %v4340 = vadd.f32 %v4304, %v2441
  %v4341 = vadd.f32 %v4307, %v2441
  %v4342 = vadd.f32 %v4310, %v2441
  %v4343 = vadd.f32 %v4313, %v2441
  %v4344 = vadd.f32 %v4316, %v2441
  %v4345 = vadd.f32 %v4319, %v2441
  %v4346 = vadd.f32 %v4322, %v2441
  %v4347 = vadd.f32 %v4325, %v2441
  %v4348 = vadd.f32 %v4328, %v2441
  %v4349 = vadd.f32 %v4331, %v2441
  %v4350 = vadd.f32 %v4334, %v2441
  %v4367 = vlaneseq
  %v4368 = vshrl.u32 %v4367, 7
  %v4369 = vsub.s32 %v2476, %v4368
  %v4370 = vrot.slane %v4335, %v4369
  %v4371 = vlaneseq
  %v4372 = vshrl.u32 %v4371, 7
  %v4373 = vsub.s32 %v2481, %v4372
  %v4374 = vrot.slane %v4336, %v4373
  %v4375 = vsel %vm2486, %v4374, %v4370
  %v4376 = vlaneseq
  %v4377 = vshrl.u32 %v4376, 7
  %v4378 = vsub.s32 %v2488, %v4377
  %v4379 = vrot.slane %v4337, %v4378
  %v4380 = vsel %vm2493, %v4379, %v4375
  %v4381 = vlaneseq
  %v4382 = vshrl.u32 %v4381, 7
  %v4383 = vsub.s32 %v2495, %v4382
  %v4384 = vrot.slane %v4338, %v4383
  %v4385 = vsel %vm2500, %v4384, %v4380
  %v4386 = vlaneseq
  %v4387 = vshrl.u32 %v4386, 7
  %v4388 = vsub.s32 %v2502, %v4387
  %v4389 = vrot.slane %v4339, %v4388
  %v4390 = vsel %vm2507, %v4389, %v4385
  %v4391 = vlaneseq
  %v4392 = vshrl.u32 %v4391, 7
  %v4393 = vsub.s32 %v2509, %v4392
  %v4394 = vrot.slane %v4340, %v4393
  %v4395 = vsel %vm2514, %v4394, %v4390
  %v4396 = vlaneseq
  %v4397 = vshrl.u32 %v4396, 7
  %v4398 = vsub.s32 %v2516, %v4397
  %v4399 = vrot.slane %v4341, %v4398
  %v4400 = vsel %vm2521, %v4399, %v4395
  %v4401 = vlaneseq
  %v4402 = vshrl.u32 %v4401, 7
  %v4403 = vsub.s32 %v2523, %v4402
  %v4404 = vrot.slane %v4342, %v4403
  %v4405 = vsel %vm2528, %v4404, %v4400
  %v4406 = vlaneseq
  %v4407 = vshrl.u32 %v4406, 7
  %v4408 = vsub.s32 %v2476, %v4407
  %v4409 = vrot.slane %v4343, %v4408
  %v4410 = vlaneseq
  %v4411 = vshrl.u32 %v4410, 7
  %v4412 = vsub.s32 %v2481, %v4411
  %v4413 = vrot.slane %v4344, %v4412
  %v4414 = vsel %vm2486, %v4413, %v4409
  %v4415 = vlaneseq
  %v4416 = vshrl.u32 %v4415, 7
  %v4417 = vsub.s32 %v2488, %v4416
  %v4418 = vrot.slane %v4345, %v4417
  %v4419 = vsel %vm2493, %v4418, %v4414
  %v4420 = vlaneseq
  %v4421 = vshrl.u32 %v4420, 7
  %v4422 = vsub.s32 %v2495, %v4421
  %v4423 = vrot.slane %v4346, %v4422
  %v4424 = vsel %vm2500, %v4423, %v4419
  %v4425 = vlaneseq
  %v4426 = vshrl.u32 %v4425, 7
  %v4427 = vsub.s32 %v2502, %v4426
  %v4428 = vrot.slane %v4347, %v4427
  %v4429 = vsel %vm2507, %v4428, %v4424
  %v4430 = vlaneseq
  %v4431 = vshrl.u32 %v4430, 7
  %v4432 = vsub.s32 %v2509, %v4431
  %v4433 = vrot.slane %v4348, %v4432
  %v4434 = vsel %vm2514, %v4433, %v4429
  %v4435 = vlaneseq
  %v4436 = vshrl.u32 %v4435, 7
  %v4437 = vsub.s32 %v2516, %v4436
  %v4438 = vrot.slane %v4349, %v4437
  %v4439 = vsel %vm2521, %v4438, %v4434
  %v4440 = vlaneseq
  %v4441 = vshrl.u32 %v4440, 7
  %v4442 = vsub.s32 %v2523, %v4441
  %v4443 = vrot.slane %v4350, %v4442
  %v4444 = vsel %vm2528, %v4443, %v4439
  %v4445 = vsel %vm244, %v4444, %v4405
  %v4447 = vsel %vm2571, %v4445, -inf
  %4448 = vmax.xlane.f32.xlu0 %v4447
  %v4449 = vpop.xlane.xlu0 %4448
  %v4451 = vlaneseq
  %v4452 = vshrl.u32 %v4451, 7
  %v4453 = vsub.s32 0, %v4452
  %v4454 = vrot.slane %v4449, %v4453
  %v4455 = vlaneseq
  %v4456 = vshrl.u32 %v4455, 7
  %v4457 = vsub.s32 1, %v4456
  %v4458 = vrot.slane %v4449, %v4457
  %v4461 = vsub.f32 %v4335, %v4454
  %v4462 = vsub.f32 %v4336, %v4454
  %v4463 = vsub.f32 %v4337, %v4454
  %v4464 = vsub.f32 %v4338, %v4454
  %v4465 = vsub.f32 %v4339, %v4454
  %v4466 = vsub.f32 %v4340, %v4454
  %v4467 = vsub.f32 %v4341, %v4454
  %v4468 = vsub.f32 %v4342, %v4454
  %v4469 = vsub.f32 %v4343, %v4458
  %v4470 = vsub.f32 %v4344, %v4458
  %v4471 = vsub.f32 %v4345, %v4458
  %v4472 = vsub.f32 %v4346, %v4458
  %v4473 = vsub.f32 %v4347, %v4458
  %v4474 = vsub.f32 %v4348, %v4458
  %v4475 = vsub.f32 %v4349, %v4458
  %v4476 = vsub.f32 %v4350, %v4458
  %v4477 = vmul.f32 %v4461, 1.442695
  %v4478 = vpow.pop %v4477
  %v4479 = vmul.f32 %v4462, 1.442695
  %v4480 = vpow.pop %v4479
  %v4481 = vmul.f32 %v4463, 1.442695
  %v4482 = vpow.pop %v4481
  %v4483 = vmul.f32 %v4464, 1.442695
  %v4484 = vpow.pop %v4483
  %v4485 = vmul.f32 %v4465, 1.442695
  %v4486 = vpow.pop %v4485
  %v4487 = vmul.f32 %v4466, 1.442695
  %v4488 = vpow.pop %v4487
  %v4489 = vmul.f32 %v4467, 1.442695
  %v4490 = vpow.pop %v4489
  %v4491 = vmul.f32 %v4468, 1.442695
  %v4492 = vpow.pop %v4491
  %v4493 = vmul.f32 %v4469, 1.442695
  %v4494 = vpow.pop %v4493
  %v4495 = vmul.f32 %v4470, 1.442695
  %v4496 = vpow.pop %v4495
  %v4497 = vmul.f32 %v4471, 1.442695
  %v4498 = vpow.pop %v4497
  %v4499 = vmul.f32 %v4472, 1.442695
  %v4500 = vpow.pop %v4499
  %v4501 = vmul.f32 %v4473, 1.442695
  %v4502 = vpow.pop %v4501
  %v4503 = vmul.f32 %v4474, 1.442695
  %v4504 = vpow.pop %v4503
  %v4505 = vmul.f32 %v4475, 1.442695
  %v4506 = vpow.pop %v4505
  %v4507 = vmul.f32 %v4476, 1.442695
  %v4508 = vpow.pop %v4507
  %4525 = vset.pattern.permute.xlu0 0
  %4526 = vperm.xlu0 %4525, %v4478
  %v4527 = vpop.permute.xlu0 %4526
  %4528 = vset.pattern.permute.xlu0 0
  %4529 = vperm.xlu0 %4528, %v4480
  %v4530 = vpop.permute.xlu0 %4529
  %4531 = vset.pattern.permute.xlu0 0
  %4532 = vperm.xlu0 %4531, %v4482
  %v4533 = vpop.permute.xlu0 %4532
  %4534 = vset.pattern.permute.xlu0 0
  %4535 = vperm.xlu0 %4534, %v4484
  %v4536 = vpop.permute.xlu0 %4535
  %4537 = vset.pattern.permute.xlu0 0
  %4538 = vperm.xlu0 %4537, %v4486
  %v4539 = vpop.permute.xlu0 %4538
  %4540 = vset.pattern.permute.xlu0 0
  %4541 = vperm.xlu0 %4540, %v4488
  %v4542 = vpop.permute.xlu0 %4541
  %4543 = vset.pattern.permute.xlu0 0
  %4544 = vperm.xlu0 %4543, %v4490
  %v4545 = vpop.permute.xlu0 %4544
  %4546 = vset.pattern.permute.xlu0 0
  %4547 = vperm.xlu0 %4546, %v4492
  %v4548 = vpop.permute.xlu0 %4547
  %4549 = vset.pattern.permute.xlu0 0
  %4550 = vperm.xlu0 %4549, %v4494
  %v4551 = vpop.permute.xlu0 %4550
  %4552 = vset.pattern.permute.xlu0 0
  %4553 = vperm.xlu0 %4552, %v4496
  %v4554 = vpop.permute.xlu0 %4553
  %4555 = vset.pattern.permute.xlu0 0
  %4556 = vperm.xlu0 %4555, %v4498
  %v4557 = vpop.permute.xlu0 %4556
  %4558 = vset.pattern.permute.xlu0 0
  %4559 = vperm.xlu0 %4558, %v4500
  %v4560 = vpop.permute.xlu0 %4559
  %4561 = vset.pattern.permute.xlu0 0
  %4562 = vperm.xlu0 %4561, %v4502
  %v4563 = vpop.permute.xlu0 %4562
  %4564 = vset.pattern.permute.xlu0 0
  %4565 = vperm.xlu0 %4564, %v4504
  %v4566 = vpop.permute.xlu0 %4565
  %4567 = vset.pattern.permute.xlu0 0
  %4568 = vperm.xlu0 %4567, %v4506
  %v4569 = vpop.permute.xlu0 %4568
  %4570 = vset.pattern.permute.xlu0 0
  %4571 = vperm.xlu0 %4570, %v4508
  %v4572 = vpop.permute.xlu0 %4571
  %v4573 = vlaneseq
  %v4574 = vshrl.u32 %v4573, 7
  %v4575 = vsub.s32 %v2476, %v4574
  %v4576 = vrot.slane %v4527, %v4575
  %v4577 = vlaneseq
  %v4578 = vshrl.u32 %v4577, 7
  %v4579 = vsub.s32 %v2481, %v4578
  %v4580 = vrot.slane %v4530, %v4579
  %v4581 = vsel %vm2486, %v4580, %v4576
  %v4582 = vlaneseq
  %v4583 = vshrl.u32 %v4582, 7
  %v4584 = vsub.s32 %v2488, %v4583
  %v4585 = vrot.slane %v4533, %v4584
  %v4586 = vsel %vm2493, %v4585, %v4581
  %v4587 = vlaneseq
  %v4588 = vshrl.u32 %v4587, 7
  %v4589 = vsub.s32 %v2495, %v4588
  %v4590 = vrot.slane %v4536, %v4589
  %v4591 = vsel %vm2500, %v4590, %v4586
  %v4592 = vlaneseq
  %v4593 = vshrl.u32 %v4592, 7
  %v4594 = vsub.s32 %v2502, %v4593
  %v4595 = vrot.slane %v4539, %v4594
  %v4596 = vsel %vm2507, %v4595, %v4591
  %v4597 = vlaneseq
  %v4598 = vshrl.u32 %v4597, 7
  %v4599 = vsub.s32 %v2509, %v4598
  %v4600 = vrot.slane %v4542, %v4599
  %v4601 = vsel %vm2514, %v4600, %v4596
  %v4602 = vlaneseq
  %v4603 = vshrl.u32 %v4602, 7
  %v4604 = vsub.s32 %v2516, %v4603
  %v4605 = vrot.slane %v4545, %v4604
  %v4606 = vsel %vm2521, %v4605, %v4601
  %v4607 = vlaneseq
  %v4608 = vshrl.u32 %v4607, 7
  %v4609 = vsub.s32 %v2523, %v4608
  %v4610 = vrot.slane %v4548, %v4609
  %v4611 = vsel %vm2528, %v4610, %v4606
  %v4612 = vlaneseq
  %v4613 = vshrl.u32 %v4612, 7
  %v4614 = vsub.s32 %v2476, %v4613
  %v4615 = vrot.slane %v4551, %v4614
  %v4616 = vlaneseq
  %v4617 = vshrl.u32 %v4616, 7
  %v4618 = vsub.s32 %v2481, %v4617
  %v4619 = vrot.slane %v4554, %v4618
  %v4620 = vsel %vm2486, %v4619, %v4615
  %v4621 = vlaneseq
  %v4622 = vshrl.u32 %v4621, 7
  %v4623 = vsub.s32 %v2488, %v4622
  %v4624 = vrot.slane %v4557, %v4623
  %v4625 = vsel %vm2493, %v4624, %v4620
  %v4626 = vlaneseq
  %v4627 = vshrl.u32 %v4626, 7
  %v4628 = vsub.s32 %v2495, %v4627
  %v4629 = vrot.slane %v4560, %v4628
  %v4630 = vsel %vm2500, %v4629, %v4625
  %v4631 = vlaneseq
  %v4632 = vshrl.u32 %v4631, 7
  %v4633 = vsub.s32 %v2502, %v4632
  %v4634 = vrot.slane %v4563, %v4633
  %v4635 = vsel %vm2507, %v4634, %v4630
  %v4636 = vlaneseq
  %v4637 = vshrl.u32 %v4636, 7
  %v4638 = vsub.s32 %v2509, %v4637
  %v4639 = vrot.slane %v4566, %v4638
  %v4640 = vsel %vm2514, %v4639, %v4635
  %v4641 = vlaneseq
  %v4642 = vshrl.u32 %v4641, 7
  %v4643 = vsub.s32 %v2516, %v4642
  %v4644 = vrot.slane %v4569, %v4643
  %v4645 = vsel %vm2521, %v4644, %v4640
  %v4646 = vlaneseq
  %v4647 = vshrl.u32 %v4646, 7
  %v4648 = vsub.s32 %v2523, %v4647
  %v4649 = vrot.slane %v4572, %v4648
  %v4650 = vsel %vm2528, %v4649, %v4645
  %v4651 = vsel %vm244, %v4650, %v4611
  %v4653 = vsel %vm2571, %v4651, 0.0
  %4654 = vadd.xlane.f32.xlu0 %v4653
  %v4655 = vpop.xlane.xlu0 %4654
  %v4657 = vlaneseq
  %v4658 = vshrl.u32 %v4657, 7
  %v4659 = vsub.s32 0, %v4658
  %v4660 = vrot.slane %v4655, %v4659
  %v4661 = vlaneseq
  %v4662 = vshrl.u32 %v4661, 7
  %v4663 = vsub.s32 1, %v4662
  %v4664 = vrot.slane %v4655, %v4663
  %v4667 = vrcp.pop %v4660
  %v4668 = vmul.f32 %v4478, %v4667
  %v4669 = vmul.f32 %v4480, %v4667
  %v4670 = vmul.f32 %v4482, %v4667
  %v4671 = vmul.f32 %v4484, %v4667
  %v4672 = vmul.f32 %v4486, %v4667
  %v4673 = vmul.f32 %v4488, %v4667
  %v4674 = vmul.f32 %v4490, %v4667
  %v4675 = vmul.f32 %v4492, %v4667
  %v4676 = vrcp.pop %v4664
  %v4677 = vmul.f32 %v4494, %v4676
  %v4678 = vmul.f32 %v4496, %v4676
  %v4679 = vmul.f32 %v4498, %v4676
  %v4680 = vmul.f32 %v4500, %v4676
  %v4681 = vmul.f32 %v4502, %v4676
  %v4682 = vmul.f32 %v4504, %v4676
  %v4683 = vmul.f32 %v4506, %v4676
  %v4684 = vmul.f32 %v4508, %v4676
  %4686 = vset.pattern.permute.xlu0 0
  %4687 = vperm.xlu0 %4686, %v4668
  %v4688 = vpop.permute.xlu0 %4687
  %4691 = vset.pattern.permute.xlu0 0
  %4692 = vperm.xlu0 %4691, %v4669
  %v4693 = vpop.permute.xlu0 %4692
  %4696 = vset.pattern.permute.xlu0 0
  %4697 = vperm.xlu0 %4696, %v4670
  %v4698 = vpop.permute.xlu0 %4697
  %4701 = vset.pattern.permute.xlu0 0
  %4702 = vperm.xlu0 %4701, %v4671
  %v4703 = vpop.permute.xlu0 %4702
  %4706 = vset.pattern.permute.xlu0 0
  %4707 = vperm.xlu0 %4706, %v4672
  %v4708 = vpop.permute.xlu0 %4707
  %4711 = vset.pattern.permute.xlu0 0
  %4712 = vperm.xlu0 %4711, %v4673
  %v4713 = vpop.permute.xlu0 %4712
  %4716 = vset.pattern.permute.xlu0 0
  %4717 = vperm.xlu0 %4716, %v4674
  %v4718 = vpop.permute.xlu0 %4717
  %4721 = vset.pattern.permute.xlu0 0
  %4722 = vperm.xlu0 %4721, %v4675
  %v4723 = vpop.permute.xlu0 %4722
  %4726 = vset.pattern.permute.xlu0 0
  %4727 = vperm.xlu0 %4726, %v4677
  %v4728 = vpop.permute.xlu0 %4727
  %4731 = vset.pattern.permute.xlu0 0
  %4732 = vperm.xlu0 %4731, %v4678
  %v4733 = vpop.permute.xlu0 %4732
  %4736 = vset.pattern.permute.xlu0 0
  %4737 = vperm.xlu0 %4736, %v4679
  %v4738 = vpop.permute.xlu0 %4737
  %4741 = vset.pattern.permute.xlu0 0
  %4742 = vperm.xlu0 %4741, %v4680
  %v4743 = vpop.permute.xlu0 %4742
  %4746 = vset.pattern.permute.xlu0 0
  %4747 = vperm.xlu0 %4746, %v4681
  %v4748 = vpop.permute.xlu0 %4747
  %4751 = vset.pattern.permute.xlu0 0
  %4752 = vperm.xlu0 %4751, %v4682
  %v4753 = vpop.permute.xlu0 %4752
  %4756 = vset.pattern.permute.xlu0 0
  %4757 = vperm.xlu0 %4756, %v4683
  %v4758 = vpop.permute.xlu0 %4757
  %4761 = vset.pattern.permute.xlu0 0
  %4762 = vperm.xlu0 %4761, %v4684
  %v4763 = vpop.permute.xlu0 %4762
  %v4765 = vmul.f32 %v4688, %v64
  %v4766 = vmul.f32 %v4693, %v65
  %v4767 = vmul.f32 %v4698, %v66
  %v4768 = vmul.f32 %v4703, %v67
  %v4769 = vmul.f32 %v4708, %v68
  %v4770 = vmul.f32 %v4713, %v69
  %v4771 = vmul.f32 %v4718, %v70
  %v4772 = vmul.f32 %v4723, %v71
  %v4773 = vmul.f32 %v4728, %v72
  %v4774 = vmul.f32 %v4733, %v73
  %v4775 = vmul.f32 %v4738, %v74
  %v4776 = vmul.f32 %v4743, %v75
  %v4777 = vmul.f32 %v4748, %v76
  %v4778 = vmul.f32 %v4753, %v77
  %v4779 = vmul.f32 %v4758, %v78
  %v4780 = vmul.f32 %v4763, %v79
  %v4781 = vsel %vm80, %v4765, 0.0
  %v4782 = vsel %vm80, %v4766, 0.0
  %v4783 = vadd.f32 %v4781, %v4782
  %v4784 = vsel %vm80, %v4767, 0.0
  %v4785 = vadd.f32 %v4783, %v4784
  %v4786 = vsel %vm80, %v4768, 0.0
  %v4787 = vadd.f32 %v4785, %v4786
  %v4788 = vsel %vm80, %v4769, 0.0
  %v4789 = vadd.f32 %v4787, %v4788
  %v4790 = vsel %vm80, %v4770, 0.0
  %v4791 = vadd.f32 %v4789, %v4790
  %v4792 = vsel %vm80, %v4771, 0.0
  %v4793 = vadd.f32 %v4791, %v4792
  %v4794 = vsel %vm80, %v4772, 0.0
  %v4795 = vadd.f32 %v4793, %v4794
  %v4796 = vrot.slane %v4795, 4
  %v4797 = vadd.f32 %v4795, %v4796
  %v4798 = vrot.slane %v4797, 2
  %v4799 = vadd.f32 %v4797, %v4798
  %v4800 = vrot.slane %v4799, 1
  %v4801 = vadd.f32 %v4799, %v4800
  %v4802 = vsel %vm80, %v4773, 0.0
  %v4803 = vsel %vm80, %v4774, 0.0
  %v4804 = vadd.f32 %v4802, %v4803
  %v4805 = vsel %vm80, %v4775, 0.0
  %v4806 = vadd.f32 %v4804, %v4805
  %v4807 = vsel %vm80, %v4776, 0.0
  %v4808 = vadd.f32 %v4806, %v4807
  %v4809 = vsel %vm80, %v4777, 0.0
  %v4810 = vadd.f32 %v4808, %v4809
  %v4811 = vsel %vm80, %v4778, 0.0
  %v4812 = vadd.f32 %v4810, %v4811
  %v4813 = vsel %vm80, %v4779, 0.0
  %v4814 = vadd.f32 %v4812, %v4813
  %v4815 = vsel %vm80, %v4780, 0.0
  %v4816 = vadd.f32 %v4814, %v4815
  %v4817 = vrot.slane %v4816, 4
  %v4818 = vadd.f32 %v4816, %v4817
  %v4819 = vrot.slane %v4818, 2
  %v4820 = vadd.f32 %v4818, %v4819
  %v4821 = vrot.slane %v4820, 1
  %v4822 = vadd.f32 %v4820, %v4821
  %v4825 = vsel %vm244, %v4822, %v4801
  %v4826 = vsel %vm80, %v4825, 0
  %4828 = vmatprep.subr.mxu0 0.0
  %4829 = vmatpush1.msra.mxu0 0.0
  %4830 = vmatprep.subr.mxu0 0.0
  %4831 = vmatpush1.msra.mxu0 0.0
  %4832 = vmatprep.subr.mxu0 0.0
  %4833 = vmatpush1.msra.mxu0 0.0
  %4834 = vmatprep.subr.mxu0 0.0
  %4835 = vmatpush1.msra.mxu0 0.0
  %4836 = vmatprep.subr.mxu0 0.0
  %4837 = vmatpush1.msra.mxu0 0.0
  %4838 = vmatprep.subr.mxu0 0.0
  %4839 = vmatpush1.msra.mxu0 0.0
  %4840 = vmatprep.subr.mxu0 0.0
  %4841 = vmatpush1.msra.mxu0 0.0
  %4842 = vmatprep.subr.mxu0 0.0
  %4843 = vmatpush1.msra.mxu0 0.0
  %4844 = vmatprep.subr.mxu0 0.0
  %4845 = vmatpush1.msra.mxu0 0.0
  %4846 = vmatprep.subr.mxu0 0.0
  %4847 = vmatpush1.msra.mxu0 0.0
  %4848 = vmatprep.subr.mxu0 0.0
  %4849 = vmatpush1.msra.mxu0 0.0
  %4850 = vmatprep.subr.mxu0 0.0
  %4851 = vmatpush1.msra.mxu0 0.0
  %4852 = vmatprep.subr.mxu0 0.0
  %4853 = vmatpush1.msra.mxu0 0.0
  %4854 = vmatprep.subr.mxu0 0.0
  %4855 = vmatpush1.msra.mxu0 0.0
  %4856 = vmatprep.subr.mxu0 %v2968
  %4857 = vmatpush1.msra.mxu0 %v2965
  %4858 = vmatprep.subr.mxu0 %v2111
  %4859 = vmatpush1.msra.mxu0 %v2110
  %4860 = vmatprep.subr.mxu0 0.0
  %4861 = vmatpush2.msra.mxu0 0.0
  %4862 = vmatprep.subr.mxu0 0.0
  %4863 = vmatpush2.msra.mxu0 0.0
  %4864 = vmatprep.subr.mxu0 0.0
  %4865 = vmatpush2.msra.mxu0 0.0
  %4866 = vmatprep.subr.mxu0 0.0
  %4867 = vmatpush2.msra.mxu0 0.0
  %4868 = vmatprep.subr.mxu0 0.0
  %4869 = vmatpush2.msra.mxu0 0.0
  %4870 = vmatprep.subr.mxu0 0.0
  %4871 = vmatpush2.msra.mxu0 0.0
  %4872 = vmatprep.subr.mxu0 0.0
  %4873 = vmatpush2.msra.mxu0 0.0
  %4874 = vmatprep.subr.mxu0 0.0
  %4875 = vmatpush2.msra.mxu0 0.0
  %4876 = vmatprep.subr.mxu0 0.0
  %4877 = vmatpush2.msra.mxu0 0.0
  %4878 = vmatprep.subr.mxu0 0.0
  %4879 = vmatpush2.msra.mxu0 0.0
  %4880 = vmatprep.subr.mxu0 0.0
  %4881 = vmatpush2.msra.mxu0 0.0
  %4882 = vmatprep.subr.mxu0 0.0
  %4883 = vmatpush2.msra.mxu0 0.0
  %4884 = vmatprep.subr.mxu0 0.0
  %4885 = vmatpush2.msra.mxu0 0.0
  %4886 = vmatprep.subr.mxu0 0.0
  %4887 = vmatpush2.msra.mxu0 0.0
  %4888 = vmatprep.subr.mxu0 0.0
  %4889 = vmatpush2.msra.mxu0 0.0
  %4890 = vmatprep.subr.mxu0 0.0
  %4891 = vmatpush2.msra.mxu0 0.0
  %4892 = vmatprep.mubr.f32.mxu0 0.0
  %4893 = vmatmul.mubr.f32.gmra.mxu0 %v4826
  %v4894 = vpop.f32.mrf.mxu0
  %v4895 = vadd.f32 %v2952, %v4894
  %v4896 = vpop.f32.mrf.mxu0
  %v4897 = vadd.f32 %v2956, %v4896
  %4898 = vdwg.mxu0
  %v4899 = vsel %vm3932, %v4202, -inf
  %4900 = vmax.xlane.f32.xlu0 %v4899
  %v4901 = vpop.xlane.xlu0 %4900
  %vm4902 = vcmp.eq.f32.partialorder %v4202, %v4901
  %v4903 = vsel %vm4902, %v2476, 128
  %v4904 = vsel %vm3932, %v4903, 2147483647
  %v4905 = vand.u32 %v4904, 65535
  %v4906 = vshra.s32 %v4904, 16
  %v4907 = vcvt.s32.f32 %v4905
  %v4908 = vcvt.s32.f32 %v4906
  %4909 = vmin.xlane.f32.xlu0 %v4908
  %v4910 = vpop.xlane.xlu0 %4909
  %vm4911 = vcmp.eq.f32.partialorder %v4908, %v4910
  %v4912 = vsel %vm4911, %v4907, inf
  %4913 = vmin.xlane.f32.xlu0 %v4912
  %v4914 = vpop.xlane.xlu0 %4913
  %v4915 = vcvt.f32.s32 %v4914
  %v4916 = vcvt.f32.s32 %v4910
  %v4917 = vshll.u32 %v4916, 16
  %v4918 = vadd.s32 %v4917, %v4915
  %vm4919 = vcmp.eq.s32.totalorder %v2476, %v4918
  %v4920 = vsel %vm4919, 1, 0
  %v4921 = vcvt.s32.f32 %v4920
  %4922 = vmatprep.subr.mxu0 %v2146
  %4923 = vmatpush1.msra.mxu0 %v2145
  %4924 = vmatprep.subr.mxu0 %v2144
  %4925 = vmatpush1.msra.mxu0 %v2143
  %4926 = vmatprep.subr.mxu0 %v2142
  %4927 = vmatpush1.msra.mxu0 %v2141
  %4928 = vmatprep.subr.mxu0 %v2140
  %4929 = vmatpush1.msra.mxu0 %v2139
  %4930 = vmatprep.subr.mxu0 %v2138
  %4931 = vmatpush1.msra.mxu0 %v2137
  %4932 = vmatprep.subr.mxu0 %v2136
  %4933 = vmatpush1.msra.mxu0 %v2135
  %4934 = vmatprep.subr.mxu0 %v2134
  %4935 = vmatpush1.msra.mxu0 %v2133
  %4936 = vmatprep.subr.mxu0 %v2132
  %4937 = vmatpush1.msra.mxu0 %v2131
  %4938 = vmatprep.subr.mxu0 %v2130
  %4939 = vmatpush1.msra.mxu0 %v2129
  %4940 = vmatprep.subr.mxu0 %v2128
  %4941 = vmatpush1.msra.mxu0 %v2127
  %4942 = vmatprep.subr.mxu0 %v2126
  %4943 = vmatpush1.msra.mxu0 %v2125
  %4944 = vmatprep.subr.mxu0 %v2124
  %4945 = vmatpush1.msra.mxu0 %v2123
  %4946 = vmatprep.subr.mxu0 %v2122
  %4947 = vmatpush1.msra.mxu0 %v2121
  %4948 = vmatprep.subr.mxu0 %v2120
  %4949 = vmatpush1.msra.mxu0 %v2119
  %4950 = vmatprep.subr.mxu0 %v2118
  %4951 = vmatpush1.msra.mxu0 %v2117
  %4952 = vmatprep.subr.mxu0 %v2116
  %4953 = vmatpush1.msra.mxu0 %v2115
  %4954 = vmatprep.subr.mxu0 0.0
  %4955 = vmatpush2.msra.mxu0 0.0
  %4956 = vmatprep.subr.mxu0 0.0
  %4957 = vmatpush2.msra.mxu0 0.0
  %4958 = vmatprep.subr.mxu0 0.0
  %4959 = vmatpush2.msra.mxu0 0.0
  %4960 = vmatprep.subr.mxu0 0.0
  %4961 = vmatpush2.msra.mxu0 0.0
  %4962 = vmatprep.subr.mxu0 0.0
  %4963 = vmatpush2.msra.mxu0 0.0
  %4964 = vmatprep.subr.mxu0 0.0
  %4965 = vmatpush2.msra.mxu0 0.0
  %4966 = vmatprep.subr.mxu0 0.0
  %4967 = vmatpush2.msra.mxu0 0.0
  %4968 = vmatprep.subr.mxu0 0.0
  %4969 = vmatpush2.msra.mxu0 0.0
  %4970 = vmatprep.subr.mxu0 0.0
  %4971 = vmatpush2.msra.mxu0 0.0
  %4972 = vmatprep.subr.mxu0 0.0
  %4973 = vmatpush2.msra.mxu0 0.0
  %4974 = vmatprep.subr.mxu0 0.0
  %4975 = vmatpush2.msra.mxu0 0.0
  %4976 = vmatprep.subr.mxu0 0.0
  %4977 = vmatpush2.msra.mxu0 0.0
  %4978 = vmatprep.subr.mxu0 0.0
  %4979 = vmatpush2.msra.mxu0 0.0
  %4980 = vmatprep.subr.mxu0 0.0
  %4981 = vmatpush2.msra.mxu0 0.0
  %4982 = vmatprep.subr.mxu0 0.0
  %4983 = vmatpush2.msra.mxu0 0.0
  %4984 = vmatprep.subr.mxu0 0.0
  %4985 = vmatpush2.msra.mxu0 0.0
  %4986 = vmatprep.mubr.f32.mxu0 0.0
  %4987 = vmatmul.mubr.f32.gmra.mxu0 %v4921
  %v4988 = vpop.f32.mrf.mxu0
  %v4989 = vadd.f32 0.0, %v4988
  %v4990 = vpop.f32.mrf.mxu0
  %v4991 = vadd.f32 0.0, %v4990
  %4992 = vdwg.mxu0
  %v4993 = vadd.f32 %v4895, %v4989
  %v4994 = vadd.f32 %v4897, %v4991
  %v4995 = vadd.f32 %v4993, %v4127
  %v4996 = vadd.f32 %v4994, %v4129
  %v4997 = vadd.f32 %v4995, %v3049
  %v4998 = vadd.f32 %v4996, %v3053
  %v4999 = vxor.u32 %v4997, 2147483648
  %v5000 = vmul.f32 %v4999, 1.442695
  %v5001 = vpow.pop %v5000
  %v5002 = vadd.f32 %v5001, 1.0
  %v5003 = vrcp.pop %v5002
  %v5004 = vmul.f32 1.0, %v5003
  %v5005 = vtanh.pop %v4998
  %v5006 = vxor.u32 %v4998, 2147483648
  %v5007 = vmul.f32 %v5006, 1.442695
  %v5008 = vpow.pop %v5007
  %v5009 = vadd.f32 %v5008, 1.0
  %v5010 = vrcp.pop %v5009
  %v5011 = vmul.f32 1.0, %v5010
  %v5012 = vmul.f32 %v5004, %v4052
  %v5013 = vmul.f32 %v5004, %v5005
  %5015 = vrot.lane.b32.xlu0 %v5013, 64
  %v5016 = vpop.permute.xlu0 %5015
  %v5018 = vadd.f32 %v5012, %v5016
  %v5019 = vtanh.pop %v5018
  %v5020 = vmul.f32 %v5011, %v5019
  %5022 = vrot.lane.b32.xlu0 %v5020, 64
  %v5023 = vpop.permute.xlu0 %5022
  %v5024 = vsel %vm2147, %v5023, 0
  %5026 = vmatprep.subr.mxu0 0.0
  %5027 = vmatpush1.msra.mxu0 0.0
  %5028 = vmatprep.subr.mxu0 0.0
  %5029 = vmatpush1.msra.mxu0 0.0
  %5030 = vmatprep.subr.mxu0 0.0
  %5031 = vmatpush1.msra.mxu0 0.0
  %5032 = vmatprep.subr.mxu0 0.0
  %5033 = vmatpush1.msra.mxu0 0.0
  %5034 = vmatprep.subr.mxu0 0.0
  %5035 = vmatpush1.msra.mxu0 0.0
  %5036 = vmatprep.subr.mxu0 0.0
  %5037 = vmatpush1.msra.mxu0 0.0
  %5038 = vmatprep.subr.mxu0 0.0
  %5039 = vmatpush1.msra.mxu0 0.0
  %5040 = vmatprep.subr.mxu0 0.0
  %5041 = vmatpush1.msra.mxu0 0.0
  %5042 = vmatprep.subr.mxu0 %v2104
  %5043 = vmatpush1.msra.mxu0 %v2103
  %5044 = vmatprep.subr.mxu0 %v2100
  %5045 = vmatpush1.msra.mxu0 %v2099
  %5046 = vmatprep.subr.mxu0 %v2096
  %5047 = vmatpush1.msra.mxu0 %v2095
  %5048 = vmatprep.subr.mxu0 %v2092
  %5049 = vmatpush1.msra.mxu0 %v2091
  %5050 = vmatprep.subr.mxu0 %v2088
  %5051 = vmatpush1.msra.mxu0 %v2087
  %5052 = vmatprep.subr.mxu0 %v2084
  %5053 = vmatpush1.msra.mxu0 %v2083
  %5054 = vmatprep.subr.mxu0 %v2080
  %5055 = vmatpush1.msra.mxu0 %v2079
  %5056 = vmatprep.subr.mxu0 %v2076
  %5057 = vmatpush1.msra.mxu0 %v2075
  %5058 = vmatprep.subr.mxu0 0.0
  %5059 = vmatpush2.msra.mxu0 0.0
  %5060 = vmatprep.subr.mxu0 0.0
  %5061 = vmatpush2.msra.mxu0 0.0
  %5062 = vmatprep.subr.mxu0 0.0
  %5063 = vmatpush2.msra.mxu0 0.0
  %5064 = vmatprep.subr.mxu0 0.0
  %5065 = vmatpush2.msra.mxu0 0.0
  %5066 = vmatprep.subr.mxu0 0.0
  %5067 = vmatpush2.msra.mxu0 0.0
  %5068 = vmatprep.subr.mxu0 0.0
  %5069 = vmatpush2.msra.mxu0 0.0
  %5070 = vmatprep.subr.mxu0 0.0
  %5071 = vmatpush2.msra.mxu0 0.0
  %5072 = vmatprep.subr.mxu0 0.0
  %5073 = vmatpush2.msra.mxu0 0.0
  %5074 = vmatprep.subr.mxu0 0.0
  %5075 = vmatpush2.msra.mxu0 0.0
  %5076 = vmatprep.subr.mxu0 0.0
  %5077 = vmatpush2.msra.mxu0 0.0
  %5078 = vmatprep.subr.mxu0 0.0
  %5079 = vmatpush2.msra.mxu0 0.0
  %5080 = vmatprep.subr.mxu0 0.0
  %5081 = vmatpush2.msra.mxu0 0.0
  %5082 = vmatprep.subr.mxu0 0.0
  %5083 = vmatpush2.msra.mxu0 0.0
  %5084 = vmatprep.subr.mxu0 0.0
  %5085 = vmatpush2.msra.mxu0 0.0
  %5086 = vmatprep.subr.mxu0 0.0
  %5087 = vmatpush2.msra.mxu0 0.0
  %5088 = vmatprep.subr.mxu0 0.0
  %5089 = vmatpush2.msra.mxu0 0.0
  %5090 = vmatprep.mubr.f32.mxu0 0.0
  %5091 = vmatmul.mubr.f32.gmra.mxu0 %v5024
  %v5092 = vpop.f32.mrf.mxu0
  %v5093 = vadd.f32 0.0, %v5092
  %v5094 = vpop.f32.mrf.mxu0
  %v5095 = vadd.f32 0.0, %v5094
  %5096 = vdwg.mxu0
  %5097 = vmatprep.subr.mxu0 0.0
  %5098 = vmatpush1.msra.mxu0 0.0
  %5099 = vmatprep.subr.mxu0 0.0
  %5100 = vmatpush1.msra.mxu0 0.0
  %5101 = vmatprep.subr.mxu0 0.0
  %5102 = vmatpush1.msra.mxu0 0.0
  %5103 = vmatprep.subr.mxu0 0.0
  %5104 = vmatpush1.msra.mxu0 0.0
  %5105 = vmatprep.subr.mxu0 0.0
  %5106 = vmatpush1.msra.mxu0 0.0
  %5107 = vmatprep.subr.mxu0 0.0
  %5108 = vmatpush1.msra.mxu0 0.0
  %5109 = vmatprep.subr.mxu0 0.0
  %5110 = vmatpush1.msra.mxu0 0.0
  %5111 = vmatprep.subr.mxu0 0.0
  %5112 = vmatpush1.msra.mxu0 0.0
  %5113 = vmatprep.subr.mxu0 %v2106
  %5114 = vmatpush1.msra.mxu0 %v2105
  %5115 = vmatprep.subr.mxu0 %v2102
  %5116 = vmatpush1.msra.mxu0 %v2101
  %5117 = vmatprep.subr.mxu0 %v2098
  %5118 = vmatpush1.msra.mxu0 %v2097
  %5119 = vmatprep.subr.mxu0 %v2094
  %5120 = vmatpush1.msra.mxu0 %v2093
  %5121 = vmatprep.subr.mxu0 %v2090
  %5122 = vmatpush1.msra.mxu0 %v2089
  %5123 = vmatprep.subr.mxu0 %v2086
  %5124 = vmatpush1.msra.mxu0 %v2085
  %5125 = vmatprep.subr.mxu0 %v2082
  %5126 = vmatpush1.msra.mxu0 %v2081
  %5127 = vmatprep.subr.mxu0 %v2078
  %5128 = vmatpush1.msra.mxu0 %v2077
  %5129 = vmatprep.subr.mxu0 0.0
  %5130 = vmatpush2.msra.mxu0 0.0
  %5131 = vmatprep.subr.mxu0 0.0
  %5132 = vmatpush2.msra.mxu0 0.0
  %5133 = vmatprep.subr.mxu0 0.0
  %5134 = vmatpush2.msra.mxu0 0.0
  %5135 = vmatprep.subr.mxu0 0.0
  %5136 = vmatpush2.msra.mxu0 0.0
  %5137 = vmatprep.subr.mxu0 0.0
  %5138 = vmatpush2.msra.mxu0 0.0
  %5139 = vmatprep.subr.mxu0 0.0
  %5140 = vmatpush2.msra.mxu0 0.0
  %5141 = vmatprep.subr.mxu0 0.0
  %5142 = vmatpush2.msra.mxu0 0.0
  %5143 = vmatprep.subr.mxu0 0.0
  %5144 = vmatpush2.msra.mxu0 0.0
  %5145 = vmatprep.subr.mxu0 0.0
  %5146 = vmatpush2.msra.mxu0 0.0
  %5147 = vmatprep.subr.mxu0 0.0
  %5148 = vmatpush2.msra.mxu0 0.0
  %5149 = vmatprep.subr.mxu0 0.0
  %5150 = vmatpush2.msra.mxu0 0.0
  %5151 = vmatprep.subr.mxu0 0.0
  %5152 = vmatpush2.msra.mxu0 0.0
  %5153 = vmatprep.subr.mxu0 0.0
  %5154 = vmatpush2.msra.mxu0 0.0
  %5155 = vmatprep.subr.mxu0 0.0
  %5156 = vmatpush2.msra.mxu0 0.0
  %5157 = vmatprep.subr.mxu0 0.0
  %5158 = vmatpush2.msra.mxu0 0.0
  %5159 = vmatprep.subr.mxu0 0.0
  %5160 = vmatpush2.msra.mxu0 0.0
  %5161 = vmatprep.mubr.f32.mxu0 0.0
  %5162 = vmatmul.mubr.f32.gmra.mxu0 %v5024
  %v5163 = vpop.f32.mrf.mxu0
  %v5164 = vadd.f32 0.0, %v5163
  %v5165 = vpop.f32.mrf.mxu0
  %v5166 = vadd.f32 0.0, %v5165
  %5167 = vdwg.mxu0
  %v5168 = vadd.f32 %v5164, %v3234
  %s5169 = scalar_lea.vmem %s19, 4
  %5170 = vst [vmem:[%s5169] sm:$0x3] %v5168
  %v5171 = vadd.f32 %v5166, %v2296
  %v5174 = vunpack.c.l.s4 1966171168
  %v5175 = vunpack.c.0.s8 %v5174
  %v5176 = vlaneseq
  %v5177 = vshrl.u32 %v5176, 7
  %v5178 = vsub.s32 %v5175, %v5177
  %v5179 = vrot.slane %v5171, %v5178
  %v5180 = vcombine.high %v5179, %v5179
  %v5182 = vunpack.c.l.s4 1966171168
  %v5183 = vunpack.c.0.s8 %v5182
  %v5184 = vlaneseq
  %v5185 = vshrl.u32 %v5184, 7
  %v5186 = vsub.s32 %v5183, %v5185
  %v5187 = vrot.slane %v5179, %v5186
  %v5189 = vunpack.c.l.s4 1966171168
  %v5190 = vunpack.c.0.s8 %v5189
  %v5191 = vlaneseq
  %v5192 = vshrl.u32 %v5191, 7
  %v5193 = vsub.s32 %v5190, %v5192
  %v5194 = vrot.slane %v5180, %v5193
  %v5195 = vlaneseq
  %v5196 = vshrl.u32 %v5195, 7
  %v5197 = vsub.s32 0, %v5196
  %v5198 = vrot.slane %v5187, %v5197
  %v5199 = vlaneseq
  %v5200 = vshrl.u32 %v5199, 7
  %v5201 = vsub.s32 0, %v5200
  %v5202 = vrot.slane %v5194, %v5201
  %v5205 = vadd.f32 %v1831, %v5198
  %v5206 = vadd.f32 %v1836, %v5198
  %v5207 = vadd.f32 %v1841, %v5198
  %v5208 = vadd.f32 %v1846, %v5198
  %v5209 = vadd.f32 %v1851, %v5198
  %v5210 = vadd.f32 %v1856, %v5198
  %v5211 = vadd.f32 %v1861, %v5198
  %v5212 = vadd.f32 %v1866, %v5198
  %v5213 = vadd.f32 %v1871, %v5202
  %v5214 = vadd.f32 %v1876, %v5202
  %v5215 = vadd.f32 %v1881, %v5202
  %v5216 = vadd.f32 %v1886, %v5202
  %v5217 = vadd.f32 %v1891, %v5202
  %v5218 = vadd.f32 %v1896, %v5202
  %v5219 = vadd.f32 %v1901, %v5202
  %v5220 = vadd.f32 %v1906, %v5202
  %v5221 = vtanh.pop %v5205
  %v5222 = vtanh.pop %v5206
  %v5223 = vtanh.pop %v5207
  %v5224 = vtanh.pop %v5208
  %v5225 = vtanh.pop %v5209
  %v5226 = vtanh.pop %v5210
  %v5227 = vtanh.pop %v5211
  %v5228 = vtanh.pop %v5212
  %v5229 = vtanh.pop %v5213
  %v5230 = vtanh.pop %v5214
  %v5231 = vtanh.pop %v5215
  %v5232 = vtanh.pop %v5216
  %v5233 = vtanh.pop %v5217
  %v5234 = vtanh.pop %v5218
  %v5235 = vtanh.pop %v5219
  %v5236 = vtanh.pop %v5220
  %v5237 = vmul.f32 %v5221, %v2368
  %v5238 = vmul.f32 %v5222, %v2368
  %v5239 = vmul.f32 %v5223, %v2368
  %v5240 = vmul.f32 %v5224, %v2368
  %v5241 = vmul.f32 %v5225, %v2368
  %v5242 = vmul.f32 %v5226, %v2368
  %v5243 = vmul.f32 %v5227, %v2368
  %v5244 = vmul.f32 %v5228, %v2368
  %v5245 = vmul.f32 %v5229, %v2368
  %v5246 = vmul.f32 %v5230, %v2368
  %v5247 = vmul.f32 %v5231, %v2368
  %v5248 = vmul.f32 %v5232, %v2368
  %v5249 = vmul.f32 %v5233, %v2368
  %v5250 = vmul.f32 %v5234, %v2368
  %v5251 = vmul.f32 %v5235, %v2368
  %v5252 = vmul.f32 %v5236, %v2368
  %v5253 = vsel %vm1920, %v5237, 0.0
  %5254 = vadd.xlane.f32.xlu0 %v5253
  %v5255 = vpop.xlane.xlu0 %5254
  %v5256 = vsel %vm1920, %v5238, 0.0
  %5257 = vadd.xlane.f32.xlu0 %v5256
  %v5258 = vpop.xlane.xlu0 %5257
  %v5259 = vsel %vm1920, %v5239, 0.0
  %5260 = vadd.xlane.f32.xlu0 %v5259
  %v5261 = vpop.xlane.xlu0 %5260
  %v5262 = vsel %vm1920, %v5240, 0.0
  %5263 = vadd.xlane.f32.xlu0 %v5262
  %v5264 = vpop.xlane.xlu0 %5263
  %v5265 = vsel %vm1920, %v5241, 0.0
  %5266 = vadd.xlane.f32.xlu0 %v5265
  %v5267 = vpop.xlane.xlu0 %5266
  %v5268 = vsel %vm1920, %v5242, 0.0
  %5269 = vadd.xlane.f32.xlu0 %v5268
  %v5270 = vpop.xlane.xlu0 %5269
  %v5271 = vsel %vm1920, %v5243, 0.0
  %5272 = vadd.xlane.f32.xlu0 %v5271
  %v5273 = vpop.xlane.xlu0 %5272
  %v5274 = vsel %vm1920, %v5244, 0.0
  %5275 = vadd.xlane.f32.xlu0 %v5274
  %v5276 = vpop.xlane.xlu0 %5275
  %v5277 = vsel %vm1920, %v5245, 0.0
  %5278 = vadd.xlane.f32.xlu0 %v5277
  %v5279 = vpop.xlane.xlu0 %5278
  %v5280 = vsel %vm1920, %v5246, 0.0
  %5281 = vadd.xlane.f32.xlu0 %v5280
  %v5282 = vpop.xlane.xlu0 %5281
  %v5283 = vsel %vm1920, %v5247, 0.0
  %5284 = vadd.xlane.f32.xlu0 %v5283
  %v5285 = vpop.xlane.xlu0 %5284
  %v5286 = vsel %vm1920, %v5248, 0.0
  %5287 = vadd.xlane.f32.xlu0 %v5286
  %v5288 = vpop.xlane.xlu0 %5287
  %v5289 = vsel %vm1920, %v5249, 0.0
  %5290 = vadd.xlane.f32.xlu0 %v5289
  %v5291 = vpop.xlane.xlu0 %5290
  %v5292 = vsel %vm1920, %v5250, 0.0
  %5293 = vadd.xlane.f32.xlu0 %v5292
  %v5294 = vpop.xlane.xlu0 %5293
  %v5295 = vsel %vm1920, %v5251, 0.0
  %5296 = vadd.xlane.f32.xlu0 %v5295
  %v5297 = vpop.xlane.xlu0 %5296
  %v5298 = vsel %vm1920, %v5252, 0.0
  %5299 = vadd.xlane.f32.xlu0 %v5298
  %v5300 = vpop.xlane.xlu0 %5299
  %v5301 = vadd.f32 %v5255, %v2441
  %v5302 = vadd.f32 %v5258, %v2441
  %v5303 = vadd.f32 %v5261, %v2441
  %v5304 = vadd.f32 %v5264, %v2441
  %v5305 = vadd.f32 %v5267, %v2441
  %v5306 = vadd.f32 %v5270, %v2441
  %v5307 = vadd.f32 %v5273, %v2441
  %v5308 = vadd.f32 %v5276, %v2441
  %v5309 = vadd.f32 %v5279, %v2441
  %v5310 = vadd.f32 %v5282, %v2441
  %v5311 = vadd.f32 %v5285, %v2441
  %v5312 = vadd.f32 %v5288, %v2441
  %v5313 = vadd.f32 %v5291, %v2441
  %v5314 = vadd.f32 %v5294, %v2441
  %v5315 = vadd.f32 %v5297, %v2441
  %v5316 = vadd.f32 %v5300, %v2441
  %v5333 = vlaneseq
  %v5334 = vshrl.u32 %v5333, 7
  %v5335 = vsub.s32 %v2476, %v5334
  %v5336 = vrot.slane %v5301, %v5335
  %v5337 = vlaneseq
  %v5338 = vshrl.u32 %v5337, 7
  %v5339 = vsub.s32 %v2481, %v5338
  %v5340 = vrot.slane %v5302, %v5339
  %v5341 = vsel %vm2486, %v5340, %v5336
  %v5342 = vlaneseq
  %v5343 = vshrl.u32 %v5342, 7
  %v5344 = vsub.s32 %v2488, %v5343
  %v5345 = vrot.slane %v5303, %v5344
  %v5346 = vsel %vm2493, %v5345, %v5341
  %v5347 = vlaneseq
  %v5348 = vshrl.u32 %v5347, 7
  %v5349 = vsub.s32 %v2495, %v5348
  %v5350 = vrot.slane %v5304, %v5349
  %v5351 = vsel %vm2500, %v5350, %v5346
  %v5352 = vlaneseq
  %v5353 = vshrl.u32 %v5352, 7
  %v5354 = vsub.s32 %v2502, %v5353
  %v5355 = vrot.slane %v5305, %v5354
  %v5356 = vsel %vm2507, %v5355, %v5351
  %v5357 = vlaneseq
  %v5358 = vshrl.u32 %v5357, 7
  %v5359 = vsub.s32 %v2509, %v5358
  %v5360 = vrot.slane %v5306, %v5359
  %v5361 = vsel %vm2514, %v5360, %v5356
  %v5362 = vlaneseq
  %v5363 = vshrl.u32 %v5362, 7
  %v5364 = vsub.s32 %v2516, %v5363
  %v5365 = vrot.slane %v5307, %v5364
  %v5366 = vsel %vm2521, %v5365, %v5361
  %v5367 = vlaneseq
  %v5368 = vshrl.u32 %v5367, 7
  %v5369 = vsub.s32 %v2523, %v5368
  %v5370 = vrot.slane %v5308, %v5369
  %v5371 = vsel %vm2528, %v5370, %v5366
  %v5372 = vlaneseq
  %v5373 = vshrl.u32 %v5372, 7
  %v5374 = vsub.s32 %v2476, %v5373
  %v5375 = vrot.slane %v5309, %v5374
  %v5376 = vlaneseq
  %v5377 = vshrl.u32 %v5376, 7
  %v5378 = vsub.s32 %v2481, %v5377
  %v5379 = vrot.slane %v5310, %v5378
  %v5380 = vsel %vm2486, %v5379, %v5375
  %v5381 = vlaneseq
  %v5382 = vshrl.u32 %v5381, 7
  %v5383 = vsub.s32 %v2488, %v5382
  %v5384 = vrot.slane %v5311, %v5383
  %v5385 = vsel %vm2493, %v5384, %v5380
  %v5386 = vlaneseq
  %v5387 = vshrl.u32 %v5386, 7
  %v5388 = vsub.s32 %v2495, %v5387
  %v5389 = vrot.slane %v5312, %v5388
  %v5390 = vsel %vm2500, %v5389, %v5385
  %v5391 = vlaneseq
  %v5392 = vshrl.u32 %v5391, 7
  %v5393 = vsub.s32 %v2502, %v5392
  %v5394 = vrot.slane %v5313, %v5393
  %v5395 = vsel %vm2507, %v5394, %v5390
  %v5396 = vlaneseq
  %v5397 = vshrl.u32 %v5396, 7
  %v5398 = vsub.s32 %v2509, %v5397
  %v5399 = vrot.slane %v5314, %v5398
  %v5400 = vsel %vm2514, %v5399, %v5395
  %v5401 = vlaneseq
  %v5402 = vshrl.u32 %v5401, 7
  %v5403 = vsub.s32 %v2516, %v5402
  %v5404 = vrot.slane %v5315, %v5403
  %v5405 = vsel %vm2521, %v5404, %v5400
  %v5406 = vlaneseq
  %v5407 = vshrl.u32 %v5406, 7
  %v5408 = vsub.s32 %v2523, %v5407
  %v5409 = vrot.slane %v5316, %v5408
  %v5410 = vsel %vm2528, %v5409, %v5405
  %v5411 = vsel %vm244, %v5410, %v5371
  %v5413 = vsel %vm2571, %v5411, -inf
  %5414 = vmax.xlane.f32.xlu0 %v5413
  %v5415 = vpop.xlane.xlu0 %5414
  %v5417 = vlaneseq
  %v5418 = vshrl.u32 %v5417, 7
  %v5419 = vsub.s32 0, %v5418
  %v5420 = vrot.slane %v5415, %v5419
  %v5421 = vlaneseq
  %v5422 = vshrl.u32 %v5421, 7
  %v5423 = vsub.s32 1, %v5422
  %v5424 = vrot.slane %v5415, %v5423
  %v5427 = vsub.f32 %v5301, %v5420
  %v5428 = vsub.f32 %v5302, %v5420
  %v5429 = vsub.f32 %v5303, %v5420
  %v5430 = vsub.f32 %v5304, %v5420
  %v5431 = vsub.f32 %v5305, %v5420
  %v5432 = vsub.f32 %v5306, %v5420
  %v5433 = vsub.f32 %v5307, %v5420
  %v5434 = vsub.f32 %v5308, %v5420
  %v5435 = vsub.f32 %v5309, %v5424
  %v5436 = vsub.f32 %v5310, %v5424
  %v5437 = vsub.f32 %v5311, %v5424
  %v5438 = vsub.f32 %v5312, %v5424
  %v5439 = vsub.f32 %v5313, %v5424
  %v5440 = vsub.f32 %v5314, %v5424
  %v5441 = vsub.f32 %v5315, %v5424
  %v5442 = vsub.f32 %v5316, %v5424
  %v5443 = vmul.f32 %v5427, 1.442695
  %v5444 = vpow.pop %v5443
  %v5445 = vmul.f32 %v5428, 1.442695
  %v5446 = vpow.pop %v5445
  %v5447 = vmul.f32 %v5429, 1.442695
  %v5448 = vpow.pop %v5447
  %v5449 = vmul.f32 %v5430, 1.442695
  %v5450 = vpow.pop %v5449
  %v5451 = vmul.f32 %v5431, 1.442695
  %v5452 = vpow.pop %v5451
  %v5453 = vmul.f32 %v5432, 1.442695
  %v5454 = vpow.pop %v5453
  %v5455 = vmul.f32 %v5433, 1.442695
  %v5456 = vpow.pop %v5455
  %v5457 = vmul.f32 %v5434, 1.442695
  %v5458 = vpow.pop %v5457
  %v5459 = vmul.f32 %v5435, 1.442695
  %v5460 = vpow.pop %v5459
  %v5461 = vmul.f32 %v5436, 1.442695
  %v5462 = vpow.pop %v5461
  %v5463 = vmul.f32 %v5437, 1.442695
  %v5464 = vpow.pop %v5463
  %v5465 = vmul.f32 %v5438, 1.442695
  %v5466 = vpow.pop %v5465
  %v5467 = vmul.f32 %v5439, 1.442695
  %v5468 = vpow.pop %v5467
  %v5469 = vmul.f32 %v5440, 1.442695
  %v5470 = vpow.pop %v5469
  %v5471 = vmul.f32 %v5441, 1.442695
  %v5472 = vpow.pop %v5471
  %v5473 = vmul.f32 %v5442, 1.442695
  %v5474 = vpow.pop %v5473
  %5491 = vset.pattern.permute.xlu0 0
  %5492 = vperm.xlu0 %5491, %v5444
  %v5493 = vpop.permute.xlu0 %5492
  %5494 = vset.pattern.permute.xlu0 0
  %5495 = vperm.xlu0 %5494, %v5446
  %v5496 = vpop.permute.xlu0 %5495
  %5497 = vset.pattern.permute.xlu0 0
  %5498 = vperm.xlu0 %5497, %v5448
  %v5499 = vpop.permute.xlu0 %5498
  %5500 = vset.pattern.permute.xlu0 0
  %5501 = vperm.xlu0 %5500, %v5450
  %v5502 = vpop.permute.xlu0 %5501
  %5503 = vset.pattern.permute.xlu0 0
  %5504 = vperm.xlu0 %5503, %v5452
  %v5505 = vpop.permute.xlu0 %5504
  %5506 = vset.pattern.permute.xlu0 0
  %5507 = vperm.xlu0 %5506, %v5454
  %v5508 = vpop.permute.xlu0 %5507
  %5509 = vset.pattern.permute.xlu0 0
  %5510 = vperm.xlu0 %5509, %v5456
  %v5511 = vpop.permute.xlu0 %5510
  %5512 = vset.pattern.permute.xlu0 0
  %5513 = vperm.xlu0 %5512, %v5458
  %v5514 = vpop.permute.xlu0 %5513
  %5515 = vset.pattern.permute.xlu0 0
  %5516 = vperm.xlu0 %5515, %v5460
  %v5517 = vpop.permute.xlu0 %5516
  %5518 = vset.pattern.permute.xlu0 0
  %5519 = vperm.xlu0 %5518, %v5462
  %v5520 = vpop.permute.xlu0 %5519
  %5521 = vset.pattern.permute.xlu0 0
  %5522 = vperm.xlu0 %5521, %v5464
  %v5523 = vpop.permute.xlu0 %5522
  %5524 = vset.pattern.permute.xlu0 0
  %5525 = vperm.xlu0 %5524, %v5466
  %v5526 = vpop.permute.xlu0 %5525
  %5527 = vset.pattern.permute.xlu0 0
  %5528 = vperm.xlu0 %5527, %v5468
  %v5529 = vpop.permute.xlu0 %5528
  %5530 = vset.pattern.permute.xlu0 0
  %5531 = vperm.xlu0 %5530, %v5470
  %v5532 = vpop.permute.xlu0 %5531
  %5533 = vset.pattern.permute.xlu0 0
  %5534 = vperm.xlu0 %5533, %v5472
  %v5535 = vpop.permute.xlu0 %5534
  %5536 = vset.pattern.permute.xlu0 0
  %5537 = vperm.xlu0 %5536, %v5474
  %v5538 = vpop.permute.xlu0 %5537
  %v5539 = vlaneseq
  %v5540 = vshrl.u32 %v5539, 7
  %v5541 = vsub.s32 %v2476, %v5540
  %v5542 = vrot.slane %v5493, %v5541
  %v5543 = vlaneseq
  %v5544 = vshrl.u32 %v5543, 7
  %v5545 = vsub.s32 %v2481, %v5544
  %v5546 = vrot.slane %v5496, %v5545
  %v5547 = vsel %vm2486, %v5546, %v5542
  %v5548 = vlaneseq
  %v5549 = vshrl.u32 %v5548, 7
  %v5550 = vsub.s32 %v2488, %v5549
  %v5551 = vrot.slane %v5499, %v5550
  %v5552 = vsel %vm2493, %v5551, %v5547
  %v5553 = vlaneseq
  %v5554 = vshrl.u32 %v5553, 7
  %v5555 = vsub.s32 %v2495, %v5554
  %v5556 = vrot.slane %v5502, %v5555
  %v5557 = vsel %vm2500, %v5556, %v5552
  %v5558 = vlaneseq
  %v5559 = vshrl.u32 %v5558, 7
  %v5560 = vsub.s32 %v2502, %v5559
  %v5561 = vrot.slane %v5505, %v5560
  %v5562 = vsel %vm2507, %v5561, %v5557
  %v5563 = vlaneseq
  %v5564 = vshrl.u32 %v5563, 7
  %v5565 = vsub.s32 %v2509, %v5564
  %v5566 = vrot.slane %v5508, %v5565
  %v5567 = vsel %vm2514, %v5566, %v5562
  %v5568 = vlaneseq
  %v5569 = vshrl.u32 %v5568, 7
  %v5570 = vsub.s32 %v2516, %v5569
  %v5571 = vrot.slane %v5511, %v5570
  %v5572 = vsel %vm2521, %v5571, %v5567
  %v5573 = vlaneseq
  %v5574 = vshrl.u32 %v5573, 7
  %v5575 = vsub.s32 %v2523, %v5574
  %v5576 = vrot.slane %v5514, %v5575
  %v5577 = vsel %vm2528, %v5576, %v5572
  %v5578 = vlaneseq
  %v5579 = vshrl.u32 %v5578, 7
  %v5580 = vsub.s32 %v2476, %v5579
  %v5581 = vrot.slane %v5517, %v5580
  %v5582 = vlaneseq
  %v5583 = vshrl.u32 %v5582, 7
  %v5584 = vsub.s32 %v2481, %v5583
  %v5585 = vrot.slane %v5520, %v5584
  %v5586 = vsel %vm2486, %v5585, %v5581
  %v5587 = vlaneseq
  %v5588 = vshrl.u32 %v5587, 7
  %v5589 = vsub.s32 %v2488, %v5588
  %v5590 = vrot.slane %v5523, %v5589
  %v5591 = vsel %vm2493, %v5590, %v5586
  %v5592 = vlaneseq
  %v5593 = vshrl.u32 %v5592, 7
  %v5594 = vsub.s32 %v2495, %v5593
  %v5595 = vrot.slane %v5526, %v5594
  %v5596 = vsel %vm2500, %v5595, %v5591
  %v5597 = vlaneseq
  %v5598 = vshrl.u32 %v5597, 7
  %v5599 = vsub.s32 %v2502, %v5598
  %v5600 = vrot.slane %v5529, %v5599
  %v5601 = vsel %vm2507, %v5600, %v5596
  %v5602 = vlaneseq
  %v5603 = vshrl.u32 %v5602, 7
  %v5604 = vsub.s32 %v2509, %v5603
  %v5605 = vrot.slane %v5532, %v5604
  %v5606 = vsel %vm2514, %v5605, %v5601
  %v5607 = vlaneseq
  %v5608 = vshrl.u32 %v5607, 7
  %v5609 = vsub.s32 %v2516, %v5608
  %v5610 = vrot.slane %v5535, %v5609
  %v5611 = vsel %vm2521, %v5610, %v5606
  %v5612 = vlaneseq
  %v5613 = vshrl.u32 %v5612, 7
  %v5614 = vsub.s32 %v2523, %v5613
  %v5615 = vrot.slane %v5538, %v5614
  %v5616 = vsel %vm2528, %v5615, %v5611
  %v5617 = vsel %vm244, %v5616, %v5577
  %v5619 = vsel %vm2571, %v5617, 0.0
  %5620 = vadd.xlane.f32.xlu0 %v5619
  %v5621 = vpop.xlane.xlu0 %5620
  %v5623 = vlaneseq
  %v5624 = vshrl.u32 %v5623, 7
  %v5625 = vsub.s32 0, %v5624
  %v5626 = vrot.slane %v5621, %v5625
  %v5627 = vlaneseq
  %v5628 = vshrl.u32 %v5627, 7
  %v5629 = vsub.s32 1, %v5628
  %v5630 = vrot.slane %v5621, %v5629
  %v5633 = vrcp.pop %v5626
  %v5634 = vmul.f32 %v5444, %v5633
  %v5635 = vmul.f32 %v5446, %v5633
  %v5636 = vmul.f32 %v5448, %v5633
  %v5637 = vmul.f32 %v5450, %v5633
  %v5638 = vmul.f32 %v5452, %v5633
  %v5639 = vmul.f32 %v5454, %v5633
  %v5640 = vmul.f32 %v5456, %v5633
  %v5641 = vmul.f32 %v5458, %v5633
  %v5642 = vrcp.pop %v5630
  %v5643 = vmul.f32 %v5460, %v5642
  %v5644 = vmul.f32 %v5462, %v5642
  %v5645 = vmul.f32 %v5464, %v5642
  %v5646 = vmul.f32 %v5466, %v5642
  %v5647 = vmul.f32 %v5468, %v5642
  %v5648 = vmul.f32 %v5470, %v5642
  %v5649 = vmul.f32 %v5472, %v5642
  %v5650 = vmul.f32 %v5474, %v5642
  %5652 = vset.pattern.permute.xlu0 0
  %5653 = vperm.xlu0 %5652, %v5634
  %v5654 = vpop.permute.xlu0 %5653
  %5657 = vset.pattern.permute.xlu0 0
  %5658 = vperm.xlu0 %5657, %v5635
  %v5659 = vpop.permute.xlu0 %5658
  %5662 = vset.pattern.permute.xlu0 0
  %5663 = vperm.xlu0 %5662, %v5636
  %v5664 = vpop.permute.xlu0 %5663
  %5667 = vset.pattern.permute.xlu0 0
  %5668 = vperm.xlu0 %5667, %v5637
  %v5669 = vpop.permute.xlu0 %5668
  %5672 = vset.pattern.permute.xlu0 0
  %5673 = vperm.xlu0 %5672, %v5638
  %v5674 = vpop.permute.xlu0 %5673
  %5677 = vset.pattern.permute.xlu0 0
  %5678 = vperm.xlu0 %5677, %v5639
  %v5679 = vpop.permute.xlu0 %5678
  %5682 = vset.pattern.permute.xlu0 0
  %5683 = vperm.xlu0 %5682, %v5640
  %v5684 = vpop.permute.xlu0 %5683
  %5687 = vset.pattern.permute.xlu0 0
  %5688 = vperm.xlu0 %5687, %v5641
  %v5689 = vpop.permute.xlu0 %5688
  %5692 = vset.pattern.permute.xlu0 0
  %5693 = vperm.xlu0 %5692, %v5643
  %v5694 = vpop.permute.xlu0 %5693
  %5697 = vset.pattern.permute.xlu0 0
  %5698 = vperm.xlu0 %5697, %v5644
  %v5699 = vpop.permute.xlu0 %5698
  %5702 = vset.pattern.permute.xlu0 0
  %5703 = vperm.xlu0 %5702, %v5645
  %v5704 = vpop.permute.xlu0 %5703
  %5707 = vset.pattern.permute.xlu0 0
  %5708 = vperm.xlu0 %5707, %v5646
  %v5709 = vpop.permute.xlu0 %5708
  %5712 = vset.pattern.permute.xlu0 0
  %5713 = vperm.xlu0 %5712, %v5647
  %v5714 = vpop.permute.xlu0 %5713
  %5717 = vset.pattern.permute.xlu0 0
  %5718 = vperm.xlu0 %5717, %v5648
  %v5719 = vpop.permute.xlu0 %5718
  %5722 = vset.pattern.permute.xlu0 0
  %5723 = vperm.xlu0 %5722, %v5649
  %v5724 = vpop.permute.xlu0 %5723
  %5727 = vset.pattern.permute.xlu0 0
  %5728 = vperm.xlu0 %5727, %v5650
  %v5729 = vpop.permute.xlu0 %5728
  %v5731 = vmul.f32 %v5654, %v64
  %v5732 = vmul.f32 %v5659, %v65
  %v5733 = vmul.f32 %v5664, %v66
  %v5734 = vmul.f32 %v5669, %v67
  %v5735 = vmul.f32 %v5674, %v68
  %v5736 = vmul.f32 %v5679, %v69
  %v5737 = vmul.f32 %v5684, %v70
  %v5738 = vmul.f32 %v5689, %v71
  %v5739 = vmul.f32 %v5694, %v72
  %v5740 = vmul.f32 %v5699, %v73
  %v5741 = vmul.f32 %v5704, %v74
  %v5742 = vmul.f32 %v5709, %v75
  %v5743 = vmul.f32 %v5714, %v76
  %v5744 = vmul.f32 %v5719, %v77
  %v5745 = vmul.f32 %v5724, %v78
  %v5746 = vmul.f32 %v5729, %v79
  %v5747 = vsel %vm80, %v5731, 0.0
  %v5748 = vsel %vm80, %v5732, 0.0
  %v5749 = vadd.f32 %v5747, %v5748
  %v5750 = vsel %vm80, %v5733, 0.0
  %v5751 = vadd.f32 %v5749, %v5750
  %v5752 = vsel %vm80, %v5734, 0.0
  %v5753 = vadd.f32 %v5751, %v5752
  %v5754 = vsel %vm80, %v5735, 0.0
  %v5755 = vadd.f32 %v5753, %v5754
  %v5756 = vsel %vm80, %v5736, 0.0
  %v5757 = vadd.f32 %v5755, %v5756
  %v5758 = vsel %vm80, %v5737, 0.0
  %v5759 = vadd.f32 %v5757, %v5758
  %v5760 = vsel %vm80, %v5738, 0.0
  %v5761 = vadd.f32 %v5759, %v5760
  %v5762 = vrot.slane %v5761, 4
  %v5763 = vadd.f32 %v5761, %v5762
  %v5764 = vrot.slane %v5763, 2
  %v5765 = vadd.f32 %v5763, %v5764
  %v5766 = vrot.slane %v5765, 1
  %v5767 = vadd.f32 %v5765, %v5766
  %v5768 = vsel %vm80, %v5739, 0.0
  %v5769 = vsel %vm80, %v5740, 0.0
  %v5770 = vadd.f32 %v5768, %v5769
  %v5771 = vsel %vm80, %v5741, 0.0
  %v5772 = vadd.f32 %v5770, %v5771
  %v5773 = vsel %vm80, %v5742, 0.0
  %v5774 = vadd.f32 %v5772, %v5773
  %v5775 = vsel %vm80, %v5743, 0.0
  %v5776 = vadd.f32 %v5774, %v5775
  %v5777 = vsel %vm80, %v5744, 0.0
  %v5778 = vadd.f32 %v5776, %v5777
  %v5779 = vsel %vm80, %v5745, 0.0
  %v5780 = vadd.f32 %v5778, %v5779
  %v5781 = vsel %vm80, %v5746, 0.0
  %v5782 = vadd.f32 %v5780, %v5781
  %v5783 = vrot.slane %v5782, 4
  %v5784 = vadd.f32 %v5782, %v5783
  %v5785 = vrot.slane %v5784, 2
  %v5786 = vadd.f32 %v5784, %v5785
  %v5787 = vrot.slane %v5786, 1
  %v5788 = vadd.f32 %v5786, %v5787
  %v5791 = vsel %vm244, %v5788, %v5767
  %v5792 = vsel %vm80, %v5791, 0
  %5794 = vmatprep.subr.mxu0 0.0
  %5795 = vmatpush1.msra.mxu0 0.0
  %5796 = vmatprep.subr.mxu0 0.0
  %5797 = vmatpush1.msra.mxu0 0.0
  %5798 = vmatprep.subr.mxu0 0.0
  %5799 = vmatpush1.msra.mxu0 0.0
  %5800 = vmatprep.subr.mxu0 0.0
  %5801 = vmatpush1.msra.mxu0 0.0
  %5802 = vmatprep.subr.mxu0 0.0
  %5803 = vmatpush1.msra.mxu0 0.0
  %5804 = vmatprep.subr.mxu0 0.0
  %5805 = vmatpush1.msra.mxu0 0.0
  %5806 = vmatprep.subr.mxu0 0.0
  %5807 = vmatpush1.msra.mxu0 0.0
  %5808 = vmatprep.subr.mxu0 0.0
  %5809 = vmatpush1.msra.mxu0 0.0
  %5810 = vmatprep.subr.mxu0 0.0
  %5811 = vmatpush1.msra.mxu0 0.0
  %5812 = vmatprep.subr.mxu0 0.0
  %5813 = vmatpush1.msra.mxu0 0.0
  %5814 = vmatprep.subr.mxu0 0.0
  %5815 = vmatpush1.msra.mxu0 0.0
  %5816 = vmatprep.subr.mxu0 0.0
  %5817 = vmatpush1.msra.mxu0 0.0
  %5818 = vmatprep.subr.mxu0 0.0
  %5819 = vmatpush1.msra.mxu0 0.0
  %5820 = vmatprep.subr.mxu0 0.0
  %5821 = vmatpush1.msra.mxu0 0.0
  %5822 = vmatprep.subr.mxu0 %v2968
  %5823 = vmatpush1.msra.mxu0 %v2965
  %5824 = vmatprep.subr.mxu0 %v2111
  %5825 = vmatpush1.msra.mxu0 %v2110
  %5826 = vmatprep.subr.mxu0 0.0
  %5827 = vmatpush2.msra.mxu0 0.0
  %5828 = vmatprep.subr.mxu0 0.0
  %5829 = vmatpush2.msra.mxu0 0.0
  %5830 = vmatprep.subr.mxu0 0.0
  %5831 = vmatpush2.msra.mxu0 0.0
  %5832 = vmatprep.subr.mxu0 0.0
  %5833 = vmatpush2.msra.mxu0 0.0
  %5834 = vmatprep.subr.mxu0 0.0
  %5835 = vmatpush2.msra.mxu0 0.0
  %5836 = vmatprep.subr.mxu0 0.0
  %5837 = vmatpush2.msra.mxu0 0.0
  %5838 = vmatprep.subr.mxu0 0.0
  %5839 = vmatpush2.msra.mxu0 0.0
  %5840 = vmatprep.subr.mxu0 0.0
  %5841 = vmatpush2.msra.mxu0 0.0
  %5842 = vmatprep.subr.mxu0 0.0
  %5843 = vmatpush2.msra.mxu0 0.0
  %5844 = vmatprep.subr.mxu0 0.0
  %5845 = vmatpush2.msra.mxu0 0.0
  %5846 = vmatprep.subr.mxu0 0.0
  %5847 = vmatpush2.msra.mxu0 0.0
  %5848 = vmatprep.subr.mxu0 0.0
  %5849 = vmatpush2.msra.mxu0 0.0
  %5850 = vmatprep.subr.mxu0 0.0
  %5851 = vmatpush2.msra.mxu0 0.0
  %5852 = vmatprep.subr.mxu0 0.0
  %5853 = vmatpush2.msra.mxu0 0.0
  %5854 = vmatprep.subr.mxu0 0.0
  %5855 = vmatpush2.msra.mxu0 0.0
  %5856 = vmatprep.subr.mxu0 0.0
  %5857 = vmatpush2.msra.mxu0 0.0
  %5858 = vmatprep.mubr.f32.mxu0 0.0
  %5859 = vmatmul.mubr.f32.gmra.mxu0 %v5792
  %v5860 = vpop.f32.mrf.mxu0
  %v5861 = vadd.f32 %v2952, %v5860
  %v5862 = vpop.f32.mrf.mxu0
  %v5863 = vadd.f32 %v2956, %v5862
  %5864 = vdwg.mxu0
  %v5865 = vsel %vm3932, %v5168, -inf
  %5866 = vmax.xlane.f32.xlu0 %v5865
  %v5867 = vpop.xlane.xlu0 %5866
  %vm5868 = vcmp.eq.f32.partialorder %v5168, %v5867
  %v5869 = vsel %vm5868, %v2476, 128
  %v5870 = vsel %vm3932, %v5869, 2147483647
  %v5871 = vand.u32 %v5870, 65535
  %v5872 = vshra.s32 %v5870, 16
  %v5873 = vcvt.s32.f32 %v5871
  %v5874 = vcvt.s32.f32 %v5872
  %5875 = vmin.xlane.f32.xlu0 %v5874
  %v5876 = vpop.xlane.xlu0 %5875
  %vm5877 = vcmp.eq.f32.partialorder %v5874, %v5876
  %v5878 = vsel %vm5877, %v5873, inf
  %5879 = vmin.xlane.f32.xlu0 %v5878
  %v5880 = vpop.xlane.xlu0 %5879
  %v5881 = vcvt.f32.s32 %v5880
  %v5882 = vcvt.f32.s32 %v5876
  %v5883 = vshll.u32 %v5882, 16
  %v5884 = vadd.s32 %v5883, %v5881
  %vm5885 = vcmp.eq.s32.totalorder %v2476, %v5884
  %v5886 = vsel %vm5885, 1, 0
  %v5887 = vcvt.s32.f32 %v5886
  %5888 = vmatprep.subr.mxu0 %v2146
  %5889 = vmatpush1.msra.mxu0 %v2145
  %5890 = vmatprep.subr.mxu0 %v2144
  %5891 = vmatpush1.msra.mxu0 %v2143
  %5892 = vmatprep.subr.mxu0 %v2142
  %5893 = vmatpush1.msra.mxu0 %v2141
  %5894 = vmatprep.subr.mxu0 %v2140
  %5895 = vmatpush1.msra.mxu0 %v2139
  %5896 = vmatprep.subr.mxu0 %v2138
  %5897 = vmatpush1.msra.mxu0 %v2137
  %5898 = vmatprep.subr.mxu0 %v2136
  %5899 = vmatpush1.msra.mxu0 %v2135
  %5900 = vmatprep.subr.mxu0 %v2134
  %5901 = vmatpush1.msra.mxu0 %v2133
  %5902 = vmatprep.subr.mxu0 %v2132
  %5903 = vmatpush1.msra.mxu0 %v2131
  %5904 = vmatprep.subr.mxu0 %v2130
  %5905 = vmatpush1.msra.mxu0 %v2129
  %5906 = vmatprep.subr.mxu0 %v2128
  %5907 = vmatpush1.msra.mxu0 %v2127
  %5908 = vmatprep.subr.mxu0 %v2126
  %5909 = vmatpush1.msra.mxu0 %v2125
  %5910 = vmatprep.subr.mxu0 %v2124
  %5911 = vmatpush1.msra.mxu0 %v2123
  %5912 = vmatprep.subr.mxu0 %v2122
  %5913 = vmatpush1.msra.mxu0 %v2121
  %5914 = vmatprep.subr.mxu0 %v2120
  %5915 = vmatpush1.msra.mxu0 %v2119
  %5916 = vmatprep.subr.mxu0 %v2118
  %5917 = vmatpush1.msra.mxu0 %v2117
  %5918 = vmatprep.subr.mxu0 %v2116
  %5919 = vmatpush1.msra.mxu0 %v2115
  %5920 = vmatprep.subr.mxu0 0.0
  %5921 = vmatpush2.msra.mxu0 0.0
  %5922 = vmatprep.subr.mxu0 0.0
  %5923 = vmatpush2.msra.mxu0 0.0
  %5924 = vmatprep.subr.mxu0 0.0
  %5925 = vmatpush2.msra.mxu0 0.0
  %5926 = vmatprep.subr.mxu0 0.0
  %5927 = vmatpush2.msra.mxu0 0.0
  %5928 = vmatprep.subr.mxu0 0.0
  %5929 = vmatpush2.msra.mxu0 0.0
  %5930 = vmatprep.subr.mxu0 0.0
  %5931 = vmatpush2.msra.mxu0 0.0
  %5932 = vmatprep.subr.mxu0 0.0
  %5933 = vmatpush2.msra.mxu0 0.0
  %5934 = vmatprep.subr.mxu0 0.0
  %5935 = vmatpush2.msra.mxu0 0.0
  %5936 = vmatprep.subr.mxu0 0.0
  %5937 = vmatpush2.msra.mxu0 0.0
  %5938 = vmatprep.subr.mxu0 0.0
  %5939 = vmatpush2.msra.mxu0 0.0
  %5940 = vmatprep.subr.mxu0 0.0
  %5941 = vmatpush2.msra.mxu0 0.0
  %5942 = vmatprep.subr.mxu0 0.0
  %5943 = vmatpush2.msra.mxu0 0.0
  %5944 = vmatprep.subr.mxu0 0.0
  %5945 = vmatpush2.msra.mxu0 0.0
  %5946 = vmatprep.subr.mxu0 0.0
  %5947 = vmatpush2.msra.mxu0 0.0
  %5948 = vmatprep.subr.mxu0 0.0
  %5949 = vmatpush2.msra.mxu0 0.0
  %5950 = vmatprep.subr.mxu0 0.0
  %5951 = vmatpush2.msra.mxu0 0.0
  %5952 = vmatprep.mubr.f32.mxu0 0.0
  %5953 = vmatmul.mubr.f32.gmra.mxu0 %v5887
  %v5954 = vpop.f32.mrf.mxu0
  %v5955 = vadd.f32 0.0, %v5954
  %v5956 = vpop.f32.mrf.mxu0
  %v5957 = vadd.f32 0.0, %v5956
  %5958 = vdwg.mxu0
  %v5959 = vadd.f32 %v5861, %v5955
  %v5960 = vadd.f32 %v5863, %v5957
  %v5961 = vadd.f32 %v5959, %v5093
  %v5962 = vadd.f32 %v5960, %v5095
  %v5963 = vadd.f32 %v5961, %v3049
  %v5964 = vadd.f32 %v5962, %v3053
  %v5965 = vxor.u32 %v5963, 2147483648
  %v5966 = vmul.f32 %v5965, 1.442695
  %v5967 = vpow.pop %v5966
  %v5968 = vadd.f32 %v5967, 1.0
  %v5969 = vrcp.pop %v5968
  %v5970 = vmul.f32 1.0, %v5969
  %v5971 = vtanh.pop %v5964
  %v5972 = vxor.u32 %v5964, 2147483648
  %v5973 = vmul.f32 %v5972, 1.442695
  %v5974 = vpow.pop %v5973
  %v5975 = vadd.f32 %v5974, 1.0
  %v5976 = vrcp.pop %v5975
  %v5977 = vmul.f32 1.0, %v5976
  %v5978 = vmul.f32 %v5970, %v5018
  %v5979 = vmul.f32 %v5970, %v5971
  %5981 = vrot.lane.b32.xlu0 %v5979, 64
  %v5982 = vpop.permute.xlu0 %5981
  %v5984 = vadd.f32 %v5978, %v5982
  %v5985 = vtanh.pop %v5984
  %v5986 = vmul.f32 %v5977, %v5985
  %5988 = vrot.lane.b32.xlu0 %v5986, 64
  %v5989 = vpop.permute.xlu0 %5988
  %v5990 = vsel %vm2147, %v5989, 0
  %5992 = vmatprep.subr.mxu0 0.0
  %5993 = vmatpush1.msra.mxu0 0.0
  %5994 = vmatprep.subr.mxu0 0.0
  %5995 = vmatpush1.msra.mxu0 0.0
  %5996 = vmatprep.subr.mxu0 0.0
  %5997 = vmatpush1.msra.mxu0 0.0
  %5998 = vmatprep.subr.mxu0 0.0
  %5999 = vmatpush1.msra.mxu0 0.0
  %6000 = vmatprep.subr.mxu0 0.0
  %6001 = vmatpush1.msra.mxu0 0.0
  %6002 = vmatprep.subr.mxu0 0.0
  %6003 = vmatpush1.msra.mxu0 0.0
  %6004 = vmatprep.subr.mxu0 0.0
  %6005 = vmatpush1.msra.mxu0 0.0
  %6006 = vmatprep.subr.mxu0 0.0
  %6007 = vmatpush1.msra.mxu0 0.0
  %6008 = vmatprep.subr.mxu0 %v2106
  %6009 = vmatpush1.msra.mxu0 %v2105
  %6010 = vmatprep.subr.mxu0 %v2102
  %6011 = vmatpush1.msra.mxu0 %v2101
  %6012 = vmatprep.subr.mxu0 %v2098
  %6013 = vmatpush1.msra.mxu0 %v2097
  %6014 = vmatprep.subr.mxu0 %v2094
  %6015 = vmatpush1.msra.mxu0 %v2093
  %6016 = vmatprep.subr.mxu0 %v2090
  %6017 = vmatpush1.msra.mxu0 %v2089
  %6018 = vmatprep.subr.mxu0 %v2086
  %6019 = vmatpush1.msra.mxu0 %v2085
  %6020 = vmatprep.subr.mxu0 %v2082
  %6021 = vmatpush1.msra.mxu0 %v2081
  %6022 = vmatprep.subr.mxu0 %v2078
  %6023 = vmatpush1.msra.mxu0 %v2077
  %6024 = vmatprep.subr.mxu0 0.0
  %6025 = vmatpush2.msra.mxu0 0.0
  %6026 = vmatprep.subr.mxu0 0.0
  %6027 = vmatpush2.msra.mxu0 0.0
  %6028 = vmatprep.subr.mxu0 0.0
  %6029 = vmatpush2.msra.mxu0 0.0
  %6030 = vmatprep.subr.mxu0 0.0
  %6031 = vmatpush2.msra.mxu0 0.0
  %6032 = vmatprep.subr.mxu0 0.0
  %6033 = vmatpush2.msra.mxu0 0.0
  %6034 = vmatprep.subr.mxu0 0.0
  %6035 = vmatpush2.msra.mxu0 0.0
  %6036 = vmatprep.subr.mxu0 0.0
  %6037 = vmatpush2.msra.mxu0 0.0
  %6038 = vmatprep.subr.mxu0 0.0
  %6039 = vmatpush2.msra.mxu0 0.0
  %6040 = vmatprep.subr.mxu0 0.0
  %6041 = vmatpush2.msra.mxu0 0.0
  %6042 = vmatprep.subr.mxu0 0.0
  %6043 = vmatpush2.msra.mxu0 0.0
  %6044 = vmatprep.subr.mxu0 0.0
  %6045 = vmatpush2.msra.mxu0 0.0
  %6046 = vmatprep.subr.mxu0 0.0
  %6047 = vmatpush2.msra.mxu0 0.0
  %6048 = vmatprep.subr.mxu0 0.0
  %6049 = vmatpush2.msra.mxu0 0.0
  %6050 = vmatprep.subr.mxu0 0.0
  %6051 = vmatpush2.msra.mxu0 0.0
  %6052 = vmatprep.subr.mxu0 0.0
  %6053 = vmatpush2.msra.mxu0 0.0
  %6054 = vmatprep.subr.mxu0 0.0
  %6055 = vmatpush2.msra.mxu0 0.0
  %6056 = vmatprep.mubr.f32.mxu0 0.0
  %6057 = vmatmul.mubr.f32.gmra.mxu0 %v5990
  %v6058 = vpop.f32.mrf.mxu0
  %v6059 = vadd.f32 0.0, %v6058
  %v6060 = vpop.f32.mrf.mxu0
  %6061 = vdwg.mxu0
  %v6062 = vadd.f32 %v6059, %v3234
  %s6063 = scalar_lea.vmem %s19, 6
  %6064 = vst [vmem:[%s6063] sm:$0x3] %v6062
  // Predicated region
  $region78: #{encoder_decoder_forward.1} parent=0 // pred_check
    _
  $region79: #{encoder_decoder_forward.1} parent=0 // pred_check_branch
    %6066 = sbr.rel (0) target = $region81
  $region80: #{encoder_decoder_forward.1} parent=0 // pred_region
    _
  $region81: #{encoder_decoder_forward.1} parent=0 // pred_fallthru
    _
  // Predicated region
  $region82: #{encoder_decoder_forward.1} parent=0 // pred_check
    _
  $region83: #{encoder_decoder_forward.1} parent=0 // pred_check_branch
    %6068 = sbr.rel (0) target = $region85
  $region84: #{encoder_decoder_forward.1} parent=0 // pred_region
    _
  $region85: #{encoder_decoder_forward.1} parent=0 // pred_fallthru
    _

</llo_original>
